<compile_context>
chip_gen: v5e
topology: v5e:2x2
jax: 0.10.0
libtpu: 0.0.40
codegen_flags: <defaults>
</compile_context>

<pallas_src>
import jax
import jax.numpy as jnp
from jax.experimental import pallas as pl
from jax.experimental.pallas import tpu as pltpu

# Use full-precision f32 matmuls everywhere (kernel + pure-JAX reference) so the
# correctness check is apples-to-apples; negligible cost at this problem size.
jax.config.update("jax_default_matmul_precision", "highest")

# Model hyper-parameters (small, consistent with the module's __init__ shapes)
EMBED = 32
HEADS = 4
HEAD_DIM = EMBED // HEADS
FWD_EXP = 4
FF = FWD_EXP * EMBED            # 128
NUM_LAYERS = 2
SRC_VOCAB = 50
MAX_LENGTH = 100
SRC_PAD_IDX = 0
EPS = 1e-5                      # nn.LayerNorm default
INV_SQRT_E = 1.0 / float(EMBED) ** 0.5
PAD_NEG = -1e20                 # additive mask for pad keys (matches reference)
CROSS_NEG = -1e30               # strictly more negative: cross-sequence entries

LANES = 128
W_ROWS_PER_LAYER = 3 * EMBED    # 96 rows: [w1 | w2^T | wo (lane-padded)]
V_ROWS_PER_LAYER = 8            # rows: bo,g1,be1,bb1,bb2,g2,be2,(zero pad)


def encoder_kernel(x_ref, mask_ref, w_ref, v_ref, o_ref):
    """Entire encoder forward (all NUM_LAYERS TransformerBlocks) in one kernel.

    x_ref    : (N*S, E)      f32 embedded activations (word + position embedding)
    mask_ref : (N*S, N*S)    f32 block-diagonal additive attention mask
    w_ref    : (NUM_LAYERS*96, 128) packed matmul weights [w1 | w2^T | wo]
    v_ref    : (NUM_LAYERS*8, 128)  packed bias / LayerNorm vectors
    o_ref    : (N*S, E)      f32 output
    """
    NS, E = x_ref.shape
    H, D = HEADS, HEAD_DIM

    h = x_ref[...]               # (NS, E) current activations
    madd = mask_ref[...]         # (NS, NS) additive mask, loaded once, reused by
                                 # every head and every layer (no re-broadcasts)

    for l in range(NUM_LAYERS):  # unrolled: both layers fused in one kernel
        wb = l * W_ROWS_PER_LAYER
        w1 = w_ref[wb:wb + E, :]                    # (E, FF)
        w2t = w_ref[wb + E:wb + 2 * E, :]           # (E, FF)  (== w2^T)
        wo = w_ref[wb + 2 * E:wb + 3 * E, :E]       # (E, E)

        vb = l * V_ROWS_PER_LAYER
        bo = v_ref[vb + 0:vb + 1, :E]
        g1 = v_ref[vb + 1:vb + 2, :E]
        be1 = v_ref[vb + 2:vb + 3, :E]
        bb1 = v_ref[vb + 3:vb + 4, :]               # (1, FF)
        bb2 = v_ref[vb + 4:vb + 5, :E]
        g2 = v_ref[vb + 5:vb + 6, :E]
        be2 = v_ref[vb + 6:vb + 7, :E]

        # ---- multi-head self-attention, batched over all sequences ---------
        # (values = keys = queries = h; Q/K/V Linears are unused, like PyTorch)
        ctx_heads = []
        for hd in range(H):                         # unrolled over 4 heads
            xh = h[:, hd * D:(hd + 1) * D]          # (NS, D) static lane slice
            # energy[q, k] = <q_vec, k_vec>  (contract feature dim; no transpose)
            energy = jax.lax.dot_general(
                xh, xh, (((1,), (1,)), ((), ())),
                preferred_element_type=jnp.float32)             # (NS, NS)
            logits = energy * INV_SQRT_E + madd
            logits = logits - jnp.max(logits, axis=-1, keepdims=True)
            p = jnp.exp(logits)
            inv = pl.reciprocal(jnp.sum(p, axis=-1, keepdims=True), approx=True)
            ctx_heads.append(
                jnp.dot(p, xh, preferred_element_type=jnp.float32) * inv)  # (NS, D)
        ctx = jnp.concatenate(ctx_heads, axis=-1)                # (NS, E)
        # fc_out as one (NS,E)@(E,E) matmul + bias
        attn_out = jnp.dot(ctx, wo, preferred_element_type=jnp.float32) + bo

        # ---- add & norm 1 ----------------------------------------------------
        h1 = attn_out + h
        mu1 = jnp.mean(h1, axis=-1, keepdims=True)
        var1 = jnp.mean(jnp.square(h1 - mu1), axis=-1, keepdims=True)
        x1 = (h1 - mu1) * jax.lax.rsqrt(var1 + EPS) * g1 + be1

        # ---- feed forward: Linear -> ReLU -> Linear ---------------------------
        ffh = jnp.dot(x1, w1, preferred_element_type=jnp.float32) + bb1
        ffh = jnp.maximum(ffh, 0.0)
        ffo = jax.lax.dot_general(                   # ffh @ w2  (w2 stored as w2^T)
            ffh, w2t, (((1,), (1,)), ((), ())),
            preferred_element_type=jnp.float32) + bb2

        # ---- add & norm 2 ------------------------------------------------------
        h2 = ffo + x1
        mu2 = jnp.mean(h2, axis=-1, keepdims=True)
        var2 = jnp.mean(jnp.square(h2 - mu2), axis=-1, keepdims=True)
        h = (h2 - mu2) * jax.lax.rsqrt(var2 + EPS) * g2 + be2

    o_ref[...] = h.astype(o_ref.dtype)


def pack_params(params):
    """One-time (outside jit) packing of per-layer weights into lane-dense slabs."""
    wrows, vrows = [], []

    def vec_row(v):
        v = jnp.asarray(v, jnp.float32).reshape(1, -1)
        return jnp.pad(v, ((0, 0), (0, LANES - v.shape[1])))

    for lp in params['layers']:
        wo_pad = jnp.pad(lp['wo'], ((0, 0), (0, LANES - EMBED)))      # (32,128)
        wrows += [lp['w1'], lp['w2'].T, wo_pad]                       # 96 rows/layer
        vrows += [vec_row(lp['bo']), vec_row(lp['g1']), vec_row(lp['be1']),
                  vec_row(lp['bb1']), vec_row(lp['bb2']), vec_row(lp['g2']),
                  vec_row(lp['be2']), jnp.zeros((1, LANES), jnp.float32)]

    return {
        'word_emb': params['word_emb'],
        'pos_emb': params['pos_emb'],
        'wslab': jnp.concatenate(wrows, axis=0),    # (NUM_LAYERS*96, 128)
        'vslab': jnp.concatenate(vrows, axis=0),    # (NUM_LAYERS*8, 128)
    }


def transformer_forward(src, packed):
    """src: (N, S) int32 token ids. Returns (N, S, EMBED) f32."""
    N, S = src.shape
    NS = N * S
    E = EMBED

    # Block-diagonal additive attention mask, built once and shared by all
    # layers/heads inside the kernel: pad keys -> -1e20, cross-sequence -> -1e30.
    pad_add = jnp.where(src == SRC_PAD_IDX, jnp.float32(PAD_NEG), jnp.float32(0.0))
    same_seq = jnp.arange(N)[:, None] == jnp.arange(N)[None, :]        # (N, N)
    madd = jnp.where(same_seq[:, None, :, None], pad_add[None, None, :, :],
                     jnp.float32(CROSS_NEG))                           # (N,1,N,S)
    madd = jnp.broadcast_to(madd, (N, S, N, S)).reshape(NS, NS)

    # Embedding lookup + positional embedding add (one fused XLA gather+add).
    x = packed['word_emb'][src] + packed['pos_emb'][jnp.arange(S)][None, :, :]
    x_flat = x.reshape(NS, E).astype(jnp.float32)
    # dropout p=0 -> identity

    vmem = pl.BlockSpec(memory_space=pltpu.MemorySpace.VMEM)
    out_flat = pl.pallas_call(
        encoder_kernel,
        out_shape=jax.ShapeDtypeStruct((NS, E), jnp.float32),
        in_specs=[vmem, vmem, vmem, vmem],
        out_specs=vmem,
    )(x_flat, madd, packed['wslab'], packed['vslab'])
    return out_flat.reshape(N, S, E)


def init_params(key):
    keys = jax.random.split(key, 2 + NUM_LAYERS)
    params = {
        'word_emb': 0.02 * jax.random.normal(keys[0], (SRC_VOCAB, EMBED), jnp.float32),
        'pos_emb': 0.02 * jax.random.normal(keys[1], (MAX_LENGTH, EMBED), jnp.float32),
        'layers': [],
    }
    for l in range(NUM_LAYERS):
        k = jax.random.split(keys[2 + l], 4)
        params['layers'].append({
            'wo': 0.05 * jax.random.normal(k[0], (EMBED, EMBED), jnp.float32),
            'bo': jnp.zeros((1, EMBED), jnp.float32),
            'g1': jnp.ones((1, EMBED), jnp.float32),
            'be1': jnp.zeros((1, EMBED), jnp.float32),
            'w1': 0.05 * jax.random.normal(k[1], (EMBED, FF), jnp.float32),
            'bb1': jnp.zeros((1, FF), jnp.float32),
            'w2': 0.05 * jax.random.normal(k[2], (FF, EMBED), jnp.float32),
            'bb2': jnp.zeros((1, EMBED), jnp.float32),
            'g2': jnp.ones((1, EMBED), jnp.float32),
            'be2': jnp.zeros((1, EMBED), jnp.float32),
        })
    return params


# ----- pure-JAX reference (mirrors the PyTorch module) -------------------------
def _ref_block(x, mask, lp):
    N, S, E = x.shape
    H, D = HEADS, HEAD_DIM
    xh = x.reshape(N, S, H, D)
    energy = jnp.einsum('nqhd,nkhd->nhqk', xh, xh)
    energy = jnp.where(mask[:, None, None, :] == 0, -1e20, energy)
    attn = jax.nn.softmax(energy / jnp.sqrt(jnp.float32(E)), axis=-1)
    ctx = jnp.einsum('nhqk,nkhd->nqhd', attn, xh).reshape(N, S, E)
    attn_out = ctx @ lp['wo'] + lp['bo']

    def ln(v, g, b):
        mu = jnp.mean(v, -1, keepdims=True)
        var = jnp.mean((v - mu) ** 2, -1, keepdims=True)
        return (v - mu) * jax.lax.rsqrt(var + EPS) * g + b

    x1 = ln(attn_out + x, lp['g1'], lp['be1'])
    ffv = jnp.maximum(x1 @ lp['w1'] + lp['bb1'], 0.0) @ lp['w2'] + lp['bb2']
    return ln(ffv + x1, lp['g2'], lp['be2'])


def _ref_forward(src, params):
    N, S = src.shape
    mask = (src != SRC_PAD_IDX).astype(jnp.int32)
    out = params['word_emb'][src] + params['pos_emb'][jnp.arange(S)][None]
    for lp in params['layers']:
        out = _ref_block(out, mask, lp)
    return out


if __name__ == "__main__":
    key = jax.random.PRNGKey(0)
    k_param, k_src = jax.random.split(key)
    params = init_params(k_param)
    packed = pack_params(params)      # one-time packing, outside the jitted forward

    N, S = 2, 8
    src = jax.random.randint(k_src, (N, S), 0, SRC_VOCAB, dtype=jnp.int32)
    # force a couple of pad tokens so the mask path is exercised
    src = src.at[0, -2:].set(SRC_PAD_IDX)

    fwd = jax.jit(transformer_forward)
    out = jax.block_until_ready(fwd(src, packed))

    ref = _ref_forward(src, params)
    assert out.shape == (N, S, EMBED)
    assert jnp.allclose(out, ref, atol=2e-3, rtol=2e-3), "mismatch vs JAX reference"

    print("KERNEL_OK")
</pallas_src>

<mosaic_0001>
module attributes {stable_mosaic.version = 11 : i64} {
  func.func @encoder_kernel(%arg0: memref<16x32xf32, #tpu.memory_space<vmem>>, %arg1: memref<16x16xf32, #tpu.memory_space<vmem>>, %arg2: memref<192x128xf32, #tpu.memory_space<vmem>>, %arg3: memref<16x128xf32, #tpu.memory_space<vmem>>, %arg4: memref<16x32xf32, #tpu.memory_space<vmem>>) attributes {dimension_semantics = [], scalar_prefetch = 0 : i64, scratch_operands = 0 : i64, tpu.core_type = #tpu.core_type<tc>} {
    %c0 = arith.constant 0 : index
    %c0_0 = arith.constant 0 : index
    %0 = vector.load %arg0[%c0, %c0_0] : memref<16x32xf32, #tpu.memory_space<vmem>>, vector<16x32xf32>
    %c0_1 = arith.constant 0 : index
    %c0_2 = arith.constant 0 : index
    %1 = vector.load %arg1[%c0_1, %c0_2] : memref<16x16xf32, #tpu.memory_space<vmem>>, vector<16x16xf32>
    %c0_3 = arith.constant 0 : index
    %c0_4 = arith.constant 0 : index
    %2 = vector.load %arg2[%c0_3, %c0_4] : memref<192x128xf32, #tpu.memory_space<vmem>>, vector<32x128xf32>
    %c32 = arith.constant 32 : index
    %c0_5 = arith.constant 0 : index
    %3 = vector.load %arg2[%c32, %c0_5] : memref<192x128xf32, #tpu.memory_space<vmem>>, vector<32x128xf32>
    %c64 = arith.constant 64 : index
    %c0_6 = arith.constant 0 : index
    %4 = vector.load %arg2[%c64, %c0_6] : memref<192x128xf32, #tpu.memory_space<vmem>>, vector<32x32xf32>
    %c0_7 = arith.constant 0 : index
    %c0_8 = arith.constant 0 : index
    %5 = vector.load %arg3[%c0_7, %c0_8] : memref<16x128xf32, #tpu.memory_space<vmem>>, vector<1x32xf32>
    %c1 = arith.constant 1 : index
    %c0_9 = arith.constant 0 : index
    %6 = vector.load %arg3[%c1, %c0_9] : memref<16x128xf32, #tpu.memory_space<vmem>>, vector<1x32xf32>
    %c2 = arith.constant 2 : index
    %c0_10 = arith.constant 0 : index
    %7 = vector.load %arg3[%c2, %c0_10] : memref<16x128xf32, #tpu.memory_space<vmem>>, vector<1x32xf32>
    %c3 = arith.constant 3 : index
    %c0_11 = arith.constant 0 : index
    %8 = vector.load %arg3[%c3, %c0_11] : memref<16x128xf32, #tpu.memory_space<vmem>>, vector<1x128xf32>
    %c4 = arith.constant 4 : index
    %c0_12 = arith.constant 0 : index
    %9 = vector.load %arg3[%c4, %c0_12] : memref<16x128xf32, #tpu.memory_space<vmem>>, vector<1x32xf32>
    %c5 = arith.constant 5 : index
    %c0_13 = arith.constant 0 : index
    %10 = vector.load %arg3[%c5, %c0_13] : memref<16x128xf32, #tpu.memory_space<vmem>>, vector<1x32xf32>
    %c6 = arith.constant 6 : index
    %c0_14 = arith.constant 0 : index
    %11 = vector.load %arg3[%c6, %c0_14] : memref<16x128xf32, #tpu.memory_space<vmem>>, vector<1x32xf32>
    %12 = vector.extract_strided_slice %0 {offsets = [0, 0], sizes = [16, 8], strides = [1, 1]} : vector<16x32xf32> to vector<16x8xf32>
    %cst = arith.constant dense<0.000000e+00> : vector<16x16xf32>
    %13 = tpu.matmul %12, %12, %cst {dimension_numbers = #tpu.dot_dimension_numbers<[1], [1], [0], [0], [0, 0, 1, 0], [], []>, precision = #tpu.contract_precision<fp32>} : vector<16x8xf32>, vector<16x8xf32>, vector<16x16xf32> -> vector<16x16xf32>
    %cst_15 = arith.constant 0.176776692 : f32
    %14 = vector.broadcast %cst_15 : f32 to vector<16x16xf32>
    %15 = arith.mulf %13, %14 : vector<16x16xf32>
    %16 = arith.addf %15, %1 : vector<16x16xf32>
    %cst_16 = arith.constant dense<0xFF800000> : vector<16xf32>
    %17 = vector.multi_reduction <maximumf>, %16, %cst_16 [1] : vector<16x16xf32> to vector<16xf32>
    %18 = vector.shape_cast %17 : vector<16xf32> to vector<16x1xf32>
    %19 = vector.broadcast %18 : vector<16x1xf32> to vector<16x16xf32>
    %20 = arith.subf %16, %19 : vector<16x16xf32>
    %21 = math.exp %20 : vector<16x16xf32>
    %cst_17 = arith.constant dense<0.000000e+00> : vector<16xf32>
    %22 = vector.multi_reduction <add>, %21, %cst_17 [1] : vector<16x16xf32> to vector<16xf32>
    %23 = vector.shape_cast %22 : vector<16xf32> to vector<16x1xf32>
    %24 = tpu.reciprocal %23 {approx = true} : vector<16x1xf32> -> vector<16x1xf32>
    %cst_18 = arith.constant dense<0.000000e+00> : vector<16x8xf32>
    %25 = tpu.matmul %21, %12, %cst_18 {dimension_numbers = #tpu.dot_dimension_numbers<[1], [0], [0], [1], [0, 0, 1, 1], [], []>, precision = #tpu.contract_precision<fp32>} : vector<16x16xf32>, vector<16x8xf32>, vector<16x8xf32> -> vector<16x8xf32>
    %26 = vector.broadcast %24 : vector<16x1xf32> to vector<16x8xf32>
    %27 = arith.mulf %25, %26 : vector<16x8xf32>
    %28 = vector.extract_strided_slice %0 {offsets = [0, 8], sizes = [16, 8], strides = [1, 1]} : vector<16x32xf32> to vector<16x8xf32>
    %cst_19 = arith.constant dense<0.000000e+00> : vector<16x16xf32>
    %29 = tpu.matmul %28, %28, %cst_19 {dimension_numbers = #tpu.dot_dimension_numbers<[1], [1], [0], [0], [0, 0, 1, 0], [], []>, precision = #tpu.contract_precision<fp32>} : vector<16x8xf32>, vector<16x8xf32>, vector<16x16xf32> -> vector<16x16xf32>
    %cst_20 = arith.constant 0.176776692 : f32
    %30 = vector.broadcast %cst_20 : f32 to vector<16x16xf32>
    %31 = arith.mulf %29, %30 : vector<16x16xf32>
    %32 = arith.addf %31, %1 : vector<16x16xf32>
    %cst_21 = arith.constant dense<0xFF800000> : vector<16xf32>
    %33 = vector.multi_reduction <maximumf>, %32, %cst_21 [1] : vector<16x16xf32> to vector<16xf32>
    %34 = vector.shape_cast %33 : vector<16xf32> to vector<16x1xf32>
    %35 = vector.broadcast %34 : vector<16x1xf32> to vector<16x16xf32>
    %36 = arith.subf %32, %35 : vector<16x16xf32>
    %37 = math.exp %36 : vector<16x16xf32>
    %cst_22 = arith.constant dense<0.000000e+00> : vector<16xf32>
    %38 = vector.multi_reduction <add>, %37, %cst_22 [1] : vector<16x16xf32> to vector<16xf32>
    %39 = vector.shape_cast %38 : vector<16xf32> to vector<16x1xf32>
    %40 = tpu.reciprocal %39 {approx = true} : vector<16x1xf32> -> vector<16x1xf32>
    %cst_23 = arith.constant dense<0.000000e+00> : vector<16x8xf32>
    %41 = tpu.matmul %37, %28, %cst_23 {dimension_numbers = #tpu.dot_dimension_numbers<[1], [0], [0], [1], [0, 0, 1, 1], [], []>, precision = #tpu.contract_precision<fp32>} : vector<16x16xf32>, vector<16x8xf32>, vector<16x8xf32> -> vector<16x8xf32>
    %42 = vector.broadcast %40 : vector<16x1xf32> to vector<16x8xf32>
    %43 = arith.mulf %41, %42 : vector<16x8xf32>
    %44 = vector.extract_strided_slice %0 {offsets = [0, 16], sizes = [16, 8], strides = [1, 1]} : vector<16x32xf32> to vector<16x8xf32>
    %cst_24 = arith.constant dense<0.000000e+00> : vector<16x16xf32>
    %45 = tpu.matmul %44, %44, %cst_24 {dimension_numbers = #tpu.dot_dimension_numbers<[1], [1], [0], [0], [0, 0, 1, 0], [], []>, precision = #tpu.contract_precision<fp32>} : vector<16x8xf32>, vector<16x8xf32>, vector<16x16xf32> -> vector<16x16xf32>
    %cst_25 = arith.constant 0.176776692 : f32
    %46 = vector.broadcast %cst_25 : f32 to vector<16x16xf32>
    %47 = arith.mulf %45, %46 : vector<16x16xf32>
    %48 = arith.addf %47, %1 : vector<16x16xf32>
    %cst_26 = arith.constant dense<0xFF800000> : vector<16xf32>
    %49 = vector.multi_reduction <maximumf>, %48, %cst_26 [1] : vector<16x16xf32> to vector<16xf32>
    %50 = vector.shape_cast %49 : vector<16xf32> to vector<16x1xf32>
    %51 = vector.broadcast %50 : vector<16x1xf32> to vector<16x16xf32>
    %52 = arith.subf %48, %51 : vector<16x16xf32>
    %53 = math.exp %52 : vector<16x16xf32>
    %cst_27 = arith.constant dense<0.000000e+00> : vector<16xf32>
    %54 = vector.multi_reduction <add>, %53, %cst_27 [1] : vector<16x16xf32> to vector<16xf32>
    %55 = vector.shape_cast %54 : vector<16xf32> to vector<16x1xf32>
    %56 = tpu.reciprocal %55 {approx = true} : vector<16x1xf32> -> vector<16x1xf32>
    %cst_28 = arith.constant dense<0.000000e+00> : vector<16x8xf32>
    %57 = tpu.matmul %53, %44, %cst_28 {dimension_numbers = #tpu.dot_dimension_numbers<[1], [0], [0], [1], [0, 0, 1, 1], [], []>, precision = #tpu.contract_precision<fp32>} : vector<16x16xf32>, vector<16x8xf32>, vector<16x8xf32> -> vector<16x8xf32>
    %58 = vector.broadcast %56 : vector<16x1xf32> to vector<16x8xf32>
    %59 = arith.mulf %57, %58 : vector<16x8xf32>
    %60 = vector.extract_strided_slice %0 {offsets = [0, 24], sizes = [16, 8], strides = [1, 1]} : vector<16x32xf32> to vector<16x8xf32>
    %cst_29 = arith.constant dense<0.000000e+00> : vector<16x16xf32>
    %61 = tpu.matmul %60, %60, %cst_29 {dimension_numbers = #tpu.dot_dimension_numbers<[1], [1], [0], [0], [0, 0, 1, 0], [], []>, precision = #tpu.contract_precision<fp32>} : vector<16x8xf32>, vector<16x8xf32>, vector<16x16xf32> -> vector<16x16xf32>
    %cst_30 = arith.constant 0.176776692 : f32
    %62 = vector.broadcast %cst_30 : f32 to vector<16x16xf32>
    %63 = arith.mulf %61, %62 : vector<16x16xf32>
    %64 = arith.addf %63, %1 : vector<16x16xf32>
    %cst_31 = arith.constant dense<0xFF800000> : vector<16xf32>
    %65 = vector.multi_reduction <maximumf>, %64, %cst_31 [1] : vector<16x16xf32> to vector<16xf32>
    %66 = vector.shape_cast %65 : vector<16xf32> to vector<16x1xf32>
    %67 = vector.broadcast %66 : vector<16x1xf32> to vector<16x16xf32>
    %68 = arith.subf %64, %67 : vector<16x16xf32>
    %69 = math.exp %68 : vector<16x16xf32>
    %cst_32 = arith.constant dense<0.000000e+00> : vector<16xf32>
    %70 = vector.multi_reduction <add>, %69, %cst_32 [1] : vector<16x16xf32> to vector<16xf32>
    %71 = vector.shape_cast %70 : vector<16xf32> to vector<16x1xf32>
    %72 = tpu.reciprocal %71 {approx = true} : vector<16x1xf32> -> vector<16x1xf32>
    %cst_33 = arith.constant dense<0.000000e+00> : vector<16x8xf32>
    %73 = tpu.matmul %69, %60, %cst_33 {dimension_numbers = #tpu.dot_dimension_numbers<[1], [0], [0], [1], [0, 0, 1, 1], [], []>, precision = #tpu.contract_precision<fp32>} : vector<16x16xf32>, vector<16x8xf32>, vector<16x8xf32> -> vector<16x8xf32>
    %74 = vector.broadcast %72 : vector<16x1xf32> to vector<16x8xf32>
    %75 = arith.mulf %73, %74 : vector<16x8xf32>
    %76 = tpu.concatenate %27, %43, %59, %75 in 1 : vector<16x8xf32>, vector<16x8xf32>, vector<16x8xf32>, vector<16x8xf32> -> vector<16x32xf32>
    %cst_34 = arith.constant dense<0.000000e+00> : vector<16x32xf32>
    %77 = tpu.matmul %76, %4, %cst_34 {dimension_numbers = #tpu.dot_dimension_numbers<[1], [0], [0], [1], [0, 0, 1, 1], [], []>, precision = #tpu.contract_precision<fp32>} : vector<16x32xf32>, vector<32x32xf32>, vector<16x32xf32> -> vector<16x32xf32>
    %78 = vector.broadcast %5 : vector<1x32xf32> to vector<16x32xf32>
    %79 = arith.addf %77, %78 : vector<16x32xf32>
    %80 = arith.addf %79, %0 : vector<16x32xf32>
    %cst_35 = arith.constant dense<0.000000e+00> : vector<16xf32>
    %81 = vector.multi_reduction <add>, %80, %cst_35 [1] : vector<16x32xf32> to vector<16xf32>
    %82 = vector.shape_cast %81 : vector<16xf32> to vector<16x1xf32>
    %cst_36 = arith.constant 3.200000e+01 : f32
    %83 = vector.broadcast %cst_36 : f32 to vector<16x1xf32>
    %84 = arith.divf %82, %83 : vector<16x1xf32>
    %85 = vector.broadcast %84 : vector<16x1xf32> to vector<16x32xf32>
    %86 = arith.subf %80, %85 : vector<16x32xf32>
    %87 = arith.mulf %86, %86 : vector<16x32xf32>
    %cst_37 = arith.constant dense<0.000000e+00> : vector<16xf32>
    %88 = vector.multi_reduction <add>, %87, %cst_37 [1] : vector<16x32xf32> to vector<16xf32>
    %89 = vector.shape_cast %88 : vector<16xf32> to vector<16x1xf32>
    %cst_38 = arith.constant 3.200000e+01 : f32
    %90 = vector.broadcast %cst_38 : f32 to vector<16x1xf32>
    %91 = arith.divf %89, %90 : vector<16x1xf32>
    %92 = vector.broadcast %84 : vector<16x1xf32> to vector<16x32xf32>
    %93 = arith.subf %80, %92 : vector<16x32xf32>
    %cst_39 = arith.constant 9.99999974E-6 : f32
    %94 = vector.broadcast %cst_39 : f32 to vector<16x1xf32>
    %95 = arith.addf %91, %94 : vector<16x1xf32>
    %96 = math.rsqrt %95 : vector<16x1xf32>
    %97 = vector.broadcast %96 : vector<16x1xf32> to vector<16x32xf32>
    %98 = arith.mulf %93, %97 : vector<16x32xf32>
    %99 = vector.broadcast %6 : vector<1x32xf32> to vector<16x32xf32>
    %100 = arith.mulf %98, %99 : vector<16x32xf32>
    %101 = vector.broadcast %7 : vector<1x32xf32> to vector<16x32xf32>
    %102 = arith.addf %100, %101 : vector<16x32xf32>
    %cst_40 = arith.constant dense<0.000000e+00> : vector<16x128xf32>
    %103 = tpu.matmul %102, %2, %cst_40 {dimension_numbers = #tpu.dot_dimension_numbers<[1], [0], [0], [1], [0, 0, 1, 1], [], []>, precision = #tpu.contract_precision<fp32>} : vector<16x32xf32>, vector<32x128xf32>, vector<16x128xf32> -> vector<16x128xf32>
    %104 = vector.broadcast %8 : vector<1x128xf32> to vector<16x128xf32>
    %105 = arith.addf %103, %104 : vector<16x128xf32>
    %cst_41 = arith.constant 0.000000e+00 : f32
    %106 = vector.broadcast %cst_41 : f32 to vector<16x128xf32>
    %107 = arith.maximumf %105, %106 : vector<16x128xf32>
    %cst_42 = arith.constant dense<0.000000e+00> : vector<16x32xf32>
    %108 = tpu.matmul %107, %3, %cst_42 {dimension_numbers = #tpu.dot_dimension_numbers<[1], [1], [0], [0], [0, 0, 1, 0], [], []>, precision = #tpu.contract_precision<fp32>} : vector<16x128xf32>, vector<32x128xf32>, vector<16x32xf32> -> vector<16x32xf32>
    %109 = vector.broadcast %9 : vector<1x32xf32> to vector<16x32xf32>
    %110 = arith.addf %108, %109 : vector<16x32xf32>
    %111 = arith.addf %110, %102 : vector<16x32xf32>
    %cst_43 = arith.constant dense<0.000000e+00> : vector<16xf32>
    %112 = vector.multi_reduction <add>, %111, %cst_43 [1] : vector<16x32xf32> to vector<16xf32>
    %113 = vector.shape_cast %112 : vector<16xf32> to vector<16x1xf32>
    %cst_44 = arith.constant 3.200000e+01 : f32
    %114 = vector.broadcast %cst_44 : f32 to vector<16x1xf32>
    %115 = arith.divf %113, %114 : vector<16x1xf32>
    %116 = vector.broadcast %115 : vector<16x1xf32> to vector<16x32xf32>
    %117 = arith.subf %111, %116 : vector<16x32xf32>
    %118 = arith.mulf %117, %117 : vector<16x32xf32>
    %cst_45 = arith.constant dense<0.000000e+00> : vector<16xf32>
    %119 = vector.multi_reduction <add>, %118, %cst_45 [1] : vector<16x32xf32> to vector<16xf32>
    %120 = vector.shape_cast %119 : vector<16xf32> to vector<16x1xf32>
    %cst_46 = arith.constant 3.200000e+01 : f32
    %121 = vector.broadcast %cst_46 : f32 to vector<16x1xf32>
    %122 = arith.divf %120, %121 : vector<16x1xf32>
    %123 = vector.broadcast %115 : vector<16x1xf32> to vector<16x32xf32>
    %124 = arith.subf %111, %123 : vector<16x32xf32>
    %cst_47 = arith.constant 9.99999974E-6 : f32
    %125 = vector.broadcast %cst_47 : f32 to vector<16x1xf32>
    %126 = arith.addf %122, %125 : vector<16x1xf32>
    %127 = math.rsqrt %126 : vector<16x1xf32>
    %128 = vector.broadcast %127 : vector<16x1xf32> to vector<16x32xf32>
    %129 = arith.mulf %124, %128 : vector<16x32xf32>
    %130 = vector.broadcast %10 : vector<1x32xf32> to vector<16x32xf32>
    %131 = arith.mulf %129, %130 : vector<16x32xf32>
    %132 = vector.broadcast %11 : vector<1x32xf32> to vector<16x32xf32>
    %133 = arith.addf %131, %132 : vector<16x32xf32>
    %c96 = arith.constant 96 : index
    %c0_48 = arith.constant 0 : index
    %134 = vector.load %arg2[%c96, %c0_48] : memref<192x128xf32, #tpu.memory_space<vmem>>, vector<32x128xf32>
    %c128 = arith.constant 128 : index
    %c0_49 = arith.constant 0 : index
    %135 = vector.load %arg2[%c128, %c0_49] : memref<192x128xf32, #tpu.memory_space<vmem>>, vector<32x128xf32>
    %c160 = arith.constant 160 : index
    %c0_50 = arith.constant 0 : index
    %136 = vector.load %arg2[%c160, %c0_50] : memref<192x128xf32, #tpu.memory_space<vmem>>, vector<32x32xf32>
    %c8 = arith.constant 8 : index
    %c0_51 = arith.constant 0 : index
    %137 = vector.load %arg3[%c8, %c0_51] : memref<16x128xf32, #tpu.memory_space<vmem>>, vector<1x32xf32>
    %c9 = arith.constant 9 : index
    %c0_52 = arith.constant 0 : index
    %138 = vector.load %arg3[%c9, %c0_52] : memref<16x128xf32, #tpu.memory_space<vmem>>, vector<1x32xf32>
    %c10 = arith.constant 10 : index
    %c0_53 = arith.constant 0 : index
    %139 = vector.load %arg3[%c10, %c0_53] : memref<16x128xf32, #tpu.memory_space<vmem>>, vector<1x32xf32>
    %c11 = arith.constant 11 : index
    %c0_54 = arith.constant 0 : index
    %140 = vector.load %arg3[%c11, %c0_54] : memref<16x128xf32, #tpu.memory_space<vmem>>, vector<1x128xf32>
    %c12 = arith.constant 12 : index
    %c0_55 = arith.constant 0 : index
    %141 = vector.load %arg3[%c12, %c0_55] : memref<16x128xf32, #tpu.memory_space<vmem>>, vector<1x32xf32>
    %c13 = arith.constant 13 : index
    %c0_56 = arith.constant 0 : index
    %142 = vector.load %arg3[%c13, %c0_56] : memref<16x128xf32, #tpu.memory_space<vmem>>, vector<1x32xf32>
    %c14 = arith.constant 14 : index
    %c0_57 = arith.constant 0 : index
    %143 = vector.load %arg3[%c14, %c0_57] : memref<16x128xf32, #tpu.memory_space<vmem>>, vector<1x32xf32>
    %144 = vector.extract_strided_slice %133 {offsets = [0, 0], sizes = [16, 8], strides = [1, 1]} : vector<16x32xf32> to vector<16x8xf32>
    %cst_58 = arith.constant dense<0.000000e+00> : vector<16x16xf32>
    %145 = tpu.matmul %144, %144, %cst_58 {dimension_numbers = #tpu.dot_dimension_numbers<[1], [1], [0], [0], [0, 0, 1, 0], [], []>, precision = #tpu.contract_precision<fp32>} : vector<16x8xf32>, vector<16x8xf32>, vector<16x16xf32> -> vector<16x16xf32>
    %cst_59 = arith.constant 0.176776692 : f32
    %146 = vector.broadcast %cst_59 : f32 to vector<16x16xf32>
    %147 = arith.mulf %145, %146 : vector<16x16xf32>
    %148 = arith.addf %147, %1 : vector<16x16xf32>
    %cst_60 = arith.constant dense<0xFF800000> : vector<16xf32>
    %149 = vector.multi_reduction <maximumf>, %148, %cst_60 [1] : vector<16x16xf32> to vector<16xf32>
    %150 = vector.shape_cast %149 : vector<16xf32> to vector<16x1xf32>
    %151 = vector.broadcast %150 : vector<16x1xf32> to vector<16x16xf32>
    %152 = arith.subf %148, %151 : vector<16x16xf32>
    %153 = math.exp %152 : vector<16x16xf32>
    %cst_61 = arith.constant dense<0.000000e+00> : vector<16xf32>
    %154 = vector.multi_reduction <add>, %153, %cst_61 [1] : vector<16x16xf32> to vector<16xf32>
    %155 = vector.shape_cast %154 : vector<16xf32> to vector<16x1xf32>
    %156 = tpu.reciprocal %155 {approx = true} : vector<16x1xf32> -> vector<16x1xf32>
    %cst_62 = arith.constant dense<0.000000e+00> : vector<16x8xf32>
    %157 = tpu.matmul %153, %144, %cst_62 {dimension_numbers = #tpu.dot_dimension_numbers<[1], [0], [0], [1], [0, 0, 1, 1], [], []>, precision = #tpu.contract_precision<fp32>} : vector<16x16xf32>, vector<16x8xf32>, vector<16x8xf32> -> vector<16x8xf32>
    %158 = vector.broadcast %156 : vector<16x1xf32> to vector<16x8xf32>
    %159 = arith.mulf %157, %158 : vector<16x8xf32>
    %160 = vector.extract_strided_slice %133 {offsets = [0, 8], sizes = [16, 8], strides = [1, 1]} : vector<16x32xf32> to vector<16x8xf32>
    %cst_63 = arith.constant dense<0.000000e+00> : vector<16x16xf32>
    %161 = tpu.matmul %160, %160, %cst_63 {dimension_numbers = #tpu.dot_dimension_numbers<[1], [1], [0], [0], [0, 0, 1, 0], [], []>, precision = #tpu.contract_precision<fp32>} : vector<16x8xf32>, vector<16x8xf32>, vector<16x16xf32> -> vector<16x16xf32>
    %cst_64 = arith.constant 0.176776692 : f32
    %162 = vector.broadcast %cst_64 : f32 to vector<16x16xf32>
    %163 = arith.mulf %161, %162 : vector<16x16xf32>
    %164 = arith.addf %163, %1 : vector<16x16xf32>
    %cst_65 = arith.constant dense<0xFF800000> : vector<16xf32>
    %165 = vector.multi_reduction <maximumf>, %164, %cst_65 [1] : vector<16x16xf32> to vector<16xf32>
    %166 = vector.shape_cast %165 : vector<16xf32> to vector<16x1xf32>
    %167 = vector.broadcast %166 : vector<16x1xf32> to vector<16x16xf32>
    %168 = arith.subf %164, %167 : vector<16x16xf32>
    %169 = math.exp %168 : vector<16x16xf32>
    %cst_66 = arith.constant dense<0.000000e+00> : vector<16xf32>
    %170 = vector.multi_reduction <add>, %169, %cst_66 [1] : vector<16x16xf32> to vector<16xf32>
    %171 = vector.shape_cast %170 : vector<16xf32> to vector<16x1xf32>
    %172 = tpu.reciprocal %171 {approx = true} : vector<16x1xf32> -> vector<16x1xf32>
    %cst_67 = arith.constant dense<0.000000e+00> : vector<16x8xf32>
    %173 = tpu.matmul %169, %160, %cst_67 {dimension_numbers = #tpu.dot_dimension_numbers<[1], [0], [0], [1], [0, 0, 1, 1], [], []>, precision = #tpu.contract_precision<fp32>} : vector<16x16xf32>, vector<16x8xf32>, vector<16x8xf32> -> vector<16x8xf32>
    %174 = vector.broadcast %172 : vector<16x1xf32> to vector<16x8xf32>
    %175 = arith.mulf %173, %174 : vector<16x8xf32>
    %176 = vector.extract_strided_slice %133 {offsets = [0, 16], sizes = [16, 8], strides = [1, 1]} : vector<16x32xf32> to vector<16x8xf32>
    %cst_68 = arith.constant dense<0.000000e+00> : vector<16x16xf32>
    %177 = tpu.matmul %176, %176, %cst_68 {dimension_numbers = #tpu.dot_dimension_numbers<[1], [1], [0], [0], [0, 0, 1, 0], [], []>, precision = #tpu.contract_precision<fp32>} : vector<16x8xf32>, vector<16x8xf32>, vector<16x16xf32> -> vector<16x16xf32>
    %cst_69 = arith.constant 0.176776692 : f32
    %178 = vector.broadcast %cst_69 : f32 to vector<16x16xf32>
    %179 = arith.mulf %177, %178 : vector<16x16xf32>
    %180 = arith.addf %179, %1 : vector<16x16xf32>
    %cst_70 = arith.constant dense<0xFF800000> : vector<16xf32>
    %181 = vector.multi_reduction <maximumf>, %180, %cst_70 [1] : vector<16x16xf32> to vector<16xf32>
    %182 = vector.shape_cast %181 : vector<16xf32> to vector<16x1xf32>
    %183 = vector.broadcast %182 : vector<16x1xf32> to vector<16x16xf32>
    %184 = arith.subf %180, %183 : vector<16x16xf32>
    %185 = math.exp %184 : vector<16x16xf32>
    %cst_71 = arith.constant dense<0.000000e+00> : vector<16xf32>
    %186 = vector.multi_reduction <add>, %185, %cst_71 [1] : vector<16x16xf32> to vector<16xf32>
    %187 = vector.shape_cast %186 : vector<16xf32> to vector<16x1xf32>
    %188 = tpu.reciprocal %187 {approx = true} : vector<16x1xf32> -> vector<16x1xf32>
    %cst_72 = arith.constant dense<0.000000e+00> : vector<16x8xf32>
    %189 = tpu.matmul %185, %176, %cst_72 {dimension_numbers = #tpu.dot_dimension_numbers<[1], [0], [0], [1], [0, 0, 1, 1], [], []>, precision = #tpu.contract_precision<fp32>} : vector<16x16xf32>, vector<16x8xf32>, vector<16x8xf32> -> vector<16x8xf32>
    %190 = vector.broadcast %188 : vector<16x1xf32> to vector<16x8xf32>
    %191 = arith.mulf %189, %190 : vector<16x8xf32>
    %192 = vector.extract_strided_slice %133 {offsets = [0, 24], sizes = [16, 8], strides = [1, 1]} : vector<16x32xf32> to vector<16x8xf32>
    %cst_73 = arith.constant dense<0.000000e+00> : vector<16x16xf32>
    %193 = tpu.matmul %192, %192, %cst_73 {dimension_numbers = #tpu.dot_dimension_numbers<[1], [1], [0], [0], [0, 0, 1, 0], [], []>, precision = #tpu.contract_precision<fp32>} : vector<16x8xf32>, vector<16x8xf32>, vector<16x16xf32> -> vector<16x16xf32>
    %cst_74 = arith.constant 0.176776692 : f32
    %194 = vector.broadcast %cst_74 : f32 to vector<16x16xf32>
    %195 = arith.mulf %193, %194 : vector<16x16xf32>
    %196 = arith.addf %195, %1 : vector<16x16xf32>
    %cst_75 = arith.constant dense<0xFF800000> : vector<16xf32>
    %197 = vector.multi_reduction <maximumf>, %196, %cst_75 [1] : vector<16x16xf32> to vector<16xf32>
    %198 = vector.shape_cast %197 : vector<16xf32> to vector<16x1xf32>
    %199 = vector.broadcast %198 : vector<16x1xf32> to vector<16x16xf32>
    %200 = arith.subf %196, %199 : vector<16x16xf32>
    %201 = math.exp %200 : vector<16x16xf32>
    %cst_76 = arith.constant dense<0.000000e+00> : vector<16xf32>
    %202 = vector.multi_reduction <add>, %201, %cst_76 [1] : vector<16x16xf32> to vector<16xf32>
    %203 = vector.shape_cast %202 : vector<16xf32> to vector<16x1xf32>
    %204 = tpu.reciprocal %203 {approx = true} : vector<16x1xf32> -> vector<16x1xf32>
    %cst_77 = arith.constant dense<0.000000e+00> : vector<16x8xf32>
    %205 = tpu.matmul %201, %192, %cst_77 {dimension_numbers = #tpu.dot_dimension_numbers<[1], [0], [0], [1], [0, 0, 1, 1], [], []>, precision = #tpu.contract_precision<fp32>} : vector<16x16xf32>, vector<16x8xf32>, vector<16x8xf32> -> vector<16x8xf32>
    %206 = vector.broadcast %204 : vector<16x1xf32> to vector<16x8xf32>
    %207 = arith.mulf %205, %206 : vector<16x8xf32>
    %208 = tpu.concatenate %159, %175, %191, %207 in 1 : vector<16x8xf32>, vector<16x8xf32>, vector<16x8xf32>, vector<16x8xf32> -> vector<16x32xf32>
    %cst_78 = arith.constant dense<0.000000e+00> : vector<16x32xf32>
    %209 = tpu.matmul %208, %136, %cst_78 {dimension_numbers = #tpu.dot_dimension_numbers<[1], [0], [0], [1], [0, 0, 1, 1], [], []>, precision = #tpu.contract_precision<fp32>} : vector<16x32xf32>, vector<32x32xf32>, vector<16x32xf32> -> vector<16x32xf32>
    %210 = vector.broadcast %137 : vector<1x32xf32> to vector<16x32xf32>
    %211 = arith.addf %209, %210 : vector<16x32xf32>
    %212 = arith.addf %211, %133 : vector<16x32xf32>
    %cst_79 = arith.constant dense<0.000000e+00> : vector<16xf32>
    %213 = vector.multi_reduction <add>, %212, %cst_79 [1] : vector<16x32xf32> to vector<16xf32>
    %214 = vector.shape_cast %213 : vector<16xf32> to vector<16x1xf32>
    %cst_80 = arith.constant 3.200000e+01 : f32
    %215 = vector.broadcast %cst_80 : f32 to vector<16x1xf32>
    %216 = arith.divf %214, %215 : vector<16x1xf32>
    %217 = vector.broadcast %216 : vector<16x1xf32> to vector<16x32xf32>
    %218 = arith.subf %212, %217 : vector<16x32xf32>
    %219 = arith.mulf %218, %218 : vector<16x32xf32>
    %cst_81 = arith.constant dense<0.000000e+00> : vector<16xf32>
    %220 = vector.multi_reduction <add>, %219, %cst_81 [1] : vector<16x32xf32> to vector<16xf32>
    %221 = vector.shape_cast %220 : vector<16xf32> to vector<16x1xf32>
    %cst_82 = arith.constant 3.200000e+01 : f32
    %222 = vector.broadcast %cst_82 : f32 to vector<16x1xf32>
    %223 = arith.divf %221, %222 : vector<16x1xf32>
    %224 = vector.broadcast %216 : vector<16x1xf32> to vector<16x32xf32>
    %225 = arith.subf %212, %224 : vector<16x32xf32>
    %cst_83 = arith.constant 9.99999974E-6 : f32
    %226 = vector.broadcast %cst_83 : f32 to vector<16x1xf32>
    %227 = arith.addf %223, %226 : vector<16x1xf32>
    %228 = math.rsqrt %227 : vector<16x1xf32>
    %229 = vector.broadcast %228 : vector<16x1xf32> to vector<16x32xf32>
    %230 = arith.mulf %225, %229 : vector<16x32xf32>
    %231 = vector.broadcast %138 : vector<1x32xf32> to vector<16x32xf32>
    %232 = arith.mulf %230, %231 : vector<16x32xf32>
    %233 = vector.broadcast %139 : vector<1x32xf32> to vector<16x32xf32>
    %234 = arith.addf %232, %233 : vector<16x32xf32>
    %cst_84 = arith.constant dense<0.000000e+00> : vector<16x128xf32>
    %235 = tpu.matmul %234, %134, %cst_84 {dimension_numbers = #tpu.dot_dimension_numbers<[1], [0], [0], [1], [0, 0, 1, 1], [], []>, precision = #tpu.contract_precision<fp32>} : vector<16x32xf32>, vector<32x128xf32>, vector<16x128xf32> -> vector<16x128xf32>
    %236 = vector.broadcast %140 : vector<1x128xf32> to vector<16x128xf32>
    %237 = arith.addf %235, %236 : vector<16x128xf32>
    %cst_85 = arith.constant 0.000000e+00 : f32
    %238 = vector.broadcast %cst_85 : f32 to vector<16x128xf32>
    %239 = arith.maximumf %237, %238 : vector<16x128xf32>
    %cst_86 = arith.constant dense<0.000000e+00> : vector<16x32xf32>
    %240 = tpu.matmul %239, %135, %cst_86 {dimension_numbers = #tpu.dot_dimension_numbers<[1], [1], [0], [0], [0, 0, 1, 0], [], []>, precision = #tpu.contract_precision<fp32>} : vector<16x128xf32>, vector<32x128xf32>, vector<16x32xf32> -> vector<16x32xf32>
    %241 = vector.broadcast %141 : vector<1x32xf32> to vector<16x32xf32>
    %242 = arith.addf %240, %241 : vector<16x32xf32>
    %243 = arith.addf %242, %234 : vector<16x32xf32>
    %cst_87 = arith.constant dense<0.000000e+00> : vector<16xf32>
    %244 = vector.multi_reduction <add>, %243, %cst_87 [1] : vector<16x32xf32> to vector<16xf32>
    %245 = vector.shape_cast %244 : vector<16xf32> to vector<16x1xf32>
    %cst_88 = arith.constant 3.200000e+01 : f32
    %246 = vector.broadcast %cst_88 : f32 to vector<16x1xf32>
    %247 = arith.divf %245, %246 : vector<16x1xf32>
    %248 = vector.broadcast %247 : vector<16x1xf32> to vector<16x32xf32>
    %249 = arith.subf %243, %248 : vector<16x32xf32>
    %250 = arith.mulf %249, %249 : vector<16x32xf32>
    %cst_89 = arith.constant dense<0.000000e+00> : vector<16xf32>
    %251 = vector.multi_reduction <add>, %250, %cst_89 [1] : vector<16x32xf32> to vector<16xf32>
    %252 = vector.shape_cast %251 : vector<16xf32> to vector<16x1xf32>
    %cst_90 = arith.constant 3.200000e+01 : f32
    %253 = vector.broadcast %cst_90 : f32 to vector<16x1xf32>
    %254 = arith.divf %252, %253 : vector<16x1xf32>
    %255 = vector.broadcast %247 : vector<16x1xf32> to vector<16x32xf32>
    %256 = arith.subf %243, %255 : vector<16x32xf32>
    %cst_91 = arith.constant 9.99999974E-6 : f32
    %257 = vector.broadcast %cst_91 : f32 to vector<16x1xf32>
    %258 = arith.addf %254, %257 : vector<16x1xf32>
    %259 = math.rsqrt %258 : vector<16x1xf32>
    %260 = vector.broadcast %259 : vector<16x1xf32> to vector<16x32xf32>
    %261 = arith.mulf %256, %260 : vector<16x32xf32>
    %262 = vector.broadcast %142 : vector<1x32xf32> to vector<16x32xf32>
    %263 = arith.mulf %261, %262 : vector<16x32xf32>
    %264 = vector.broadcast %143 : vector<1x32xf32> to vector<16x32xf32>
    %265 = arith.addf %263, %264 : vector<16x32xf32>
    %c0_92 = arith.constant 0 : index
    %c0_93 = arith.constant 0 : index
    %266 = vector.load %arg4[%c0_92, %c0_93] : memref<16x32xf32, #tpu.memory_space<vmem>>, vector<16x32xf32>
    tpu.vector_store %arg4[%c0_92, %c0_93], %265 {strides = array<i32>} : memref<16x32xf32, #tpu.memory_space<vmem>>, vector<16x32xf32>,
    return
  }
}

</mosaic_0001>

<llo_original>
// kernel: transformer_forward.1
$region0: #{transformer_forward.1}
  #allocation0 [shape = 'u32[]', space=smem, size = 0x4, offset = 0x4, fixed_abs, tag = 'smem constant byte address 0x4 - core index']
  #allocation1 [shape = 'u32[72,128]{1,0:T(1,128)}', space=vmem, size = 0x9000, scoped, tag = 'internal scratch']
  %s0 = inlined_call_operand.vmem [shape: f32[16,32], index: 0, kind: input, shape index: {}]
  %s1 = inlined_call_operand.vmem [shape: f32[16,16], index: 1, kind: input, shape index: {}]
  %s2 = inlined_call_operand.vmem [shape: f32[192,128], index: 2, kind: input, shape index: {}]
  %s3 = inlined_call_operand.vmem [shape: f32[16,128], index: 3, kind: input, shape index: {}]
  %s4 = inlined_call_operand.hbm [shape: f32[16,32], index: 4, kind: output, shape index: {}]
  %s5 = sld [smem:[#allocation0]]
  $region26: #{transformer_forward.1} parent=0
    _
  %s7 = ssub.s32 1, %s5
  %s8 = scalar_select 0, %s7, %s5
  $region1: #{transformer_forward.1} parent=0
    #allocation2 [shape = 'u8[8192]{0}', space=vmem, size = 0x2000, scoped, tag = 'output window, operand 0, single buffered']
    #allocation3 [shape = 's32[1]{0}', space=sflag, size = 0x4, scoped, tag = 'scoped memory for transformer_forward.1']
    %9 = vsyncpa [#allocation3], 0
    // Predicated region
    $region2: #{transformer_forward.1} parent=1 // pred_check
      _
    $region3: #{transformer_forward.1} parent=1 // pred_check_branch
      %11 = sbr.rel (0) target = $region5
    $region4: #{transformer_forward.1} parent=1 // pred_region
      _
    $region5: #{transformer_forward.1} parent=1 // pred_fallthru
      _
    // Predicated region
    $region6: #{transformer_forward.1} parent=1 // pred_check
      _
    $region7: #{transformer_forward.1} parent=1 // pred_check_branch
      %13 = sbr.rel (0) target = $region9
    $region8: #{transformer_forward.1} parent=1 // pred_region
      _
    $region9: #{transformer_forward.1} parent=1 // pred_fallthru
      _
    // Predicated region
    $region10: #{transformer_forward.1} parent=1 // pred_check
      _
    $region11: #{transformer_forward.1} parent=1 // pred_check_branch
      %15 = sbr.rel (0) target = $region13
    $region12: #{transformer_forward.1} parent=1 // pred_region
      _
    $region13: #{transformer_forward.1} parent=1 // pred_fallthru
      _
    // Predicated region
    $region14: #{transformer_forward.1} parent=1 // pred_check
      _
    $region15: #{transformer_forward.1} parent=1 // pred_check_branch
      %17 = sbr.rel (0) target = $region17
    $region16: #{transformer_forward.1} parent=1 // pred_region
      _
    $region17: #{transformer_forward.1} parent=1 // pred_fallthru
      _
    %v18 = vld [vmem:[%s0] sm:$0xff]
    %v19 = vld [vmem:[%s0 + $0x8] sm:$0xff]
    %v20 = vld [vmem:[%s1] sm:$0xff]
    %v21 = vld [vmem:[%s1 + $0x8] sm:$0xff]
    %v22 = vld [vmem:[%s2] sm:$0xff]
    %v23 = vld [vmem:[%s2 + $0x8] sm:$0xff]
    %v24 = vld [vmem:[%s2 + $0x10] sm:$0xff]
    %v25 = vld [vmem:[%s2 + $0x18] sm:$0xff]
    %v26 = vld [vmem:[%s2 + $0x20] sm:$0xff]
    %v27 = vld [vmem:[%s2 + $0x28] sm:$0xff]
    %v28 = vld [vmem:[%s2 + $0x30] sm:$0xff]
    %v29 = vld [vmem:[%s2 + $0x38] sm:$0xff]
    %v30 = vld [vmem:[%s2 + $0x40] sm:$0xff]
    %v31 = vld [vmem:[%s2 + $0x48] sm:$0xff]
    %v32 = vld [vmem:[%s2 + $0x50] sm:$0xff]
    %v33 = vld [vmem:[%s2 + $0x58] sm:$0xff]
    %v34 = vld [vmem:[%s3] sm:$0x1]
    %v35 = vld [vmem:[%s3 + $0x1] sm:$0x1]
    %v36 = vld [vmem:[%s3 + $0x2] sm:$0x1]
    %v37 = vld [vmem:[%s3 + $0x3] sm:$0x1]
    %v38 = vld [vmem:[%s3 + $0x4] sm:$0x1]
    %v39 = vld [vmem:[%s3 + $0x5] sm:$0x1]
    %v40 = vld [vmem:[%s3 + $0x6] sm:$0x1]
    %vm41 = vcmask 64512
    %v43 = vsel %vm41, %v18, 0
    %v46 = vsel %vm41, %v19, 0
    %48 = vmatpush.xpose.msra.mxu0 0.0
    %49 = vmatpush.xpose.msra.mxu0 0.0
    %50 = vmatpush.xpose.msra.mxu0 0.0
    %51 = vmatpush.xpose.msra.mxu0 0.0
    %52 = vmatpush.xpose.msra.mxu0 0.0
    %53 = vmatpush.xpose.msra.mxu0 0.0
    %54 = vmatpush.xpose.msra.mxu0 0.0
    %55 = vmatpush.xpose.msra.mxu0 0.0
    %56 = vmatpush.xpose.msra.mxu0 0.0
    %57 = vmatpush.xpose.msra.mxu0 0.0
    %58 = vmatpush.xpose.msra.mxu0 0.0
    %59 = vmatpush.xpose.msra.mxu0 0.0
    %60 = vmatpush.xpose.msra.mxu0 0.0
    %61 = vmatpush.xpose.msra.mxu0 0.0
    %v62 = vand.u32 %v46, 4294901760
    %63 = vmatpush.xpose.msra.mxu0 %v62
    %v64 = vand.u32 %v43, 4294901760
    %65 = vmatpush.xpose.msra.mxu0 %v64
    %v66 = vand.u32 %v43, 4294901760
    %v67 = vsub.f32 %v43, %v66
    %v68 = vand.u32 %v67, 4294901760
    %v69 = vsub.f32 %v67, %v68
    %v70 = vand.u32 %v69, 4294901760
    %71 = vmatmul.f32.gmra.mxu0 %v70
    %v72 = vpop.f32.mrf.mxu0
    %v73 = vadd.f32 0.0, %v72
    %v74 = vand.u32 %v46, 4294901760
    %v75 = vsub.f32 %v46, %v74
    %v76 = vand.u32 %v75, 4294901760
    %v77 = vsub.f32 %v75, %v76
    %v78 = vand.u32 %v77, 4294901760
    %79 = vmatmul.f32.gmra.mxu0 %v78
    %v80 = vpop.f32.mrf.mxu0
    %v81 = vadd.f32 0.0, %v80
    %82 = vdwg.mxu0
    %83 = vmatpush.xpose.msra.mxu0 0.0
    %84 = vmatpush.xpose.msra.mxu0 0.0
    %85 = vmatpush.xpose.msra.mxu0 0.0
    %86 = vmatpush.xpose.msra.mxu0 0.0
    %87 = vmatpush.xpose.msra.mxu0 0.0
    %88 = vmatpush.xpose.msra.mxu0 0.0
    %89 = vmatpush.xpose.msra.mxu0 0.0
    %90 = vmatpush.xpose.msra.mxu0 0.0
    %91 = vmatpush.xpose.msra.mxu0 0.0
    %92 = vmatpush.xpose.msra.mxu0 0.0
    %93 = vmatpush.xpose.msra.mxu0 0.0
    %94 = vmatpush.xpose.msra.mxu0 0.0
    %95 = vmatpush.xpose.msra.mxu0 0.0
    %96 = vmatpush.xpose.msra.mxu0 0.0
    %v97 = vand.u32 %v46, 4294901760
    %v98 = vsub.f32 %v46, %v97
    %v99 = vand.u32 %v98, 4294901760
    %v100 = vsub.f32 %v98, %v99
    %v101 = vand.u32 %v100, 4294901760
    %102 = vmatpush.xpose.msra.mxu0 %v101
    %v103 = vand.u32 %v43, 4294901760
    %v104 = vsub.f32 %v43, %v103
    %v105 = vand.u32 %v104, 4294901760
    %v106 = vsub.f32 %v104, %v105
    %v107 = vand.u32 %v106, 4294901760
    %108 = vmatpush.xpose.msra.mxu0 %v107
    %v109 = vand.u32 %v43, 4294901760
    %110 = vmatmul.f32.gmra.mxu0 %v109
    %v111 = vpop.f32.mrf.mxu0
    %v112 = vadd.f32 %v73, %v111
    %v113 = vand.u32 %v46, 4294901760
    %114 = vmatmul.f32.gmra.mxu0 %v113
    %v115 = vpop.f32.mrf.mxu0
    %v116 = vadd.f32 %v81, %v115
    %117 = vdwg.mxu0
    %118 = vmatpush.xpose.msra.mxu0 0.0
    %119 = vmatpush.xpose.msra.mxu0 0.0
    %120 = vmatpush.xpose.msra.mxu0 0.0
    %121 = vmatpush.xpose.msra.mxu0 0.0
    %122 = vmatpush.xpose.msra.mxu0 0.0
    %123 = vmatpush.xpose.msra.mxu0 0.0
    %124 = vmatpush.xpose.msra.mxu0 0.0
    %125 = vmatpush.xpose.msra.mxu0 0.0
    %126 = vmatpush.xpose.msra.mxu0 0.0
    %127 = vmatpush.xpose.msra.mxu0 0.0
    %128 = vmatpush.xpose.msra.mxu0 0.0
    %129 = vmatpush.xpose.msra.mxu0 0.0
    %130 = vmatpush.xpose.msra.mxu0 0.0
    %131 = vmatpush.xpose.msra.mxu0 0.0
    %v132 = vand.u32 %v46, 4294901760
    %v133 = vsub.f32 %v46, %v132
    %134 = vmatpush.xpose.msra.mxu0 %v133
    %v135 = vand.u32 %v43, 4294901760
    %v136 = vsub.f32 %v43, %v135
    %137 = vmatpush.xpose.msra.mxu0 %v136
    %v138 = vand.u32 %v43, 4294901760
    %v139 = vsub.f32 %v43, %v138
    %140 = vmatmul.f32.gmra.mxu0 %v139
    %v141 = vpop.f32.mrf.mxu0
    %v142 = vadd.f32 %v112, %v141
    %v143 = vand.u32 %v46, 4294901760
    %v144 = vsub.f32 %v46, %v143
    %145 = vmatmul.f32.gmra.mxu0 %v144
    %v146 = vpop.f32.mrf.mxu0
    %v147 = vadd.f32 %v116, %v146
    %148 = vdwg.mxu0
    %149 = vmatpush.xpose.msra.mxu0 0.0
    %150 = vmatpush.xpose.msra.mxu0 0.0
    %151 = vmatpush.xpose.msra.mxu0 0.0
    %152 = vmatpush.xpose.msra.mxu0 0.0
    %153 = vmatpush.xpose.msra.mxu0 0.0
    %154 = vmatpush.xpose.msra.mxu0 0.0
    %155 = vmatpush.xpose.msra.mxu0 0.0
    %156 = vmatpush.xpose.msra.mxu0 0.0
    %157 = vmatpush.xpose.msra.mxu0 0.0
    %158 = vmatpush.xpose.msra.mxu0 0.0
    %159 = vmatpush.xpose.msra.mxu0 0.0
    %160 = vmatpush.xpose.msra.mxu0 0.0
    %161 = vmatpush.xpose.msra.mxu0 0.0
    %162 = vmatpush.xpose.msra.mxu0 0.0
    %v163 = vand.u32 %v46, 4294901760
    %164 = vmatpush.xpose.msra.mxu0 %v163
    %v165 = vand.u32 %v43, 4294901760
    %166 = vmatpush.xpose.msra.mxu0 %v165
    %v167 = vand.u32 %v43, 4294901760
    %v168 = vsub.f32 %v43, %v167
    %v169 = vand.u32 %v168, 4294901760
    %170 = vmatmul.f32.gmra.mxu0 %v169
    %v171 = vpop.f32.mrf.mxu0
    %v172 = vadd.f32 %v142, %v171
    %v173 = vand.u32 %v46, 4294901760
    %v174 = vsub.f32 %v46, %v173
    %v175 = vand.u32 %v174, 4294901760
    %176 = vmatmul.f32.gmra.mxu0 %v175
    %v177 = vpop.f32.mrf.mxu0
    %v178 = vadd.f32 %v147, %v177
    %179 = vdwg.mxu0
    %180 = vmatpush.xpose.msra.mxu0 0.0
    %181 = vmatpush.xpose.msra.mxu0 0.0
    %182 = vmatpush.xpose.msra.mxu0 0.0
    %183 = vmatpush.xpose.msra.mxu0 0.0
    %184 = vmatpush.xpose.msra.mxu0 0.0
    %185 = vmatpush.xpose.msra.mxu0 0.0
    %186 = vmatpush.xpose.msra.mxu0 0.0
    %187 = vmatpush.xpose.msra.mxu0 0.0
    %188 = vmatpush.xpose.msra.mxu0 0.0
    %189 = vmatpush.xpose.msra.mxu0 0.0
    %190 = vmatpush.xpose.msra.mxu0 0.0
    %191 = vmatpush.xpose.msra.mxu0 0.0
    %192 = vmatpush.xpose.msra.mxu0 0.0
    %193 = vmatpush.xpose.msra.mxu0 0.0
    %v194 = vand.u32 %v46, 4294901760
    %v195 = vsub.f32 %v46, %v194
    %v196 = vand.u32 %v195, 4294901760
    %197 = vmatpush.xpose.msra.mxu0 %v196
    %v198 = vand.u32 %v43, 4294901760
    %v199 = vsub.f32 %v43, %v198
    %v200 = vand.u32 %v199, 4294901760
    %201 = vmatpush.xpose.msra.mxu0 %v200
    %v202 = vand.u32 %v43, 4294901760
    %203 = vmatmul.f32.gmra.mxu0 %v202
    %v204 = vpop.f32.mrf.mxu0
    %v205 = vadd.f32 %v172, %v204
    %v206 = vand.u32 %v46, 4294901760
    %207 = vmatmul.f32.gmra.mxu0 %v206
    %v208 = vpop.f32.mrf.mxu0
    %v209 = vadd.f32 %v178, %v208
    %210 = vdwg.mxu0
    %211 = vmatpush.xpose.msra.mxu0 0.0
    %212 = vmatpush.xpose.msra.mxu0 0.0
    %213 = vmatpush.xpose.msra.mxu0 0.0
    %214 = vmatpush.xpose.msra.mxu0 0.0
    %215 = vmatpush.xpose.msra.mxu0 0.0
    %216 = vmatpush.xpose.msra.mxu0 0.0
    %217 = vmatpush.xpose.msra.mxu0 0.0
    %218 = vmatpush.xpose.msra.mxu0 0.0
    %219 = vmatpush.xpose.msra.mxu0 0.0
    %220 = vmatpush.xpose.msra.mxu0 0.0
    %221 = vmatpush.xpose.msra.mxu0 0.0
    %222 = vmatpush.xpose.msra.mxu0 0.0
    %223 = vmatpush.xpose.msra.mxu0 0.0
    %224 = vmatpush.xpose.msra.mxu0 0.0
    %v225 = vand.u32 %v46, 4294901760
    %226 = vmatpush.xpose.msra.mxu0 %v225
    %v227 = vand.u32 %v43, 4294901760
    %228 = vmatpush.xpose.msra.mxu0 %v227
    %v229 = vand.u32 %v43, 4294901760
    %230 = vmatmul.f32.gmra.mxu0 %v229
    %v231 = vpop.f32.mrf.mxu0
    %v232 = vadd.f32 %v205, %v231
    %v233 = vand.u32 %v46, 4294901760
    %234 = vmatmul.f32.gmra.mxu0 %v233
    %v235 = vpop.f32.mrf.mxu0
    %v236 = vadd.f32 %v209, %v235
    %237 = vdwg.mxu0
    %v238 = vmul.f32 %v232, 0.17677669
    %v239 = vmul.f32 %v236, 0.17677669
    %v240 = vadd.f32 %v238, %v20
    %v241 = vadd.f32 %v239, %v21
    %vm242 = vcmask 130048
    %v243 = vsel %vm242, %v240, -inf
    %244 = vmax.xlane.f32.xlu0 %v243
    %v245 = vpop.xlane.xlu0 %244
    %v246 = vsel %vm242, %v241, -inf
    %247 = vmax.xlane.f32.xlu0 %v246
    %v248 = vpop.xlane.xlu0 %247
    %v249 = vsub.f32 %v240, %v245
    %v250 = vsub.f32 %v241, %v248
    %v251 = vmul.f32 %v249, 1.442695
    %v252 = vpow.pop %v251
    %v253 = vmul.f32 %v250, 1.442695
    %v254 = vpow.pop %v253
    %v255 = vsel %vm242, %v252, 0.0
    %256 = vadd.xlane.f32.xlu0 %v255
    %v257 = vpop.xlane.xlu0 %256
    %v258 = vsel %vm242, %v254, 0.0
    %259 = vadd.xlane.f32.xlu0 %v258
    %v260 = vpop.xlane.xlu0 %259
    %v261 = vrcp.pop %v257
    %v262 = vrcp.pop %v260
    %v264 = vsel %vm242, %v252, 0
    %v267 = vsel %vm242, %v254, 0
    %269 = vmatpush.msra.mxu0 0.0
    %270 = vmatpush.msra.mxu0 0.0
    %271 = vmatpush.msra.mxu0 0.0
    %272 = vmatpush.msra.mxu0 0.0
    %273 = vmatpush.msra.mxu0 0.0
    %274 = vmatpush.msra.mxu0 0.0
    %275 = vmatpush.msra.mxu0 0.0
    %276 = vmatpush.msra.mxu0 0.0
    %277 = vmatpush.msra.mxu0 0.0
    %278 = vmatpush.msra.mxu0 0.0
    %279 = vmatpush.msra.mxu0 0.0
    %280 = vmatpush.msra.mxu0 0.0
    %281 = vmatpush.msra.mxu0 0.0
    %282 = vmatpush.msra.mxu0 0.0
    %v283 = vand.u32 %v19, 4294901760
    %284 = vmatpush.msra.mxu0 %v283
    %v285 = vand.u32 %v18, 4294901760
    %286 = vmatpush.msra.mxu0 %v285
    %v287 = vand.u32 %v264, 4294901760
    %v288 = vsub.f32 %v264, %v287
    %v289 = vand.u32 %v288, 4294901760
    %v290 = vsub.f32 %v288, %v289
    %v291 = vand.u32 %v290, 4294901760
    %292 = vmatmul.f32.gmra.mxu0 %v291
    %v293 = vpop.f32.mrf.mxu0
    %v294 = vadd.f32 0.0, %v293
    %v295 = vand.u32 %v267, 4294901760
    %v296 = vsub.f32 %v267, %v295
    %v297 = vand.u32 %v296, 4294901760
    %v298 = vsub.f32 %v296, %v297
    %v299 = vand.u32 %v298, 4294901760
    %300 = vmatmul.f32.gmra.mxu0 %v299
    %v301 = vpop.f32.mrf.mxu0
    %v302 = vadd.f32 0.0, %v301
    %303 = vdwg.mxu0
    %304 = vmatpush.msra.mxu0 0.0
    %305 = vmatpush.msra.mxu0 0.0
    %306 = vmatpush.msra.mxu0 0.0
    %307 = vmatpush.msra.mxu0 0.0
    %308 = vmatpush.msra.mxu0 0.0
    %309 = vmatpush.msra.mxu0 0.0
    %310 = vmatpush.msra.mxu0 0.0
    %311 = vmatpush.msra.mxu0 0.0
    %312 = vmatpush.msra.mxu0 0.0
    %313 = vmatpush.msra.mxu0 0.0
    %314 = vmatpush.msra.mxu0 0.0
    %315 = vmatpush.msra.mxu0 0.0
    %316 = vmatpush.msra.mxu0 0.0
    %317 = vmatpush.msra.mxu0 0.0
    %v318 = vand.u32 %v19, 4294901760
    %v319 = vsub.f32 %v19, %v318
    %v320 = vand.u32 %v319, 4294901760
    %v321 = vsub.f32 %v319, %v320
    %v322 = vand.u32 %v321, 4294901760
    %323 = vmatpush.msra.mxu0 %v322
    %v324 = vand.u32 %v18, 4294901760
    %v325 = vsub.f32 %v18, %v324
    %v326 = vand.u32 %v325, 4294901760
    %v327 = vsub.f32 %v325, %v326
    %v328 = vand.u32 %v327, 4294901760
    %329 = vmatpush.msra.mxu0 %v328
    %v330 = vand.u32 %v264, 4294901760
    %331 = vmatmul.f32.gmra.mxu0 %v330
    %v332 = vpop.f32.mrf.mxu0
    %v333 = vadd.f32 %v294, %v332
    %v334 = vand.u32 %v267, 4294901760
    %335 = vmatmul.f32.gmra.mxu0 %v334
    %v336 = vpop.f32.mrf.mxu0
    %v337 = vadd.f32 %v302, %v336
    %338 = vdwg.mxu0
    %339 = vmatpush.msra.mxu0 0.0
    %340 = vmatpush.msra.mxu0 0.0
    %341 = vmatpush.msra.mxu0 0.0
    %342 = vmatpush.msra.mxu0 0.0
    %343 = vmatpush.msra.mxu0 0.0
    %344 = vmatpush.msra.mxu0 0.0
    %345 = vmatpush.msra.mxu0 0.0
    %346 = vmatpush.msra.mxu0 0.0
    %347 = vmatpush.msra.mxu0 0.0
    %348 = vmatpush.msra.mxu0 0.0
    %349 = vmatpush.msra.mxu0 0.0
    %350 = vmatpush.msra.mxu0 0.0
    %351 = vmatpush.msra.mxu0 0.0
    %352 = vmatpush.msra.mxu0 0.0
    %v353 = vand.u32 %v19, 4294901760
    %v354 = vsub.f32 %v19, %v353
    %355 = vmatpush.msra.mxu0 %v354
    %v356 = vand.u32 %v18, 4294901760
    %v357 = vsub.f32 %v18, %v356
    %358 = vmatpush.msra.mxu0 %v357
    %v359 = vand.u32 %v264, 4294901760
    %v360 = vsub.f32 %v264, %v359
    %361 = vmatmul.f32.gmra.mxu0 %v360
    %v362 = vpop.f32.mrf.mxu0
    %v363 = vadd.f32 %v333, %v362
    %v364 = vand.u32 %v267, 4294901760
    %v365 = vsub.f32 %v267, %v364
    %366 = vmatmul.f32.gmra.mxu0 %v365
    %v367 = vpop.f32.mrf.mxu0
    %v368 = vadd.f32 %v337, %v367
    %369 = vdwg.mxu0
    %370 = vmatpush.msra.mxu0 0.0
    %371 = vmatpush.msra.mxu0 0.0
    %372 = vmatpush.msra.mxu0 0.0
    %373 = vmatpush.msra.mxu0 0.0
    %374 = vmatpush.msra.mxu0 0.0
    %375 = vmatpush.msra.mxu0 0.0
    %376 = vmatpush.msra.mxu0 0.0
    %377 = vmatpush.msra.mxu0 0.0
    %378 = vmatpush.msra.mxu0 0.0
    %379 = vmatpush.msra.mxu0 0.0
    %380 = vmatpush.msra.mxu0 0.0
    %381 = vmatpush.msra.mxu0 0.0
    %382 = vmatpush.msra.mxu0 0.0
    %383 = vmatpush.msra.mxu0 0.0
    %v384 = vand.u32 %v19, 4294901760
    %385 = vmatpush.msra.mxu0 %v384
    %v386 = vand.u32 %v18, 4294901760
    %387 = vmatpush.msra.mxu0 %v386
    %v388 = vand.u32 %v264, 4294901760
    %v389 = vsub.f32 %v264, %v388
    %v390 = vand.u32 %v389, 4294901760
    %391 = vmatmul.f32.gmra.mxu0 %v390
    %v392 = vpop.f32.mrf.mxu0
    %v393 = vadd.f32 %v363, %v392
    %v394 = vand.u32 %v267, 4294901760
    %v395 = vsub.f32 %v267, %v394
    %v396 = vand.u32 %v395, 4294901760
    %397 = vmatmul.f32.gmra.mxu0 %v396
    %v398 = vpop.f32.mrf.mxu0
    %v399 = vadd.f32 %v368, %v398
    %400 = vdwg.mxu0
    %401 = vmatpush.msra.mxu0 0.0
    %402 = vmatpush.msra.mxu0 0.0
    %403 = vmatpush.msra.mxu0 0.0
    %404 = vmatpush.msra.mxu0 0.0
    %405 = vmatpush.msra.mxu0 0.0
    %406 = vmatpush.msra.mxu0 0.0
    %407 = vmatpush.msra.mxu0 0.0
    %408 = vmatpush.msra.mxu0 0.0
    %409 = vmatpush.msra.mxu0 0.0
    %410 = vmatpush.msra.mxu0 0.0
    %411 = vmatpush.msra.mxu0 0.0
    %412 = vmatpush.msra.mxu0 0.0
    %413 = vmatpush.msra.mxu0 0.0
    %414 = vmatpush.msra.mxu0 0.0
    %v415 = vand.u32 %v19, 4294901760
    %v416 = vsub.f32 %v19, %v415
    %v417 = vand.u32 %v416, 4294901760
    %418 = vmatpush.msra.mxu0 %v417
    %v419 = vand.u32 %v18, 4294901760
    %v420 = vsub.f32 %v18, %v419
    %v421 = vand.u32 %v420, 4294901760
    %422 = vmatpush.msra.mxu0 %v421
    %v423 = vand.u32 %v264, 4294901760
    %424 = vmatmul.f32.gmra.mxu0 %v423
    %v425 = vpop.f32.mrf.mxu0
    %v426 = vadd.f32 %v393, %v425
    %v427 = vand.u32 %v267, 4294901760
    %428 = vmatmul.f32.gmra.mxu0 %v427
    %v429 = vpop.f32.mrf.mxu0
    %v430 = vadd.f32 %v399, %v429
    %431 = vdwg.mxu0
    %432 = vmatpush.msra.mxu0 0.0
    %433 = vmatpush.msra.mxu0 0.0
    %434 = vmatpush.msra.mxu0 0.0
    %435 = vmatpush.msra.mxu0 0.0
    %436 = vmatpush.msra.mxu0 0.0
    %437 = vmatpush.msra.mxu0 0.0
    %438 = vmatpush.msra.mxu0 0.0
    %439 = vmatpush.msra.mxu0 0.0
    %440 = vmatpush.msra.mxu0 0.0
    %441 = vmatpush.msra.mxu0 0.0
    %442 = vmatpush.msra.mxu0 0.0
    %443 = vmatpush.msra.mxu0 0.0
    %444 = vmatpush.msra.mxu0 0.0
    %445 = vmatpush.msra.mxu0 0.0
    %v446 = vand.u32 %v19, 4294901760
    %447 = vmatpush.msra.mxu0 %v446
    %v448 = vand.u32 %v18, 4294901760
    %449 = vmatpush.msra.mxu0 %v448
    %v450 = vand.u32 %v264, 4294901760
    %451 = vmatmul.f32.gmra.mxu0 %v450
    %v452 = vpop.f32.mrf.mxu0
    %v453 = vadd.f32 %v426, %v452
    %v454 = vand.u32 %v267, 4294901760
    %455 = vmatmul.f32.gmra.mxu0 %v454
    %v456 = vpop.f32.mrf.mxu0
    %v457 = vadd.f32 %v430, %v456
    %458 = vdwg.mxu0
    %v459 = vmul.f32 %v453, %v261
    %v460 = vmul.f32 %v457, %v262
    %461 = vrot.lane.b32.xlu0 %v18, 120
    %v462 = vpop.permute.xlu0 %461
    %463 = vrot.lane.b32.xlu0 %v19, 120
    %v464 = vpop.permute.xlu0 %463
    %v465 = vsel %vm41, %v462, 0
    %v467 = vsel %vm41, %v464, 0
    %469 = vmatpush.xpose.msra.mxu0 0.0
    %470 = vmatpush.xpose.msra.mxu0 0.0
    %471 = vmatpush.xpose.msra.mxu0 0.0
    %472 = vmatpush.xpose.msra.mxu0 0.0
    %473 = vmatpush.xpose.msra.mxu0 0.0
    %474 = vmatpush.xpose.msra.mxu0 0.0
    %475 = vmatpush.xpose.msra.mxu0 0.0
    %476 = vmatpush.xpose.msra.mxu0 0.0
    %477 = vmatpush.xpose.msra.mxu0 0.0
    %478 = vmatpush.xpose.msra.mxu0 0.0
    %479 = vmatpush.xpose.msra.mxu0 0.0
    %480 = vmatpush.xpose.msra.mxu0 0.0
    %481 = vmatpush.xpose.msra.mxu0 0.0
    %482 = vmatpush.xpose.msra.mxu0 0.0
    %v483 = vand.u32 %v467, 4294901760
    %484 = vmatpush.xpose.msra.mxu0 %v483
    %v485 = vand.u32 %v465, 4294901760
    %486 = vmatpush.xpose.msra.mxu0 %v485
    %v487 = vand.u32 %v465, 4294901760
    %v488 = vsub.f32 %v465, %v487
    %v489 = vand.u32 %v488, 4294901760
    %v490 = vsub.f32 %v488, %v489
    %v491 = vand.u32 %v490, 4294901760
    %492 = vmatmul.f32.gmra.mxu0 %v491
    %v493 = vpop.f32.mrf.mxu0
    %v494 = vadd.f32 0.0, %v493
    %v495 = vand.u32 %v467, 4294901760
    %v496 = vsub.f32 %v467, %v495
    %v497 = vand.u32 %v496, 4294901760
    %v498 = vsub.f32 %v496, %v497
    %v499 = vand.u32 %v498, 4294901760
    %500 = vmatmul.f32.gmra.mxu0 %v499
    %v501 = vpop.f32.mrf.mxu0
    %v502 = vadd.f32 0.0, %v501
    %503 = vdwg.mxu0
    %504 = vmatpush.xpose.msra.mxu0 0.0
    %505 = vmatpush.xpose.msra.mxu0 0.0
    %506 = vmatpush.xpose.msra.mxu0 0.0
    %507 = vmatpush.xpose.msra.mxu0 0.0
    %508 = vmatpush.xpose.msra.mxu0 0.0
    %509 = vmatpush.xpose.msra.mxu0 0.0
    %510 = vmatpush.xpose.msra.mxu0 0.0
    %511 = vmatpush.xpose.msra.mxu0 0.0
    %512 = vmatpush.xpose.msra.mxu0 0.0
    %513 = vmatpush.xpose.msra.mxu0 0.0
    %514 = vmatpush.xpose.msra.mxu0 0.0
    %515 = vmatpush.xpose.msra.mxu0 0.0
    %516 = vmatpush.xpose.msra.mxu0 0.0
    %517 = vmatpush.xpose.msra.mxu0 0.0
    %v518 = vand.u32 %v467, 4294901760
    %v519 = vsub.f32 %v467, %v518
    %v520 = vand.u32 %v519, 4294901760
    %v521 = vsub.f32 %v519, %v520
    %v522 = vand.u32 %v521, 4294901760
    %523 = vmatpush.xpose.msra.mxu0 %v522
    %v524 = vand.u32 %v465, 4294901760
    %v525 = vsub.f32 %v465, %v524
    %v526 = vand.u32 %v525, 4294901760
    %v527 = vsub.f32 %v525, %v526
    %v528 = vand.u32 %v527, 4294901760
    %529 = vmatpush.xpose.msra.mxu0 %v528
    %v530 = vand.u32 %v465, 4294901760
    %531 = vmatmul.f32.gmra.mxu0 %v530
    %v532 = vpop.f32.mrf.mxu0
    %v533 = vadd.f32 %v494, %v532
    %v534 = vand.u32 %v467, 4294901760
    %535 = vmatmul.f32.gmra.mxu0 %v534
    %v536 = vpop.f32.mrf.mxu0
    %v537 = vadd.f32 %v502, %v536
    %538 = vdwg.mxu0
    %539 = vmatpush.xpose.msra.mxu0 0.0
    %540 = vmatpush.xpose.msra.mxu0 0.0
    %541 = vmatpush.xpose.msra.mxu0 0.0
    %542 = vmatpush.xpose.msra.mxu0 0.0
    %543 = vmatpush.xpose.msra.mxu0 0.0
    %544 = vmatpush.xpose.msra.mxu0 0.0
    %545 = vmatpush.xpose.msra.mxu0 0.0
    %546 = vmatpush.xpose.msra.mxu0 0.0
    %547 = vmatpush.xpose.msra.mxu0 0.0
    %548 = vmatpush.xpose.msra.mxu0 0.0
    %549 = vmatpush.xpose.msra.mxu0 0.0
    %550 = vmatpush.xpose.msra.mxu0 0.0
    %551 = vmatpush.xpose.msra.mxu0 0.0
    %552 = vmatpush.xpose.msra.mxu0 0.0
    %v553 = vand.u32 %v467, 4294901760
    %v554 = vsub.f32 %v467, %v553
    %555 = vmatpush.xpose.msra.mxu0 %v554
    %v556 = vand.u32 %v465, 4294901760
    %v557 = vsub.f32 %v465, %v556
    %558 = vmatpush.xpose.msra.mxu0 %v557
    %v559 = vand.u32 %v465, 4294901760
    %v560 = vsub.f32 %v465, %v559
    %561 = vmatmul.f32.gmra.mxu0 %v560
    %v562 = vpop.f32.mrf.mxu0
    %v563 = vadd.f32 %v533, %v562
    %v564 = vand.u32 %v467, 4294901760
    %v565 = vsub.f32 %v467, %v564
    %566 = vmatmul.f32.gmra.mxu0 %v565
    %v567 = vpop.f32.mrf.mxu0
    %v568 = vadd.f32 %v537, %v567
    %569 = vdwg.mxu0
    %570 = vmatpush.xpose.msra.mxu0 0.0
    %571 = vmatpush.xpose.msra.mxu0 0.0
    %572 = vmatpush.xpose.msra.mxu0 0.0
    %573 = vmatpush.xpose.msra.mxu0 0.0
    %574 = vmatpush.xpose.msra.mxu0 0.0
    %575 = vmatpush.xpose.msra.mxu0 0.0
    %576 = vmatpush.xpose.msra.mxu0 0.0
    %577 = vmatpush.xpose.msra.mxu0 0.0
    %578 = vmatpush.xpose.msra.mxu0 0.0
    %579 = vmatpush.xpose.msra.mxu0 0.0
    %580 = vmatpush.xpose.msra.mxu0 0.0
    %581 = vmatpush.xpose.msra.mxu0 0.0
    %582 = vmatpush.xpose.msra.mxu0 0.0
    %583 = vmatpush.xpose.msra.mxu0 0.0
    %v584 = vand.u32 %v467, 4294901760
    %585 = vmatpush.xpose.msra.mxu0 %v584
    %v586 = vand.u32 %v465, 4294901760
    %587 = vmatpush.xpose.msra.mxu0 %v586
    %v588 = vand.u32 %v465, 4294901760
    %v589 = vsub.f32 %v465, %v588
    %v590 = vand.u32 %v589, 4294901760
    %591 = vmatmul.f32.gmra.mxu0 %v590
    %v592 = vpop.f32.mrf.mxu0
    %v593 = vadd.f32 %v563, %v592
    %v594 = vand.u32 %v467, 4294901760
    %v595 = vsub.f32 %v467, %v594
    %v596 = vand.u32 %v595, 4294901760
    %597 = vmatmul.f32.gmra.mxu0 %v596
    %v598 = vpop.f32.mrf.mxu0
    %v599 = vadd.f32 %v568, %v598
    %600 = vdwg.mxu0
    %601 = vmatpush.xpose.msra.mxu0 0.0
    %602 = vmatpush.xpose.msra.mxu0 0.0
    %603 = vmatpush.xpose.msra.mxu0 0.0
    %604 = vmatpush.xpose.msra.mxu0 0.0
    %605 = vmatpush.xpose.msra.mxu0 0.0
    %606 = vmatpush.xpose.msra.mxu0 0.0
    %607 = vmatpush.xpose.msra.mxu0 0.0
    %608 = vmatpush.xpose.msra.mxu0 0.0
    %609 = vmatpush.xpose.msra.mxu0 0.0
    %610 = vmatpush.xpose.msra.mxu0 0.0
    %611 = vmatpush.xpose.msra.mxu0 0.0
    %612 = vmatpush.xpose.msra.mxu0 0.0
    %613 = vmatpush.xpose.msra.mxu0 0.0
    %614 = vmatpush.xpose.msra.mxu0 0.0
    %v615 = vand.u32 %v467, 4294901760
    %v616 = vsub.f32 %v467, %v615
    %v617 = vand.u32 %v616, 4294901760
    %618 = vmatpush.xpose.msra.mxu0 %v617
    %v619 = vand.u32 %v465, 4294901760
    %v620 = vsub.f32 %v465, %v619
    %v621 = vand.u32 %v620, 4294901760
    %622 = vmatpush.xpose.msra.mxu0 %v621
    %v623 = vand.u32 %v465, 4294901760
    %624 = vmatmul.f32.gmra.mxu0 %v623
    %v625 = vpop.f32.mrf.mxu0
    %v626 = vadd.f32 %v593, %v625
    %v627 = vand.u32 %v467, 4294901760
    %628 = vmatmul.f32.gmra.mxu0 %v627
    %v629 = vpop.f32.mrf.mxu0
    %v630 = vadd.f32 %v599, %v629
    %631 = vdwg.mxu0
    %632 = vmatpush.xpose.msra.mxu0 0.0
    %633 = vmatpush.xpose.msra.mxu0 0.0
    %634 = vmatpush.xpose.msra.mxu0 0.0
    %635 = vmatpush.xpose.msra.mxu0 0.0
    %636 = vmatpush.xpose.msra.mxu0 0.0
    %637 = vmatpush.xpose.msra.mxu0 0.0
    %638 = vmatpush.xpose.msra.mxu0 0.0
    %639 = vmatpush.xpose.msra.mxu0 0.0
    %640 = vmatpush.xpose.msra.mxu0 0.0
    %641 = vmatpush.xpose.msra.mxu0 0.0
    %642 = vmatpush.xpose.msra.mxu0 0.0
    %643 = vmatpush.xpose.msra.mxu0 0.0
    %644 = vmatpush.xpose.msra.mxu0 0.0
    %645 = vmatpush.xpose.msra.mxu0 0.0
    %v646 = vand.u32 %v467, 4294901760
    %647 = vmatpush.xpose.msra.mxu0 %v646
    %v648 = vand.u32 %v465, 4294901760
    %649 = vmatpush.xpose.msra.mxu0 %v648
    %v650 = vand.u32 %v465, 4294901760
    %651 = vmatmul.f32.gmra.mxu0 %v650
    %v652 = vpop.f32.mrf.mxu0
    %v653 = vadd.f32 %v626, %v652
    %v654 = vand.u32 %v467, 4294901760
    %655 = vmatmul.f32.gmra.mxu0 %v654
    %v656 = vpop.f32.mrf.mxu0
    %v657 = vadd.f32 %v630, %v656
    %658 = vdwg.mxu0
    %v659 = vmul.f32 %v653, 0.17677669
    %v660 = vmul.f32 %v657, 0.17677669
    %v661 = vadd.f32 %v659, %v20
    %v662 = vadd.f32 %v660, %v21
    %v663 = vsel %vm242, %v661, -inf
    %664 = vmax.xlane.f32.xlu0 %v663
    %v665 = vpop.xlane.xlu0 %664
    %v666 = vsel %vm242, %v662, -inf
    %667 = vmax.xlane.f32.xlu0 %v666
    %v668 = vpop.xlane.xlu0 %667
    %v669 = vsub.f32 %v661, %v665
    %v670 = vsub.f32 %v662, %v668
    %v671 = vmul.f32 %v669, 1.442695
    %v672 = vpow.pop %v671
    %v673 = vmul.f32 %v670, 1.442695
    %v674 = vpow.pop %v673
    %v675 = vsel %vm242, %v672, 0.0
    %676 = vadd.xlane.f32.xlu0 %v675
    %v677 = vpop.xlane.xlu0 %676
    %v678 = vsel %vm242, %v674, 0.0
    %679 = vadd.xlane.f32.xlu0 %v678
    %v680 = vpop.xlane.xlu0 %679
    %v681 = vrcp.pop %v677
    %v682 = vrcp.pop %v680
    %v686 = vsel %vm242, %v672, 0
    %v689 = vsel %vm242, %v674, 0
    %691 = vmatpush.msra.mxu0 0.0
    %692 = vmatpush.msra.mxu0 0.0
    %693 = vmatpush.msra.mxu0 0.0
    %694 = vmatpush.msra.mxu0 0.0
    %695 = vmatpush.msra.mxu0 0.0
    %696 = vmatpush.msra.mxu0 0.0
    %697 = vmatpush.msra.mxu0 0.0
    %698 = vmatpush.msra.mxu0 0.0
    %699 = vmatpush.msra.mxu0 0.0
    %700 = vmatpush.msra.mxu0 0.0
    %701 = vmatpush.msra.mxu0 0.0
    %702 = vmatpush.msra.mxu0 0.0
    %703 = vmatpush.msra.mxu0 0.0
    %704 = vmatpush.msra.mxu0 0.0
    %v705 = vand.u32 %v464, 4294901760
    %706 = vmatpush.msra.mxu0 %v705
    %v707 = vand.u32 %v462, 4294901760
    %708 = vmatpush.msra.mxu0 %v707
    %v709 = vand.u32 %v686, 4294901760
    %v710 = vsub.f32 %v686, %v709
    %v711 = vand.u32 %v710, 4294901760
    %v712 = vsub.f32 %v710, %v711
    %v713 = vand.u32 %v712, 4294901760
    %714 = vmatmul.f32.gmra.mxu0 %v713
    %v715 = vpop.f32.mrf.mxu0
    %v716 = vadd.f32 0.0, %v715
    %v717 = vand.u32 %v689, 4294901760
    %v718 = vsub.f32 %v689, %v717
    %v719 = vand.u32 %v718, 4294901760
    %v720 = vsub.f32 %v718, %v719
    %v721 = vand.u32 %v720, 4294901760
    %722 = vmatmul.f32.gmra.mxu0 %v721
    %v723 = vpop.f32.mrf.mxu0
    %v724 = vadd.f32 0.0, %v723
    %725 = vdwg.mxu0
    %726 = vmatpush.msra.mxu0 0.0
    %727 = vmatpush.msra.mxu0 0.0
    %728 = vmatpush.msra.mxu0 0.0
    %729 = vmatpush.msra.mxu0 0.0
    %730 = vmatpush.msra.mxu0 0.0
    %731 = vmatpush.msra.mxu0 0.0
    %732 = vmatpush.msra.mxu0 0.0
    %733 = vmatpush.msra.mxu0 0.0
    %734 = vmatpush.msra.mxu0 0.0
    %735 = vmatpush.msra.mxu0 0.0
    %736 = vmatpush.msra.mxu0 0.0
    %737 = vmatpush.msra.mxu0 0.0
    %738 = vmatpush.msra.mxu0 0.0
    %739 = vmatpush.msra.mxu0 0.0
    %v740 = vand.u32 %v464, 4294901760
    %v741 = vsub.f32 %v464, %v740
    %v742 = vand.u32 %v741, 4294901760
    %v743 = vsub.f32 %v741, %v742
    %v744 = vand.u32 %v743, 4294901760
    %745 = vmatpush.msra.mxu0 %v744
    %v746 = vand.u32 %v462, 4294901760
    %v747 = vsub.f32 %v462, %v746
    %v748 = vand.u32 %v747, 4294901760
    %v749 = vsub.f32 %v747, %v748
    %v750 = vand.u32 %v749, 4294901760
    %751 = vmatpush.msra.mxu0 %v750
    %v752 = vand.u32 %v686, 4294901760
    %753 = vmatmul.f32.gmra.mxu0 %v752
    %v754 = vpop.f32.mrf.mxu0
    %v755 = vadd.f32 %v716, %v754
    %v756 = vand.u32 %v689, 4294901760
    %757 = vmatmul.f32.gmra.mxu0 %v756
    %v758 = vpop.f32.mrf.mxu0
    %v759 = vadd.f32 %v724, %v758
    %760 = vdwg.mxu0
    %761 = vmatpush.msra.mxu0 0.0
    %762 = vmatpush.msra.mxu0 0.0
    %763 = vmatpush.msra.mxu0 0.0
    %764 = vmatpush.msra.mxu0 0.0
    %765 = vmatpush.msra.mxu0 0.0
    %766 = vmatpush.msra.mxu0 0.0
    %767 = vmatpush.msra.mxu0 0.0
    %768 = vmatpush.msra.mxu0 0.0
    %769 = vmatpush.msra.mxu0 0.0
    %770 = vmatpush.msra.mxu0 0.0
    %771 = vmatpush.msra.mxu0 0.0
    %772 = vmatpush.msra.mxu0 0.0
    %773 = vmatpush.msra.mxu0 0.0
    %774 = vmatpush.msra.mxu0 0.0
    %v775 = vand.u32 %v464, 4294901760
    %v776 = vsub.f32 %v464, %v775
    %777 = vmatpush.msra.mxu0 %v776
    %v778 = vand.u32 %v462, 4294901760
    %v779 = vsub.f32 %v462, %v778
    %780 = vmatpush.msra.mxu0 %v779
    %v781 = vand.u32 %v686, 4294901760
    %v782 = vsub.f32 %v686, %v781
    %783 = vmatmul.f32.gmra.mxu0 %v782
    %v784 = vpop.f32.mrf.mxu0
    %v785 = vadd.f32 %v755, %v784
    %v786 = vand.u32 %v689, 4294901760
    %v787 = vsub.f32 %v689, %v786
    %788 = vmatmul.f32.gmra.mxu0 %v787
    %v789 = vpop.f32.mrf.mxu0
    %v790 = vadd.f32 %v759, %v789
    %791 = vdwg.mxu0
    %792 = vmatpush.msra.mxu0 0.0
    %793 = vmatpush.msra.mxu0 0.0
    %794 = vmatpush.msra.mxu0 0.0
    %795 = vmatpush.msra.mxu0 0.0
    %796 = vmatpush.msra.mxu0 0.0
    %797 = vmatpush.msra.mxu0 0.0
    %798 = vmatpush.msra.mxu0 0.0
    %799 = vmatpush.msra.mxu0 0.0
    %800 = vmatpush.msra.mxu0 0.0
    %801 = vmatpush.msra.mxu0 0.0
    %802 = vmatpush.msra.mxu0 0.0
    %803 = vmatpush.msra.mxu0 0.0
    %804 = vmatpush.msra.mxu0 0.0
    %805 = vmatpush.msra.mxu0 0.0
    %v806 = vand.u32 %v464, 4294901760
    %807 = vmatpush.msra.mxu0 %v806
    %v808 = vand.u32 %v462, 4294901760
    %809 = vmatpush.msra.mxu0 %v808
    %v810 = vand.u32 %v686, 4294901760
    %v811 = vsub.f32 %v686, %v810
    %v812 = vand.u32 %v811, 4294901760
    %813 = vmatmul.f32.gmra.mxu0 %v812
    %v814 = vpop.f32.mrf.mxu0
    %v815 = vadd.f32 %v785, %v814
    %v816 = vand.u32 %v689, 4294901760
    %v817 = vsub.f32 %v689, %v816
    %v818 = vand.u32 %v817, 4294901760
    %819 = vmatmul.f32.gmra.mxu0 %v818
    %v820 = vpop.f32.mrf.mxu0
    %v821 = vadd.f32 %v790, %v820
    %822 = vdwg.mxu0
    %823 = vmatpush.msra.mxu0 0.0
    %824 = vmatpush.msra.mxu0 0.0
    %825 = vmatpush.msra.mxu0 0.0
    %826 = vmatpush.msra.mxu0 0.0
    %827 = vmatpush.msra.mxu0 0.0
    %828 = vmatpush.msra.mxu0 0.0
    %829 = vmatpush.msra.mxu0 0.0
    %830 = vmatpush.msra.mxu0 0.0
    %831 = vmatpush.msra.mxu0 0.0
    %832 = vmatpush.msra.mxu0 0.0
    %833 = vmatpush.msra.mxu0 0.0
    %834 = vmatpush.msra.mxu0 0.0
    %835 = vmatpush.msra.mxu0 0.0
    %836 = vmatpush.msra.mxu0 0.0
    %v837 = vand.u32 %v464, 4294901760
    %v838 = vsub.f32 %v464, %v837
    %v839 = vand.u32 %v838, 4294901760
    %840 = vmatpush.msra.mxu0 %v839
    %v841 = vand.u32 %v462, 4294901760
    %v842 = vsub.f32 %v462, %v841
    %v843 = vand.u32 %v842, 4294901760
    %844 = vmatpush.msra.mxu0 %v843
    %v845 = vand.u32 %v686, 4294901760
    %846 = vmatmul.f32.gmra.mxu0 %v845
    %v847 = vpop.f32.mrf.mxu0
    %v848 = vadd.f32 %v815, %v847
    %v849 = vand.u32 %v689, 4294901760
    %850 = vmatmul.f32.gmra.mxu0 %v849
    %v851 = vpop.f32.mrf.mxu0
    %v852 = vadd.f32 %v821, %v851
    %853 = vdwg.mxu0
    %854 = vmatpush.msra.mxu0 0.0
    %855 = vmatpush.msra.mxu0 0.0
    %856 = vmatpush.msra.mxu0 0.0
    %857 = vmatpush.msra.mxu0 0.0
    %858 = vmatpush.msra.mxu0 0.0
    %859 = vmatpush.msra.mxu0 0.0
    %860 = vmatpush.msra.mxu0 0.0
    %861 = vmatpush.msra.mxu0 0.0
    %862 = vmatpush.msra.mxu0 0.0
    %863 = vmatpush.msra.mxu0 0.0
    %864 = vmatpush.msra.mxu0 0.0
    %865 = vmatpush.msra.mxu0 0.0
    %866 = vmatpush.msra.mxu0 0.0
    %867 = vmatpush.msra.mxu0 0.0
    %v868 = vand.u32 %v464, 4294901760
    %869 = vmatpush.msra.mxu0 %v868
    %v870 = vand.u32 %v462, 4294901760
    %871 = vmatpush.msra.mxu0 %v870
    %v872 = vand.u32 %v686, 4294901760
    %873 = vmatmul.f32.gmra.mxu0 %v872
    %v874 = vpop.f32.mrf.mxu0
    %v875 = vadd.f32 %v848, %v874
    %v876 = vand.u32 %v689, 4294901760
    %877 = vmatmul.f32.gmra.mxu0 %v876
    %v878 = vpop.f32.mrf.mxu0
    %v879 = vadd.f32 %v852, %v878
    %880 = vdwg.mxu0
    %v881 = vmul.f32 %v875, %v681
    %v882 = vmul.f32 %v879, %v682
    %883 = vrot.lane.b32.xlu0 %v18, 112
    %v884 = vpop.permute.xlu0 %883
    %885 = vrot.lane.b32.xlu0 %v19, 112
    %v886 = vpop.permute.xlu0 %885
    %v887 = vsel %vm41, %v884, 0
    %v889 = vsel %vm41, %v886, 0
    %891 = vmatpush.xpose.msra.mxu0 0.0
    %892 = vmatpush.xpose.msra.mxu0 0.0
    %893 = vmatpush.xpose.msra.mxu0 0.0
    %894 = vmatpush.xpose.msra.mxu0 0.0
    %895 = vmatpush.xpose.msra.mxu0 0.0
    %896 = vmatpush.xpose.msra.mxu0 0.0
    %897 = vmatpush.xpose.msra.mxu0 0.0
    %898 = vmatpush.xpose.msra.mxu0 0.0
    %899 = vmatpush.xpose.msra.mxu0 0.0
    %900 = vmatpush.xpose.msra.mxu0 0.0
    %901 = vmatpush.xpose.msra.mxu0 0.0
    %902 = vmatpush.xpose.msra.mxu0 0.0
    %903 = vmatpush.xpose.msra.mxu0 0.0
    %904 = vmatpush.xpose.msra.mxu0 0.0
    %v905 = vand.u32 %v889, 4294901760
    %906 = vmatpush.xpose.msra.mxu0 %v905
    %v907 = vand.u32 %v887, 4294901760
    %908 = vmatpush.xpose.msra.mxu0 %v907
    %v909 = vand.u32 %v887, 4294901760
    %v910 = vsub.f32 %v887, %v909
    %v911 = vand.u32 %v910, 4294901760
    %v912 = vsub.f32 %v910, %v911
    %v913 = vand.u32 %v912, 4294901760
    %914 = vmatmul.f32.gmra.mxu0 %v913
    %v915 = vpop.f32.mrf.mxu0
    %v916 = vadd.f32 0.0, %v915
    %v917 = vand.u32 %v889, 4294901760
    %v918 = vsub.f32 %v889, %v917
    %v919 = vand.u32 %v918, 4294901760
    %v920 = vsub.f32 %v918, %v919
    %v921 = vand.u32 %v920, 4294901760
    %922 = vmatmul.f32.gmra.mxu0 %v921
    %v923 = vpop.f32.mrf.mxu0
    %v924 = vadd.f32 0.0, %v923
    %925 = vdwg.mxu0
    %926 = vmatpush.xpose.msra.mxu0 0.0
    %927 = vmatpush.xpose.msra.mxu0 0.0
    %928 = vmatpush.xpose.msra.mxu0 0.0
    %929 = vmatpush.xpose.msra.mxu0 0.0
    %930 = vmatpush.xpose.msra.mxu0 0.0
    %931 = vmatpush.xpose.msra.mxu0 0.0
    %932 = vmatpush.xpose.msra.mxu0 0.0
    %933 = vmatpush.xpose.msra.mxu0 0.0
    %934 = vmatpush.xpose.msra.mxu0 0.0
    %935 = vmatpush.xpose.msra.mxu0 0.0
    %936 = vmatpush.xpose.msra.mxu0 0.0
    %937 = vmatpush.xpose.msra.mxu0 0.0
    %938 = vmatpush.xpose.msra.mxu0 0.0
    %939 = vmatpush.xpose.msra.mxu0 0.0
    %v940 = vand.u32 %v889, 4294901760
    %v941 = vsub.f32 %v889, %v940
    %v942 = vand.u32 %v941, 4294901760
    %v943 = vsub.f32 %v941, %v942
    %v944 = vand.u32 %v943, 4294901760
    %945 = vmatpush.xpose.msra.mxu0 %v944
    %v946 = vand.u32 %v887, 4294901760
    %v947 = vsub.f32 %v887, %v946
    %v948 = vand.u32 %v947, 4294901760
    %v949 = vsub.f32 %v947, %v948
    %v950 = vand.u32 %v949, 4294901760
    %951 = vmatpush.xpose.msra.mxu0 %v950
    %v952 = vand.u32 %v887, 4294901760
    %953 = vmatmul.f32.gmra.mxu0 %v952
    %v954 = vpop.f32.mrf.mxu0
    %v955 = vadd.f32 %v916, %v954
    %v956 = vand.u32 %v889, 4294901760
    %957 = vmatmul.f32.gmra.mxu0 %v956
    %v958 = vpop.f32.mrf.mxu0
    %v959 = vadd.f32 %v924, %v958
    %960 = vdwg.mxu0
    %961 = vmatpush.xpose.msra.mxu0 0.0
    %962 = vmatpush.xpose.msra.mxu0 0.0
    %963 = vmatpush.xpose.msra.mxu0 0.0
    %964 = vmatpush.xpose.msra.mxu0 0.0
    %965 = vmatpush.xpose.msra.mxu0 0.0
    %966 = vmatpush.xpose.msra.mxu0 0.0
    %967 = vmatpush.xpose.msra.mxu0 0.0
    %968 = vmatpush.xpose.msra.mxu0 0.0
    %969 = vmatpush.xpose.msra.mxu0 0.0
    %970 = vmatpush.xpose.msra.mxu0 0.0
    %971 = vmatpush.xpose.msra.mxu0 0.0
    %972 = vmatpush.xpose.msra.mxu0 0.0
    %973 = vmatpush.xpose.msra.mxu0 0.0
    %974 = vmatpush.xpose.msra.mxu0 0.0
    %v975 = vand.u32 %v889, 4294901760
    %v976 = vsub.f32 %v889, %v975
    %977 = vmatpush.xpose.msra.mxu0 %v976
    %v978 = vand.u32 %v887, 4294901760
    %v979 = vsub.f32 %v887, %v978
    %980 = vmatpush.xpose.msra.mxu0 %v979
    %v981 = vand.u32 %v887, 4294901760
    %v982 = vsub.f32 %v887, %v981
    %983 = vmatmul.f32.gmra.mxu0 %v982
    %v984 = vpop.f32.mrf.mxu0
    %v985 = vadd.f32 %v955, %v984
    %v986 = vand.u32 %v889, 4294901760
    %v987 = vsub.f32 %v889, %v986
    %988 = vmatmul.f32.gmra.mxu0 %v987
    %v989 = vpop.f32.mrf.mxu0
    %v990 = vadd.f32 %v959, %v989
    %991 = vdwg.mxu0
    %992 = vmatpush.xpose.msra.mxu0 0.0
    %993 = vmatpush.xpose.msra.mxu0 0.0
    %994 = vmatpush.xpose.msra.mxu0 0.0
    %995 = vmatpush.xpose.msra.mxu0 0.0
    %996 = vmatpush.xpose.msra.mxu0 0.0
    %997 = vmatpush.xpose.msra.mxu0 0.0
    %998 = vmatpush.xpose.msra.mxu0 0.0
    %999 = vmatpush.xpose.msra.mxu0 0.0
    %1000 = vmatpush.xpose.msra.mxu0 0.0
    %1001 = vmatpush.xpose.msra.mxu0 0.0
    %1002 = vmatpush.xpose.msra.mxu0 0.0
    %1003 = vmatpush.xpose.msra.mxu0 0.0
    %1004 = vmatpush.xpose.msra.mxu0 0.0
    %1005 = vmatpush.xpose.msra.mxu0 0.0
    %v1006 = vand.u32 %v889, 4294901760
    %1007 = vmatpush.xpose.msra.mxu0 %v1006
    %v1008 = vand.u32 %v887, 4294901760
    %1009 = vmatpush.xpose.msra.mxu0 %v1008
    %v1010 = vand.u32 %v887, 4294901760
    %v1011 = vsub.f32 %v887, %v1010
    %v1012 = vand.u32 %v1011, 4294901760
    %1013 = vmatmul.f32.gmra.mxu0 %v1012
    %v1014 = vpop.f32.mrf.mxu0
    %v1015 = vadd.f32 %v985, %v1014
    %v1016 = vand.u32 %v889, 4294901760
    %v1017 = vsub.f32 %v889, %v1016
    %v1018 = vand.u32 %v1017, 4294901760
    %1019 = vmatmul.f32.gmra.mxu0 %v1018
    %v1020 = vpop.f32.mrf.mxu0
    %v1021 = vadd.f32 %v990, %v1020
    %1022 = vdwg.mxu0
    %1023 = vmatpush.xpose.msra.mxu0 0.0
    %1024 = vmatpush.xpose.msra.mxu0 0.0
    %1025 = vmatpush.xpose.msra.mxu0 0.0
    %1026 = vmatpush.xpose.msra.mxu0 0.0
    %1027 = vmatpush.xpose.msra.mxu0 0.0
    %1028 = vmatpush.xpose.msra.mxu0 0.0
    %1029 = vmatpush.xpose.msra.mxu0 0.0
    %1030 = vmatpush.xpose.msra.mxu0 0.0
    %1031 = vmatpush.xpose.msra.mxu0 0.0
    %1032 = vmatpush.xpose.msra.mxu0 0.0
    %1033 = vmatpush.xpose.msra.mxu0 0.0
    %1034 = vmatpush.xpose.msra.mxu0 0.0
    %1035 = vmatpush.xpose.msra.mxu0 0.0
    %1036 = vmatpush.xpose.msra.mxu0 0.0
    %v1037 = vand.u32 %v889, 4294901760
    %v1038 = vsub.f32 %v889, %v1037
    %v1039 = vand.u32 %v1038, 4294901760
    %1040 = vmatpush.xpose.msra.mxu0 %v1039
    %v1041 = vand.u32 %v887, 4294901760
    %v1042 = vsub.f32 %v887, %v1041
    %v1043 = vand.u32 %v1042, 4294901760
    %1044 = vmatpush.xpose.msra.mxu0 %v1043
    %v1045 = vand.u32 %v887, 4294901760
    %1046 = vmatmul.f32.gmra.mxu0 %v1045
    %v1047 = vpop.f32.mrf.mxu0
    %v1048 = vadd.f32 %v1015, %v1047
    %v1049 = vand.u32 %v889, 4294901760
    %1050 = vmatmul.f32.gmra.mxu0 %v1049
    %v1051 = vpop.f32.mrf.mxu0
    %v1052 = vadd.f32 %v1021, %v1051
    %1053 = vdwg.mxu0
    %1054 = vmatpush.xpose.msra.mxu0 0.0
    %1055 = vmatpush.xpose.msra.mxu0 0.0
    %1056 = vmatpush.xpose.msra.mxu0 0.0
    %1057 = vmatpush.xpose.msra.mxu0 0.0
    %1058 = vmatpush.xpose.msra.mxu0 0.0
    %1059 = vmatpush.xpose.msra.mxu0 0.0
    %1060 = vmatpush.xpose.msra.mxu0 0.0
    %1061 = vmatpush.xpose.msra.mxu0 0.0
    %1062 = vmatpush.xpose.msra.mxu0 0.0
    %1063 = vmatpush.xpose.msra.mxu0 0.0
    %1064 = vmatpush.xpose.msra.mxu0 0.0
    %1065 = vmatpush.xpose.msra.mxu0 0.0
    %1066 = vmatpush.xpose.msra.mxu0 0.0
    %1067 = vmatpush.xpose.msra.mxu0 0.0
    %v1068 = vand.u32 %v889, 4294901760
    %1069 = vmatpush.xpose.msra.mxu0 %v1068
    %v1070 = vand.u32 %v887, 4294901760
    %1071 = vmatpush.xpose.msra.mxu0 %v1070
    %v1072 = vand.u32 %v887, 4294901760
    %1073 = vmatmul.f32.gmra.mxu0 %v1072
    %v1074 = vpop.f32.mrf.mxu0
    %v1075 = vadd.f32 %v1048, %v1074
    %v1076 = vand.u32 %v889, 4294901760
    %1077 = vmatmul.f32.gmra.mxu0 %v1076
    %v1078 = vpop.f32.mrf.mxu0
    %v1079 = vadd.f32 %v1052, %v1078
    %1080 = vdwg.mxu0
    %v1081 = vmul.f32 %v1075, 0.17677669
    %v1082 = vmul.f32 %v1079, 0.17677669
    %v1083 = vadd.f32 %v1081, %v20
    %v1084 = vadd.f32 %v1082, %v21
    %v1085 = vsel %vm242, %v1083, -inf
    %1086 = vmax.xlane.f32.xlu0 %v1085
    %v1087 = vpop.xlane.xlu0 %1086
    %v1088 = vsel %vm242, %v1084, -inf
    %1089 = vmax.xlane.f32.xlu0 %v1088
    %v1090 = vpop.xlane.xlu0 %1089
    %v1091 = vsub.f32 %v1083, %v1087
    %v1092 = vsub.f32 %v1084, %v1090
    %v1093 = vmul.f32 %v1091, 1.442695
    %v1094 = vpow.pop %v1093
    %v1095 = vmul.f32 %v1092, 1.442695
    %v1096 = vpow.pop %v1095
    %v1097 = vsel %vm242, %v1094, 0.0
    %1098 = vadd.xlane.f32.xlu0 %v1097
    %v1099 = vpop.xlane.xlu0 %1098
    %v1100 = vsel %vm242, %v1096, 0.0
    %1101 = vadd.xlane.f32.xlu0 %v1100
    %v1102 = vpop.xlane.xlu0 %1101
    %v1103 = vrcp.pop %v1099
    %v1104 = vrcp.pop %v1102
    %v1108 = vsel %vm242, %v1094, 0
    %v1111 = vsel %vm242, %v1096, 0
    %1113 = vmatpush.msra.mxu0 0.0
    %1114 = vmatpush.msra.mxu0 0.0
    %1115 = vmatpush.msra.mxu0 0.0
    %1116 = vmatpush.msra.mxu0 0.0
    %1117 = vmatpush.msra.mxu0 0.0
    %1118 = vmatpush.msra.mxu0 0.0
    %1119 = vmatpush.msra.mxu0 0.0
    %1120 = vmatpush.msra.mxu0 0.0
    %1121 = vmatpush.msra.mxu0 0.0
    %1122 = vmatpush.msra.mxu0 0.0
    %1123 = vmatpush.msra.mxu0 0.0
    %1124 = vmatpush.msra.mxu0 0.0
    %1125 = vmatpush.msra.mxu0 0.0
    %1126 = vmatpush.msra.mxu0 0.0
    %v1127 = vand.u32 %v886, 4294901760
    %1128 = vmatpush.msra.mxu0 %v1127
    %v1129 = vand.u32 %v884, 4294901760
    %1130 = vmatpush.msra.mxu0 %v1129
    %v1131 = vand.u32 %v1108, 4294901760
    %v1132 = vsub.f32 %v1108, %v1131
    %v1133 = vand.u32 %v1132, 4294901760
    %v1134 = vsub.f32 %v1132, %v1133
    %v1135 = vand.u32 %v1134, 4294901760
    %1136 = vmatmul.f32.gmra.mxu0 %v1135
    %v1137 = vpop.f32.mrf.mxu0
    %v1138 = vadd.f32 0.0, %v1137
    %v1139 = vand.u32 %v1111, 4294901760
    %v1140 = vsub.f32 %v1111, %v1139
    %v1141 = vand.u32 %v1140, 4294901760
    %v1142 = vsub.f32 %v1140, %v1141
    %v1143 = vand.u32 %v1142, 4294901760
    %1144 = vmatmul.f32.gmra.mxu0 %v1143
    %v1145 = vpop.f32.mrf.mxu0
    %v1146 = vadd.f32 0.0, %v1145
    %1147 = vdwg.mxu0
    %1148 = vmatpush.msra.mxu0 0.0
    %1149 = vmatpush.msra.mxu0 0.0
    %1150 = vmatpush.msra.mxu0 0.0
    %1151 = vmatpush.msra.mxu0 0.0
    %1152 = vmatpush.msra.mxu0 0.0
    %1153 = vmatpush.msra.mxu0 0.0
    %1154 = vmatpush.msra.mxu0 0.0
    %1155 = vmatpush.msra.mxu0 0.0
    %1156 = vmatpush.msra.mxu0 0.0
    %1157 = vmatpush.msra.mxu0 0.0
    %1158 = vmatpush.msra.mxu0 0.0
    %1159 = vmatpush.msra.mxu0 0.0
    %1160 = vmatpush.msra.mxu0 0.0
    %1161 = vmatpush.msra.mxu0 0.0
    %v1162 = vand.u32 %v886, 4294901760
    %v1163 = vsub.f32 %v886, %v1162
    %v1164 = vand.u32 %v1163, 4294901760
    %v1165 = vsub.f32 %v1163, %v1164
    %v1166 = vand.u32 %v1165, 4294901760
    %1167 = vmatpush.msra.mxu0 %v1166
    %v1168 = vand.u32 %v884, 4294901760
    %v1169 = vsub.f32 %v884, %v1168
    %v1170 = vand.u32 %v1169, 4294901760
    %v1171 = vsub.f32 %v1169, %v1170
    %v1172 = vand.u32 %v1171, 4294901760
    %1173 = vmatpush.msra.mxu0 %v1172
    %v1174 = vand.u32 %v1108, 4294901760
    %1175 = vmatmul.f32.gmra.mxu0 %v1174
    %v1176 = vpop.f32.mrf.mxu0
    %v1177 = vadd.f32 %v1138, %v1176
    %v1178 = vand.u32 %v1111, 4294901760
    %1179 = vmatmul.f32.gmra.mxu0 %v1178
    %v1180 = vpop.f32.mrf.mxu0
    %v1181 = vadd.f32 %v1146, %v1180
    %1182 = vdwg.mxu0
    %1183 = vmatpush.msra.mxu0 0.0
    %1184 = vmatpush.msra.mxu0 0.0
    %1185 = vmatpush.msra.mxu0 0.0
    %1186 = vmatpush.msra.mxu0 0.0
    %1187 = vmatpush.msra.mxu0 0.0
    %1188 = vmatpush.msra.mxu0 0.0
    %1189 = vmatpush.msra.mxu0 0.0
    %1190 = vmatpush.msra.mxu0 0.0
    %1191 = vmatpush.msra.mxu0 0.0
    %1192 = vmatpush.msra.mxu0 0.0
    %1193 = vmatpush.msra.mxu0 0.0
    %1194 = vmatpush.msra.mxu0 0.0
    %1195 = vmatpush.msra.mxu0 0.0
    %1196 = vmatpush.msra.mxu0 0.0
    %v1197 = vand.u32 %v886, 4294901760
    %v1198 = vsub.f32 %v886, %v1197
    %1199 = vmatpush.msra.mxu0 %v1198
    %v1200 = vand.u32 %v884, 4294901760
    %v1201 = vsub.f32 %v884, %v1200
    %1202 = vmatpush.msra.mxu0 %v1201
    %v1203 = vand.u32 %v1108, 4294901760
    %v1204 = vsub.f32 %v1108, %v1203
    %1205 = vmatmul.f32.gmra.mxu0 %v1204
    %v1206 = vpop.f32.mrf.mxu0
    %v1207 = vadd.f32 %v1177, %v1206
    %v1208 = vand.u32 %v1111, 4294901760
    %v1209 = vsub.f32 %v1111, %v1208
    %1210 = vmatmul.f32.gmra.mxu0 %v1209
    %v1211 = vpop.f32.mrf.mxu0
    %v1212 = vadd.f32 %v1181, %v1211
    %1213 = vdwg.mxu0
    %1214 = vmatpush.msra.mxu0 0.0
    %1215 = vmatpush.msra.mxu0 0.0
    %1216 = vmatpush.msra.mxu0 0.0
    %1217 = vmatpush.msra.mxu0 0.0
    %1218 = vmatpush.msra.mxu0 0.0
    %1219 = vmatpush.msra.mxu0 0.0
    %1220 = vmatpush.msra.mxu0 0.0
    %1221 = vmatpush.msra.mxu0 0.0
    %1222 = vmatpush.msra.mxu0 0.0
    %1223 = vmatpush.msra.mxu0 0.0
    %1224 = vmatpush.msra.mxu0 0.0
    %1225 = vmatpush.msra.mxu0 0.0
    %1226 = vmatpush.msra.mxu0 0.0
    %1227 = vmatpush.msra.mxu0 0.0
    %v1228 = vand.u32 %v886, 4294901760
    %1229 = vmatpush.msra.mxu0 %v1228
    %v1230 = vand.u32 %v884, 4294901760
    %1231 = vmatpush.msra.mxu0 %v1230
    %v1232 = vand.u32 %v1108, 4294901760
    %v1233 = vsub.f32 %v1108, %v1232
    %v1234 = vand.u32 %v1233, 4294901760
    %1235 = vmatmul.f32.gmra.mxu0 %v1234
    %v1236 = vpop.f32.mrf.mxu0
    %v1237 = vadd.f32 %v1207, %v1236
    %v1238 = vand.u32 %v1111, 4294901760
    %v1239 = vsub.f32 %v1111, %v1238
    %v1240 = vand.u32 %v1239, 4294901760
    %1241 = vmatmul.f32.gmra.mxu0 %v1240
    %v1242 = vpop.f32.mrf.mxu0
    %v1243 = vadd.f32 %v1212, %v1242
    %1244 = vdwg.mxu0
    %1245 = vmatpush.msra.mxu0 0.0
    %1246 = vmatpush.msra.mxu0 0.0
    %1247 = vmatpush.msra.mxu0 0.0
    %1248 = vmatpush.msra.mxu0 0.0
    %1249 = vmatpush.msra.mxu0 0.0
    %1250 = vmatpush.msra.mxu0 0.0
    %1251 = vmatpush.msra.mxu0 0.0
    %1252 = vmatpush.msra.mxu0 0.0
    %1253 = vmatpush.msra.mxu0 0.0
    %1254 = vmatpush.msra.mxu0 0.0
    %1255 = vmatpush.msra.mxu0 0.0
    %1256 = vmatpush.msra.mxu0 0.0
    %1257 = vmatpush.msra.mxu0 0.0
    %1258 = vmatpush.msra.mxu0 0.0
    %v1259 = vand.u32 %v886, 4294901760
    %v1260 = vsub.f32 %v886, %v1259
    %v1261 = vand.u32 %v1260, 4294901760
    %1262 = vmatpush.msra.mxu0 %v1261
    %v1263 = vand.u32 %v884, 4294901760
    %v1264 = vsub.f32 %v884, %v1263
    %v1265 = vand.u32 %v1264, 4294901760
    %1266 = vmatpush.msra.mxu0 %v1265
    %v1267 = vand.u32 %v1108, 4294901760
    %1268 = vmatmul.f32.gmra.mxu0 %v1267
    %v1269 = vpop.f32.mrf.mxu0
    %v1270 = vadd.f32 %v1237, %v1269
    %v1271 = vand.u32 %v1111, 4294901760
    %1272 = vmatmul.f32.gmra.mxu0 %v1271
    %v1273 = vpop.f32.mrf.mxu0
    %v1274 = vadd.f32 %v1243, %v1273
    %1275 = vdwg.mxu0
    %1276 = vmatpush.msra.mxu0 0.0
    %1277 = vmatpush.msra.mxu0 0.0
    %1278 = vmatpush.msra.mxu0 0.0
    %1279 = vmatpush.msra.mxu0 0.0
    %1280 = vmatpush.msra.mxu0 0.0
    %1281 = vmatpush.msra.mxu0 0.0
    %1282 = vmatpush.msra.mxu0 0.0
    %1283 = vmatpush.msra.mxu0 0.0
    %1284 = vmatpush.msra.mxu0 0.0
    %1285 = vmatpush.msra.mxu0 0.0
    %1286 = vmatpush.msra.mxu0 0.0
    %1287 = vmatpush.msra.mxu0 0.0
    %1288 = vmatpush.msra.mxu0 0.0
    %1289 = vmatpush.msra.mxu0 0.0
    %v1290 = vand.u32 %v886, 4294901760
    %1291 = vmatpush.msra.mxu0 %v1290
    %v1292 = vand.u32 %v884, 4294901760
    %1293 = vmatpush.msra.mxu0 %v1292
    %v1294 = vand.u32 %v1108, 4294901760
    %1295 = vmatmul.f32.gmra.mxu0 %v1294
    %v1296 = vpop.f32.mrf.mxu0
    %v1297 = vadd.f32 %v1270, %v1296
    %v1298 = vand.u32 %v1111, 4294901760
    %1299 = vmatmul.f32.gmra.mxu0 %v1298
    %v1300 = vpop.f32.mrf.mxu0
    %v1301 = vadd.f32 %v1274, %v1300
    %1302 = vdwg.mxu0
    %v1303 = vmul.f32 %v1297, %v1103
    %v1304 = vmul.f32 %v1301, %v1104
    %1305 = vrot.lane.b32.xlu0 %v18, 104
    %v1306 = vpop.permute.xlu0 %1305
    %1307 = vrot.lane.b32.xlu0 %v19, 104
    %v1308 = vpop.permute.xlu0 %1307
    %v1309 = vsel %vm41, %v1306, 0
    %v1311 = vsel %vm41, %v1308, 0
    %1313 = vmatpush.xpose.msra.mxu0 0.0
    %1314 = vmatpush.xpose.msra.mxu0 0.0
    %1315 = vmatpush.xpose.msra.mxu0 0.0
    %1316 = vmatpush.xpose.msra.mxu0 0.0
    %1317 = vmatpush.xpose.msra.mxu0 0.0
    %1318 = vmatpush.xpose.msra.mxu0 0.0
    %1319 = vmatpush.xpose.msra.mxu0 0.0
    %1320 = vmatpush.xpose.msra.mxu0 0.0
    %1321 = vmatpush.xpose.msra.mxu0 0.0
    %1322 = vmatpush.xpose.msra.mxu0 0.0
    %1323 = vmatpush.xpose.msra.mxu0 0.0
    %1324 = vmatpush.xpose.msra.mxu0 0.0
    %1325 = vmatpush.xpose.msra.mxu0 0.0
    %1326 = vmatpush.xpose.msra.mxu0 0.0
    %v1327 = vand.u32 %v1311, 4294901760
    %1328 = vmatpush.xpose.msra.mxu0 %v1327
    %v1329 = vand.u32 %v1309, 4294901760
    %1330 = vmatpush.xpose.msra.mxu0 %v1329
    %v1331 = vand.u32 %v1309, 4294901760
    %v1332 = vsub.f32 %v1309, %v1331
    %v1333 = vand.u32 %v1332, 4294901760
    %v1334 = vsub.f32 %v1332, %v1333
    %v1335 = vand.u32 %v1334, 4294901760
    %1336 = vmatmul.f32.gmra.mxu0 %v1335
    %v1337 = vpop.f32.mrf.mxu0
    %v1338 = vadd.f32 0.0, %v1337
    %v1339 = vand.u32 %v1311, 4294901760
    %v1340 = vsub.f32 %v1311, %v1339
    %v1341 = vand.u32 %v1340, 4294901760
    %v1342 = vsub.f32 %v1340, %v1341
    %v1343 = vand.u32 %v1342, 4294901760
    %1344 = vmatmul.f32.gmra.mxu0 %v1343
    %v1345 = vpop.f32.mrf.mxu0
    %v1346 = vadd.f32 0.0, %v1345
    %1347 = vdwg.mxu0
    %1348 = vmatpush.xpose.msra.mxu0 0.0
    %1349 = vmatpush.xpose.msra.mxu0 0.0
    %1350 = vmatpush.xpose.msra.mxu0 0.0
    %1351 = vmatpush.xpose.msra.mxu0 0.0
    %1352 = vmatpush.xpose.msra.mxu0 0.0
    %1353 = vmatpush.xpose.msra.mxu0 0.0
    %1354 = vmatpush.xpose.msra.mxu0 0.0
    %1355 = vmatpush.xpose.msra.mxu0 0.0
    %1356 = vmatpush.xpose.msra.mxu0 0.0
    %1357 = vmatpush.xpose.msra.mxu0 0.0
    %1358 = vmatpush.xpose.msra.mxu0 0.0
    %1359 = vmatpush.xpose.msra.mxu0 0.0
    %1360 = vmatpush.xpose.msra.mxu0 0.0
    %1361 = vmatpush.xpose.msra.mxu0 0.0
    %v1362 = vand.u32 %v1311, 4294901760
    %v1363 = vsub.f32 %v1311, %v1362
    %v1364 = vand.u32 %v1363, 4294901760
    %v1365 = vsub.f32 %v1363, %v1364
    %v1366 = vand.u32 %v1365, 4294901760
    %1367 = vmatpush.xpose.msra.mxu0 %v1366
    %v1368 = vand.u32 %v1309, 4294901760
    %v1369 = vsub.f32 %v1309, %v1368
    %v1370 = vand.u32 %v1369, 4294901760
    %v1371 = vsub.f32 %v1369, %v1370
    %v1372 = vand.u32 %v1371, 4294901760
    %1373 = vmatpush.xpose.msra.mxu0 %v1372
    %v1374 = vand.u32 %v1309, 4294901760
    %1375 = vmatmul.f32.gmra.mxu0 %v1374
    %v1376 = vpop.f32.mrf.mxu0
    %v1377 = vadd.f32 %v1338, %v1376
    %v1378 = vand.u32 %v1311, 4294901760
    %1379 = vmatmul.f32.gmra.mxu0 %v1378
    %v1380 = vpop.f32.mrf.mxu0
    %v1381 = vadd.f32 %v1346, %v1380
    %1382 = vdwg.mxu0
    %1383 = vmatpush.xpose.msra.mxu0 0.0
    %1384 = vmatpush.xpose.msra.mxu0 0.0
    %1385 = vmatpush.xpose.msra.mxu0 0.0
    %1386 = vmatpush.xpose.msra.mxu0 0.0
    %1387 = vmatpush.xpose.msra.mxu0 0.0
    %1388 = vmatpush.xpose.msra.mxu0 0.0
    %1389 = vmatpush.xpose.msra.mxu0 0.0
    %1390 = vmatpush.xpose.msra.mxu0 0.0
    %1391 = vmatpush.xpose.msra.mxu0 0.0
    %1392 = vmatpush.xpose.msra.mxu0 0.0
    %1393 = vmatpush.xpose.msra.mxu0 0.0
    %1394 = vmatpush.xpose.msra.mxu0 0.0
    %1395 = vmatpush.xpose.msra.mxu0 0.0
    %1396 = vmatpush.xpose.msra.mxu0 0.0
    %v1397 = vand.u32 %v1311, 4294901760
    %v1398 = vsub.f32 %v1311, %v1397
    %1399 = vmatpush.xpose.msra.mxu0 %v1398
    %v1400 = vand.u32 %v1309, 4294901760
    %v1401 = vsub.f32 %v1309, %v1400
    %1402 = vmatpush.xpose.msra.mxu0 %v1401
    %v1403 = vand.u32 %v1309, 4294901760
    %v1404 = vsub.f32 %v1309, %v1403
    %1405 = vmatmul.f32.gmra.mxu0 %v1404
    %v1406 = vpop.f32.mrf.mxu0
    %v1407 = vadd.f32 %v1377, %v1406
    %v1408 = vand.u32 %v1311, 4294901760
    %v1409 = vsub.f32 %v1311, %v1408
    %1410 = vmatmul.f32.gmra.mxu0 %v1409
    %v1411 = vpop.f32.mrf.mxu0
    %v1412 = vadd.f32 %v1381, %v1411
    %1413 = vdwg.mxu0
    %1414 = vmatpush.xpose.msra.mxu0 0.0
    %1415 = vmatpush.xpose.msra.mxu0 0.0
    %1416 = vmatpush.xpose.msra.mxu0 0.0
    %1417 = vmatpush.xpose.msra.mxu0 0.0
    %1418 = vmatpush.xpose.msra.mxu0 0.0
    %1419 = vmatpush.xpose.msra.mxu0 0.0
    %1420 = vmatpush.xpose.msra.mxu0 0.0
    %1421 = vmatpush.xpose.msra.mxu0 0.0
    %1422 = vmatpush.xpose.msra.mxu0 0.0
    %1423 = vmatpush.xpose.msra.mxu0 0.0
    %1424 = vmatpush.xpose.msra.mxu0 0.0
    %1425 = vmatpush.xpose.msra.mxu0 0.0
    %1426 = vmatpush.xpose.msra.mxu0 0.0
    %1427 = vmatpush.xpose.msra.mxu0 0.0
    %v1428 = vand.u32 %v1311, 4294901760
    %1429 = vmatpush.xpose.msra.mxu0 %v1428
    %v1430 = vand.u32 %v1309, 4294901760
    %1431 = vmatpush.xpose.msra.mxu0 %v1430
    %v1432 = vand.u32 %v1309, 4294901760
    %v1433 = vsub.f32 %v1309, %v1432
    %v1434 = vand.u32 %v1433, 4294901760
    %1435 = vmatmul.f32.gmra.mxu0 %v1434
    %v1436 = vpop.f32.mrf.mxu0
    %v1437 = vadd.f32 %v1407, %v1436
    %v1438 = vand.u32 %v1311, 4294901760
    %v1439 = vsub.f32 %v1311, %v1438
    %v1440 = vand.u32 %v1439, 4294901760
    %1441 = vmatmul.f32.gmra.mxu0 %v1440
    %v1442 = vpop.f32.mrf.mxu0
    %v1443 = vadd.f32 %v1412, %v1442
    %1444 = vdwg.mxu0
    %1445 = vmatpush.xpose.msra.mxu0 0.0
    %1446 = vmatpush.xpose.msra.mxu0 0.0
    %1447 = vmatpush.xpose.msra.mxu0 0.0
    %1448 = vmatpush.xpose.msra.mxu0 0.0
    %1449 = vmatpush.xpose.msra.mxu0 0.0
    %1450 = vmatpush.xpose.msra.mxu0 0.0
    %1451 = vmatpush.xpose.msra.mxu0 0.0
    %1452 = vmatpush.xpose.msra.mxu0 0.0
    %1453 = vmatpush.xpose.msra.mxu0 0.0
    %1454 = vmatpush.xpose.msra.mxu0 0.0
    %1455 = vmatpush.xpose.msra.mxu0 0.0
    %1456 = vmatpush.xpose.msra.mxu0 0.0
    %1457 = vmatpush.xpose.msra.mxu0 0.0
    %1458 = vmatpush.xpose.msra.mxu0 0.0
    %v1459 = vand.u32 %v1311, 4294901760
    %v1460 = vsub.f32 %v1311, %v1459
    %v1461 = vand.u32 %v1460, 4294901760
    %1462 = vmatpush.xpose.msra.mxu0 %v1461
    %v1463 = vand.u32 %v1309, 4294901760
    %v1464 = vsub.f32 %v1309, %v1463
    %v1465 = vand.u32 %v1464, 4294901760
    %1466 = vmatpush.xpose.msra.mxu0 %v1465
    %v1467 = vand.u32 %v1309, 4294901760
    %1468 = vmatmul.f32.gmra.mxu0 %v1467
    %v1469 = vpop.f32.mrf.mxu0
    %v1470 = vadd.f32 %v1437, %v1469
    %v1471 = vand.u32 %v1311, 4294901760
    %1472 = vmatmul.f32.gmra.mxu0 %v1471
    %v1473 = vpop.f32.mrf.mxu0
    %v1474 = vadd.f32 %v1443, %v1473
    %1475 = vdwg.mxu0
    %1476 = vmatpush.xpose.msra.mxu0 0.0
    %1477 = vmatpush.xpose.msra.mxu0 0.0
    %1478 = vmatpush.xpose.msra.mxu0 0.0
    %1479 = vmatpush.xpose.msra.mxu0 0.0
    %1480 = vmatpush.xpose.msra.mxu0 0.0
    %1481 = vmatpush.xpose.msra.mxu0 0.0
    %1482 = vmatpush.xpose.msra.mxu0 0.0
    %1483 = vmatpush.xpose.msra.mxu0 0.0
    %1484 = vmatpush.xpose.msra.mxu0 0.0
    %1485 = vmatpush.xpose.msra.mxu0 0.0
    %1486 = vmatpush.xpose.msra.mxu0 0.0
    %1487 = vmatpush.xpose.msra.mxu0 0.0
    %1488 = vmatpush.xpose.msra.mxu0 0.0
    %1489 = vmatpush.xpose.msra.mxu0 0.0
    %v1490 = vand.u32 %v1311, 4294901760
    %1491 = vmatpush.xpose.msra.mxu0 %v1490
    %v1492 = vand.u32 %v1309, 4294901760
    %1493 = vmatpush.xpose.msra.mxu0 %v1492
    %v1494 = vand.u32 %v1309, 4294901760
    %1495 = vmatmul.f32.gmra.mxu0 %v1494
    %v1496 = vpop.f32.mrf.mxu0
    %v1497 = vadd.f32 %v1470, %v1496
    %v1498 = vand.u32 %v1311, 4294901760
    %1499 = vmatmul.f32.gmra.mxu0 %v1498
    %v1500 = vpop.f32.mrf.mxu0
    %v1501 = vadd.f32 %v1474, %v1500
    %1502 = vdwg.mxu0
    %v1503 = vmul.f32 %v1497, 0.17677669
    %v1504 = vmul.f32 %v1501, 0.17677669
    %v1505 = vadd.f32 %v1503, %v20
    %v1506 = vadd.f32 %v1504, %v21
    %v1507 = vsel %vm242, %v1505, -inf
    %1508 = vmax.xlane.f32.xlu0 %v1507
    %v1509 = vpop.xlane.xlu0 %1508
    %v1510 = vsel %vm242, %v1506, -inf
    %1511 = vmax.xlane.f32.xlu0 %v1510
    %v1512 = vpop.xlane.xlu0 %1511
    %v1513 = vsub.f32 %v1505, %v1509
    %v1514 = vsub.f32 %v1506, %v1512
    %v1515 = vmul.f32 %v1513, 1.442695
    %v1516 = vpow.pop %v1515
    %v1517 = vmul.f32 %v1514, 1.442695
    %v1518 = vpow.pop %v1517
    %v1519 = vsel %vm242, %v1516, 0.0
    %1520 = vadd.xlane.f32.xlu0 %v1519
    %v1521 = vpop.xlane.xlu0 %1520
    %v1522 = vsel %vm242, %v1518, 0.0
    %1523 = vadd.xlane.f32.xlu0 %v1522
    %v1524 = vpop.xlane.xlu0 %1523
    %v1525 = vrcp.pop %v1521
    %v1526 = vrcp.pop %v1524
    %v1530 = vsel %vm242, %v1516, 0
    %v1533 = vsel %vm242, %v1518, 0
    %1535 = vmatpush.msra.mxu0 0.0
    %1536 = vmatpush.msra.mxu0 0.0
    %1537 = vmatpush.msra.mxu0 0.0
    %1538 = vmatpush.msra.mxu0 0.0
    %1539 = vmatpush.msra.mxu0 0.0
    %1540 = vmatpush.msra.mxu0 0.0
    %1541 = vmatpush.msra.mxu0 0.0
    %1542 = vmatpush.msra.mxu0 0.0
    %1543 = vmatpush.msra.mxu0 0.0
    %1544 = vmatpush.msra.mxu0 0.0
    %1545 = vmatpush.msra.mxu0 0.0
    %1546 = vmatpush.msra.mxu0 0.0
    %1547 = vmatpush.msra.mxu0 0.0
    %1548 = vmatpush.msra.mxu0 0.0
    %v1549 = vand.u32 %v1308, 4294901760
    %1550 = vmatpush.msra.mxu0 %v1549
    %v1551 = vand.u32 %v1306, 4294901760
    %1552 = vmatpush.msra.mxu0 %v1551
    %v1553 = vand.u32 %v1530, 4294901760
    %v1554 = vsub.f32 %v1530, %v1553
    %v1555 = vand.u32 %v1554, 4294901760
    %v1556 = vsub.f32 %v1554, %v1555
    %v1557 = vand.u32 %v1556, 4294901760
    %1558 = vmatmul.f32.gmra.mxu0 %v1557
    %v1559 = vpop.f32.mrf.mxu0
    %v1560 = vadd.f32 0.0, %v1559
    %v1561 = vand.u32 %v1533, 4294901760
    %v1562 = vsub.f32 %v1533, %v1561
    %v1563 = vand.u32 %v1562, 4294901760
    %v1564 = vsub.f32 %v1562, %v1563
    %v1565 = vand.u32 %v1564, 4294901760
    %1566 = vmatmul.f32.gmra.mxu0 %v1565
    %v1567 = vpop.f32.mrf.mxu0
    %v1568 = vadd.f32 0.0, %v1567
    %1569 = vdwg.mxu0
    %1570 = vmatpush.msra.mxu0 0.0
    %1571 = vmatpush.msra.mxu0 0.0
    %1572 = vmatpush.msra.mxu0 0.0
    %1573 = vmatpush.msra.mxu0 0.0
    %1574 = vmatpush.msra.mxu0 0.0
    %1575 = vmatpush.msra.mxu0 0.0
    %1576 = vmatpush.msra.mxu0 0.0
    %1577 = vmatpush.msra.mxu0 0.0
    %1578 = vmatpush.msra.mxu0 0.0
    %1579 = vmatpush.msra.mxu0 0.0
    %1580 = vmatpush.msra.mxu0 0.0
    %1581 = vmatpush.msra.mxu0 0.0
    %1582 = vmatpush.msra.mxu0 0.0
    %1583 = vmatpush.msra.mxu0 0.0
    %v1584 = vand.u32 %v1308, 4294901760
    %v1585 = vsub.f32 %v1308, %v1584
    %v1586 = vand.u32 %v1585, 4294901760
    %v1587 = vsub.f32 %v1585, %v1586
    %v1588 = vand.u32 %v1587, 4294901760
    %1589 = vmatpush.msra.mxu0 %v1588
    %v1590 = vand.u32 %v1306, 4294901760
    %v1591 = vsub.f32 %v1306, %v1590
    %v1592 = vand.u32 %v1591, 4294901760
    %v1593 = vsub.f32 %v1591, %v1592
    %v1594 = vand.u32 %v1593, 4294901760
    %1595 = vmatpush.msra.mxu0 %v1594
    %v1596 = vand.u32 %v1530, 4294901760
    %1597 = vmatmul.f32.gmra.mxu0 %v1596
    %v1598 = vpop.f32.mrf.mxu0
    %v1599 = vadd.f32 %v1560, %v1598
    %v1600 = vand.u32 %v1533, 4294901760
    %1601 = vmatmul.f32.gmra.mxu0 %v1600
    %v1602 = vpop.f32.mrf.mxu0
    %v1603 = vadd.f32 %v1568, %v1602
    %1604 = vdwg.mxu0
    %1605 = vmatpush.msra.mxu0 0.0
    %1606 = vmatpush.msra.mxu0 0.0
    %1607 = vmatpush.msra.mxu0 0.0
    %1608 = vmatpush.msra.mxu0 0.0
    %1609 = vmatpush.msra.mxu0 0.0
    %1610 = vmatpush.msra.mxu0 0.0
    %1611 = vmatpush.msra.mxu0 0.0
    %1612 = vmatpush.msra.mxu0 0.0
    %1613 = vmatpush.msra.mxu0 0.0
    %1614 = vmatpush.msra.mxu0 0.0
    %1615 = vmatpush.msra.mxu0 0.0
    %1616 = vmatpush.msra.mxu0 0.0
    %1617 = vmatpush.msra.mxu0 0.0
    %1618 = vmatpush.msra.mxu0 0.0
    %v1619 = vand.u32 %v1308, 4294901760
    %v1620 = vsub.f32 %v1308, %v1619
    %1621 = vmatpush.msra.mxu0 %v1620
    %v1622 = vand.u32 %v1306, 4294901760
    %v1623 = vsub.f32 %v1306, %v1622
    %1624 = vmatpush.msra.mxu0 %v1623
    %v1625 = vand.u32 %v1530, 4294901760
    %v1626 = vsub.f32 %v1530, %v1625
    %1627 = vmatmul.f32.gmra.mxu0 %v1626
    %v1628 = vpop.f32.mrf.mxu0
    %v1629 = vadd.f32 %v1599, %v1628
    %v1630 = vand.u32 %v1533, 4294901760
    %v1631 = vsub.f32 %v1533, %v1630
    %1632 = vmatmul.f32.gmra.mxu0 %v1631
    %v1633 = vpop.f32.mrf.mxu0
    %v1634 = vadd.f32 %v1603, %v1633
    %1635 = vdwg.mxu0
    %1636 = vmatpush.msra.mxu0 0.0
    %1637 = vmatpush.msra.mxu0 0.0
    %1638 = vmatpush.msra.mxu0 0.0
    %1639 = vmatpush.msra.mxu0 0.0
    %1640 = vmatpush.msra.mxu0 0.0
    %1641 = vmatpush.msra.mxu0 0.0
    %1642 = vmatpush.msra.mxu0 0.0
    %1643 = vmatpush.msra.mxu0 0.0
    %1644 = vmatpush.msra.mxu0 0.0
    %1645 = vmatpush.msra.mxu0 0.0
    %1646 = vmatpush.msra.mxu0 0.0
    %1647 = vmatpush.msra.mxu0 0.0
    %1648 = vmatpush.msra.mxu0 0.0
    %1649 = vmatpush.msra.mxu0 0.0
    %v1650 = vand.u32 %v1308, 4294901760
    %1651 = vmatpush.msra.mxu0 %v1650
    %v1652 = vand.u32 %v1306, 4294901760
    %1653 = vmatpush.msra.mxu0 %v1652
    %v1654 = vand.u32 %v1530, 4294901760
    %v1655 = vsub.f32 %v1530, %v1654
    %v1656 = vand.u32 %v1655, 4294901760
    %1657 = vmatmul.f32.gmra.mxu0 %v1656
    %v1658 = vpop.f32.mrf.mxu0
    %v1659 = vadd.f32 %v1629, %v1658
    %v1660 = vand.u32 %v1533, 4294901760
    %v1661 = vsub.f32 %v1533, %v1660
    %v1662 = vand.u32 %v1661, 4294901760
    %1663 = vmatmul.f32.gmra.mxu0 %v1662
    %v1664 = vpop.f32.mrf.mxu0
    %v1665 = vadd.f32 %v1634, %v1664
    %1666 = vdwg.mxu0
    %1667 = vmatpush.msra.mxu0 0.0
    %1668 = vmatpush.msra.mxu0 0.0
    %1669 = vmatpush.msra.mxu0 0.0
    %1670 = vmatpush.msra.mxu0 0.0
    %1671 = vmatpush.msra.mxu0 0.0
    %1672 = vmatpush.msra.mxu0 0.0
    %1673 = vmatpush.msra.mxu0 0.0
    %1674 = vmatpush.msra.mxu0 0.0
    %1675 = vmatpush.msra.mxu0 0.0
    %1676 = vmatpush.msra.mxu0 0.0
    %1677 = vmatpush.msra.mxu0 0.0
    %1678 = vmatpush.msra.mxu0 0.0
    %1679 = vmatpush.msra.mxu0 0.0
    %1680 = vmatpush.msra.mxu0 0.0
    %v1681 = vand.u32 %v1308, 4294901760
    %v1682 = vsub.f32 %v1308, %v1681
    %v1683 = vand.u32 %v1682, 4294901760
    %1684 = vmatpush.msra.mxu0 %v1683
    %v1685 = vand.u32 %v1306, 4294901760
    %v1686 = vsub.f32 %v1306, %v1685
    %v1687 = vand.u32 %v1686, 4294901760
    %1688 = vmatpush.msra.mxu0 %v1687
    %v1689 = vand.u32 %v1530, 4294901760
    %1690 = vmatmul.f32.gmra.mxu0 %v1689
    %v1691 = vpop.f32.mrf.mxu0
    %v1692 = vadd.f32 %v1659, %v1691
    %v1693 = vand.u32 %v1533, 4294901760
    %1694 = vmatmul.f32.gmra.mxu0 %v1693
    %v1695 = vpop.f32.mrf.mxu0
    %v1696 = vadd.f32 %v1665, %v1695
    %1697 = vdwg.mxu0
    %1698 = vmatpush.msra.mxu0 0.0
    %1699 = vmatpush.msra.mxu0 0.0
    %1700 = vmatpush.msra.mxu0 0.0
    %1701 = vmatpush.msra.mxu0 0.0
    %1702 = vmatpush.msra.mxu0 0.0
    %1703 = vmatpush.msra.mxu0 0.0
    %1704 = vmatpush.msra.mxu0 0.0
    %1705 = vmatpush.msra.mxu0 0.0
    %1706 = vmatpush.msra.mxu0 0.0
    %1707 = vmatpush.msra.mxu0 0.0
    %1708 = vmatpush.msra.mxu0 0.0
    %1709 = vmatpush.msra.mxu0 0.0
    %1710 = vmatpush.msra.mxu0 0.0
    %1711 = vmatpush.msra.mxu0 0.0
    %v1712 = vand.u32 %v1308, 4294901760
    %1713 = vmatpush.msra.mxu0 %v1712
    %v1714 = vand.u32 %v1306, 4294901760
    %1715 = vmatpush.msra.mxu0 %v1714
    %v1716 = vand.u32 %v1530, 4294901760
    %1717 = vmatmul.f32.gmra.mxu0 %v1716
    %v1718 = vpop.f32.mrf.mxu0
    %v1719 = vadd.f32 %v1692, %v1718
    %v1720 = vand.u32 %v1533, 4294901760
    %1721 = vmatmul.f32.gmra.mxu0 %v1720
    %v1722 = vpop.f32.mrf.mxu0
    %v1723 = vadd.f32 %v1696, %v1722
    %1724 = vdwg.mxu0
    %v1725 = vmul.f32 %v1719, %v1525
    %v1726 = vmul.f32 %v1723, %v1526
    %1729 = vrot.lane.b32.xlu0 %v881, 8
    %v1730 = vpop.permute.xlu0 %1729
    %1731 = vrot.lane.b32.xlu0 %v882, 8
    %v1732 = vpop.permute.xlu0 %1731
    %1737 = vrot.lane.b32.xlu0 %v1303, 16
    %v1738 = vpop.permute.xlu0 %1737
    %1739 = vrot.lane.b32.xlu0 %v1304, 16
    %v1740 = vpop.permute.xlu0 %1739
    %1745 = vrot.lane.b32.xlu0 %v1725, 24
    %v1746 = vpop.permute.xlu0 %1745
    %1747 = vrot.lane.b32.xlu0 %v1726, 24
    %v1748 = vpop.permute.xlu0 %1747
    %v1751 = vsel %vm41, %v459, %v1730
    %v1752 = vsel %vm41, %v460, %v1732
    %v1753 = vsel %vm242, %v1751, %v1738
    %v1754 = vsel %vm242, %v1752, %v1740
    %vm1755 = vcmask 195584
    %v1756 = vsel %vm1755, %v1753, %v1746
    %v1757 = vsel %vm1755, %v1754, %v1748
    %v1758 = vperm.slane %v34, 0
    %vm1759 = vcmask 261120
    %v1761 = vsel %vm1759, %v1756, 0
    %v1764 = vsel %vm1759, %v1757, 0
    %1766 = vmatpush.msra.mxu0 0.0
    %1767 = vmatpush.msra.mxu0 0.0
    %1768 = vmatpush.msra.mxu0 0.0
    %1769 = vmatpush.msra.mxu0 0.0
    %1770 = vmatpush.msra.mxu0 0.0
    %1771 = vmatpush.msra.mxu0 0.0
    %1772 = vmatpush.msra.mxu0 0.0
    %1773 = vmatpush.msra.mxu0 0.0
    %1774 = vmatpush.msra.mxu0 0.0
    %1775 = vmatpush.msra.mxu0 0.0
    %1776 = vmatpush.msra.mxu0 0.0
    %1777 = vmatpush.msra.mxu0 0.0
    %v1778 = vand.u32 %v33, 4294901760
    %1779 = vmatpush.msra.mxu0 %v1778
    %v1780 = vand.u32 %v32, 4294901760
    %1781 = vmatpush.msra.mxu0 %v1780
    %v1782 = vand.u32 %v31, 4294901760
    %1783 = vmatpush.msra.mxu0 %v1782
    %v1784 = vand.u32 %v30, 4294901760
    %1785 = vmatpush.msra.mxu0 %v1784
    %v1786 = vand.u32 %v1761, 4294901760
    %v1787 = vsub.f32 %v1761, %v1786
    %v1788 = vand.u32 %v1787, 4294901760
    %v1789 = vsub.f32 %v1787, %v1788
    %v1790 = vand.u32 %v1789, 4294901760
    %1791 = vmatmul.f32.gmra.mxu0 %v1790
    %v1792 = vpop.f32.mrf.mxu0
    %v1793 = vadd.f32 %v1758, %v1792
    %v1794 = vand.u32 %v1764, 4294901760
    %v1795 = vsub.f32 %v1764, %v1794
    %v1796 = vand.u32 %v1795, 4294901760
    %v1797 = vsub.f32 %v1795, %v1796
    %v1798 = vand.u32 %v1797, 4294901760
    %1799 = vmatmul.f32.gmra.mxu0 %v1798
    %v1800 = vpop.f32.mrf.mxu0
    %v1801 = vadd.f32 %v1758, %v1800
    %1802 = vdwg.mxu0
    %1803 = vmatpush.msra.mxu0 0.0
    %1804 = vmatpush.msra.mxu0 0.0
    %1805 = vmatpush.msra.mxu0 0.0
    %1806 = vmatpush.msra.mxu0 0.0
    %1807 = vmatpush.msra.mxu0 0.0
    %1808 = vmatpush.msra.mxu0 0.0
    %1809 = vmatpush.msra.mxu0 0.0
    %1810 = vmatpush.msra.mxu0 0.0
    %1811 = vmatpush.msra.mxu0 0.0
    %1812 = vmatpush.msra.mxu0 0.0
    %1813 = vmatpush.msra.mxu0 0.0
    %1814 = vmatpush.msra.mxu0 0.0
    %v1815 = vand.u32 %v33, 4294901760
    %v1816 = vsub.f32 %v33, %v1815
    %v1817 = vand.u32 %v1816, 4294901760
    %v1818 = vsub.f32 %v1816, %v1817
    %v1819 = vand.u32 %v1818, 4294901760
    %1820 = vmatpush.msra.mxu0 %v1819
    %v1821 = vand.u32 %v32, 4294901760
    %v1822 = vsub.f32 %v32, %v1821
    %v1823 = vand.u32 %v1822, 4294901760
    %v1824 = vsub.f32 %v1822, %v1823
    %v1825 = vand.u32 %v1824, 4294901760
    %1826 = vmatpush.msra.mxu0 %v1825
    %v1827 = vand.u32 %v31, 4294901760
    %v1828 = vsub.f32 %v31, %v1827
    %v1829 = vand.u32 %v1828, 4294901760
    %v1830 = vsub.f32 %v1828, %v1829
    %v1831 = vand.u32 %v1830, 4294901760
    %1832 = vmatpush.msra.mxu0 %v1831
    %v1833 = vand.u32 %v30, 4294901760
    %v1834 = vsub.f32 %v30, %v1833
    %v1835 = vand.u32 %v1834, 4294901760
    %v1836 = vsub.f32 %v1834, %v1835
    %v1837 = vand.u32 %v1836, 4294901760
    %1838 = vmatpush.msra.mxu0 %v1837
    %v1839 = vand.u32 %v1761, 4294901760
    %1840 = vmatmul.f32.gmra.mxu0 %v1839
    %v1841 = vpop.f32.mrf.mxu0
    %v1842 = vadd.f32 %v1793, %v1841
    %v1843 = vand.u32 %v1764, 4294901760
    %1844 = vmatmul.f32.gmra.mxu0 %v1843
    %v1845 = vpop.f32.mrf.mxu0
    %v1846 = vadd.f32 %v1801, %v1845
    %1847 = vdwg.mxu0
    %1848 = vmatpush.msra.mxu0 0.0
    %1849 = vmatpush.msra.mxu0 0.0
    %1850 = vmatpush.msra.mxu0 0.0
    %1851 = vmatpush.msra.mxu0 0.0
    %1852 = vmatpush.msra.mxu0 0.0
    %1853 = vmatpush.msra.mxu0 0.0
    %1854 = vmatpush.msra.mxu0 0.0
    %1855 = vmatpush.msra.mxu0 0.0
    %1856 = vmatpush.msra.mxu0 0.0
    %1857 = vmatpush.msra.mxu0 0.0
    %1858 = vmatpush.msra.mxu0 0.0
    %1859 = vmatpush.msra.mxu0 0.0
    %v1860 = vand.u32 %v33, 4294901760
    %v1861 = vsub.f32 %v33, %v1860
    %1862 = vmatpush.msra.mxu0 %v1861
    %v1863 = vand.u32 %v32, 4294901760
    %v1864 = vsub.f32 %v32, %v1863
    %1865 = vmatpush.msra.mxu0 %v1864
    %v1866 = vand.u32 %v31, 4294901760
    %v1867 = vsub.f32 %v31, %v1866
    %1868 = vmatpush.msra.mxu0 %v1867
    %v1869 = vand.u32 %v30, 4294901760
    %v1870 = vsub.f32 %v30, %v1869
    %1871 = vmatpush.msra.mxu0 %v1870
    %v1872 = vand.u32 %v1761, 4294901760
    %v1873 = vsub.f32 %v1761, %v1872
    %1874 = vmatmul.f32.gmra.mxu0 %v1873
    %v1875 = vpop.f32.mrf.mxu0
    %v1876 = vadd.f32 %v1842, %v1875
    %v1877 = vand.u32 %v1764, 4294901760
    %v1878 = vsub.f32 %v1764, %v1877
    %1879 = vmatmul.f32.gmra.mxu0 %v1878
    %v1880 = vpop.f32.mrf.mxu0
    %v1881 = vadd.f32 %v1846, %v1880
    %1882 = vdwg.mxu0
    %1883 = vmatpush.msra.mxu0 0.0
    %1884 = vmatpush.msra.mxu0 0.0
    %1885 = vmatpush.msra.mxu0 0.0
    %1886 = vmatpush.msra.mxu0 0.0
    %1887 = vmatpush.msra.mxu0 0.0
    %1888 = vmatpush.msra.mxu0 0.0
    %1889 = vmatpush.msra.mxu0 0.0
    %1890 = vmatpush.msra.mxu0 0.0
    %1891 = vmatpush.msra.mxu0 0.0
    %1892 = vmatpush.msra.mxu0 0.0
    %1893 = vmatpush.msra.mxu0 0.0
    %1894 = vmatpush.msra.mxu0 0.0
    %v1895 = vand.u32 %v33, 4294901760
    %1896 = vmatpush.msra.mxu0 %v1895
    %v1897 = vand.u32 %v32, 4294901760
    %1898 = vmatpush.msra.mxu0 %v1897
    %v1899 = vand.u32 %v31, 4294901760
    %1900 = vmatpush.msra.mxu0 %v1899
    %v1901 = vand.u32 %v30, 4294901760
    %1902 = vmatpush.msra.mxu0 %v1901
    %v1903 = vand.u32 %v1761, 4294901760
    %v1904 = vsub.f32 %v1761, %v1903
    %v1905 = vand.u32 %v1904, 4294901760
    %1906 = vmatmul.f32.gmra.mxu0 %v1905
    %v1907 = vpop.f32.mrf.mxu0
    %v1908 = vadd.f32 %v1876, %v1907
    %v1909 = vand.u32 %v1764, 4294901760
    %v1910 = vsub.f32 %v1764, %v1909
    %v1911 = vand.u32 %v1910, 4294901760
    %1912 = vmatmul.f32.gmra.mxu0 %v1911
    %v1913 = vpop.f32.mrf.mxu0
    %v1914 = vadd.f32 %v1881, %v1913
    %1915 = vdwg.mxu0
    %1916 = vmatpush.msra.mxu0 0.0
    %1917 = vmatpush.msra.mxu0 0.0
    %1918 = vmatpush.msra.mxu0 0.0
    %1919 = vmatpush.msra.mxu0 0.0
    %1920 = vmatpush.msra.mxu0 0.0
    %1921 = vmatpush.msra.mxu0 0.0
    %1922 = vmatpush.msra.mxu0 0.0
    %1923 = vmatpush.msra.mxu0 0.0
    %1924 = vmatpush.msra.mxu0 0.0
    %1925 = vmatpush.msra.mxu0 0.0
    %1926 = vmatpush.msra.mxu0 0.0
    %1927 = vmatpush.msra.mxu0 0.0
    %v1928 = vand.u32 %v33, 4294901760
    %v1929 = vsub.f32 %v33, %v1928
    %v1930 = vand.u32 %v1929, 4294901760
    %1931 = vmatpush.msra.mxu0 %v1930
    %v1932 = vand.u32 %v32, 4294901760
    %v1933 = vsub.f32 %v32, %v1932
    %v1934 = vand.u32 %v1933, 4294901760
    %1935 = vmatpush.msra.mxu0 %v1934
    %v1936 = vand.u32 %v31, 4294901760
    %v1937 = vsub.f32 %v31, %v1936
    %v1938 = vand.u32 %v1937, 4294901760
    %1939 = vmatpush.msra.mxu0 %v1938
    %v1940 = vand.u32 %v30, 4294901760
    %v1941 = vsub.f32 %v30, %v1940
    %v1942 = vand.u32 %v1941, 4294901760
    %1943 = vmatpush.msra.mxu0 %v1942
    %v1944 = vand.u32 %v1761, 4294901760
    %1945 = vmatmul.f32.gmra.mxu0 %v1944
    %v1946 = vpop.f32.mrf.mxu0
    %v1947 = vadd.f32 %v1908, %v1946
    %v1948 = vand.u32 %v1764, 4294901760
    %1949 = vmatmul.f32.gmra.mxu0 %v1948
    %v1950 = vpop.f32.mrf.mxu0
    %v1951 = vadd.f32 %v1914, %v1950
    %1952 = vdwg.mxu0
    %1953 = vmatpush.msra.mxu0 0.0
    %1954 = vmatpush.msra.mxu0 0.0
    %1955 = vmatpush.msra.mxu0 0.0
    %1956 = vmatpush.msra.mxu0 0.0
    %1957 = vmatpush.msra.mxu0 0.0
    %1958 = vmatpush.msra.mxu0 0.0
    %1959 = vmatpush.msra.mxu0 0.0
    %1960 = vmatpush.msra.mxu0 0.0
    %1961 = vmatpush.msra.mxu0 0.0
    %1962 = vmatpush.msra.mxu0 0.0
    %1963 = vmatpush.msra.mxu0 0.0
    %1964 = vmatpush.msra.mxu0 0.0
    %v1965 = vand.u32 %v33, 4294901760
    %1966 = vmatpush.msra.mxu0 %v1965
    %v1967 = vand.u32 %v32, 4294901760
    %1968 = vmatpush.msra.mxu0 %v1967
    %v1969 = vand.u32 %v31, 4294901760
    %1970 = vmatpush.msra.mxu0 %v1969
    %v1971 = vand.u32 %v30, 4294901760
    %1972 = vmatpush.msra.mxu0 %v1971
    %v1973 = vand.u32 %v1761, 4294901760
    %1974 = vmatmul.f32.gmra.mxu0 %v1973
    %v1975 = vpop.f32.mrf.mxu0
    %v1976 = vadd.f32 %v1947, %v1975
    %v1977 = vand.u32 %v1764, 4294901760
    %1978 = vmatmul.f32.gmra.mxu0 %v1977
    %v1979 = vpop.f32.mrf.mxu0
    %v1980 = vadd.f32 %v1951, %v1979
    %1981 = vdwg.mxu0
    %v1982 = vadd.f32 %v1976, %v18
    %v1983 = vadd.f32 %v1980, %v19
    %v1984 = vsel %vm1759, %v1982, 0.0
    %1985 = vadd.xlane.f32.xlu0 %v1984
    %v1986 = vpop.xlane.xlu0 %1985
    %v1987 = vsel %vm1759, %v1983, 0.0
    %1988 = vadd.xlane.f32.xlu0 %v1987
    %v1989 = vpop.xlane.xlu0 %1988
    %v1990 = vrcp.pop 32.0
    %v1991 = vmul.f32 32.0, %v1990
    %v1992 = vsub.f32 1.0, %v1991
    %v1993 = vmul.f32 %v1990, %v1992
    %v1994 = vadd.f32 %v1990, %v1993
    %vm1995 = vweird.f32 %v1990
    %v1996 = vsel %vm1995, %v1990, %v1994
    %v1997 = vmul.f32 %v1986, %v1996
    %v1998 = vmul.f32 %v1989, %v1996
    %v1999 = vsub.f32 %v1982, %v1997
    %v2000 = vsub.f32 %v1983, %v1998
    %v2001 = vmul.f32 %v1999, %v1999
    %v2002 = vmul.f32 %v2000, %v2000
    %v2003 = vsel %vm1759, %v2001, 0.0
    %2004 = vadd.xlane.f32.xlu0 %v2003
    %v2005 = vpop.xlane.xlu0 %2004
    %v2006 = vsel %vm1759, %v2002, 0.0
    %2007 = vadd.xlane.f32.xlu0 %v2006
    %v2008 = vpop.xlane.xlu0 %2007
    %v2009 = vmul.f32 %v2005, %v1996
    %v2010 = vmul.f32 %v2008, %v1996
    %v2011 = vadd.f32 %v2009, 1e-05
    %v2012 = vadd.f32 %v2010, 1e-05
    %v2013 = vrsqrt.pop %v2011
    %v2014 = vmul.f32 %v2013, %v2011
    %v2015 = vmul.f32 %v2014, %v2013
    %v2016 = vmul.f32 0.5, %v2015
    %v2017 = vsub.f32 1.5, %v2016
    %v2018 = vmul.f32 %v2013, %v2017
    %vm2019 = vweird.f32 %v2011
    %vm2020 = vweird.f32 %v2013
    %vm2021 = vmor %vm2019, %vm2020
    %v2022 = vsel %vm2021, %v2013, %v2018
    %v2023 = vrsqrt.pop %v2012
    %v2024 = vmul.f32 %v2023, %v2012
    %v2025 = vmul.f32 %v2024, %v2023
    %v2026 = vmul.f32 0.5, %v2025
    %v2027 = vsub.f32 1.5, %v2026
    %v2028 = vmul.f32 %v2023, %v2027
    %vm2029 = vweird.f32 %v2012
    %vm2030 = vweird.f32 %v2023
    %vm2031 = vmor %vm2029, %vm2030
    %v2032 = vsel %vm2031, %v2023, %v2028
    %v2033 = vmul.f32 %v1999, %v2022
    %v2034 = vmul.f32 %v2000, %v2032
    %v2035 = vperm.slane %v35, 0
    %v2036 = vmul.f32 %v2033, %v2035
    %v2037 = vmul.f32 %v2034, %v2035
    %v2038 = vperm.slane %v36, 0
    %v2039 = vadd.f32 %v2036, %v2038
    %v2040 = vadd.f32 %v2037, %v2038
    %v2041 = vperm.slane %v37, 0
    %v2043 = vsel %vm1759, %v2039, 0
    %v2046 = vsel %vm1759, %v2040, 0
    %2048 = vmatpush.msra.mxu0 0.0
    %2049 = vmatpush.msra.mxu0 0.0
    %2050 = vmatpush.msra.mxu0 0.0
    %2051 = vmatpush.msra.mxu0 0.0
    %2052 = vmatpush.msra.mxu0 0.0
    %2053 = vmatpush.msra.mxu0 0.0
    %2054 = vmatpush.msra.mxu0 0.0
    %2055 = vmatpush.msra.mxu0 0.0
    %2056 = vmatpush.msra.mxu0 0.0
    %2057 = vmatpush.msra.mxu0 0.0
    %2058 = vmatpush.msra.mxu0 0.0
    %2059 = vmatpush.msra.mxu0 0.0
    %v2060 = vand.u32 %v25, 4294901760
    %2061 = vmatpush.msra.mxu0 %v2060
    %v2062 = vand.u32 %v24, 4294901760
    %2063 = vmatpush.msra.mxu0 %v2062
    %v2064 = vand.u32 %v23, 4294901760
    %2065 = vmatpush.msra.mxu0 %v2064
    %v2066 = vand.u32 %v22, 4294901760
    %2067 = vmatpush.msra.mxu0 %v2066
    %v2068 = vand.u32 %v2043, 4294901760
    %v2069 = vsub.f32 %v2043, %v2068
    %v2070 = vand.u32 %v2069, 4294901760
    %v2071 = vsub.f32 %v2069, %v2070
    %v2072 = vand.u32 %v2071, 4294901760
    %2073 = vmatmul.f32.gmra.mxu0 %v2072
    %v2074 = vpop.f32.mrf.mxu0
    %v2075 = vadd.f32 %v2041, %v2074
    %v2076 = vand.u32 %v2046, 4294901760
    %v2077 = vsub.f32 %v2046, %v2076
    %v2078 = vand.u32 %v2077, 4294901760
    %v2079 = vsub.f32 %v2077, %v2078
    %v2080 = vand.u32 %v2079, 4294901760
    %2081 = vmatmul.f32.gmra.mxu0 %v2080
    %v2082 = vpop.f32.mrf.mxu0
    %v2083 = vadd.f32 %v2041, %v2082
    %2084 = vdwg.mxu0
    %2085 = vmatpush.msra.mxu0 0.0
    %2086 = vmatpush.msra.mxu0 0.0
    %2087 = vmatpush.msra.mxu0 0.0
    %2088 = vmatpush.msra.mxu0 0.0
    %2089 = vmatpush.msra.mxu0 0.0
    %2090 = vmatpush.msra.mxu0 0.0
    %2091 = vmatpush.msra.mxu0 0.0
    %2092 = vmatpush.msra.mxu0 0.0
    %2093 = vmatpush.msra.mxu0 0.0
    %2094 = vmatpush.msra.mxu0 0.0
    %2095 = vmatpush.msra.mxu0 0.0
    %2096 = vmatpush.msra.mxu0 0.0
    %v2097 = vand.u32 %v25, 4294901760
    %v2098 = vsub.f32 %v25, %v2097
    %v2099 = vand.u32 %v2098, 4294901760
    %v2100 = vsub.f32 %v2098, %v2099
    %v2101 = vand.u32 %v2100, 4294901760
    %2102 = vmatpush.msra.mxu0 %v2101
    %v2103 = vand.u32 %v24, 4294901760
    %v2104 = vsub.f32 %v24, %v2103
    %v2105 = vand.u32 %v2104, 4294901760
    %v2106 = vsub.f32 %v2104, %v2105
    %v2107 = vand.u32 %v2106, 4294901760
    %2108 = vmatpush.msra.mxu0 %v2107
    %v2109 = vand.u32 %v23, 4294901760
    %v2110 = vsub.f32 %v23, %v2109
    %v2111 = vand.u32 %v2110, 4294901760
    %v2112 = vsub.f32 %v2110, %v2111
    %v2113 = vand.u32 %v2112, 4294901760
    %2114 = vmatpush.msra.mxu0 %v2113
    %v2115 = vand.u32 %v22, 4294901760
    %v2116 = vsub.f32 %v22, %v2115
    %v2117 = vand.u32 %v2116, 4294901760
    %v2118 = vsub.f32 %v2116, %v2117
    %v2119 = vand.u32 %v2118, 4294901760
    %2120 = vmatpush.msra.mxu0 %v2119
    %v2121 = vand.u32 %v2043, 4294901760
    %2122 = vmatmul.f32.gmra.mxu0 %v2121
    %v2123 = vpop.f32.mrf.mxu0
    %v2124 = vadd.f32 %v2075, %v2123
    %v2125 = vand.u32 %v2046, 4294901760
    %2126 = vmatmul.f32.gmra.mxu0 %v2125
    %v2127 = vpop.f32.mrf.mxu0
    %v2128 = vadd.f32 %v2083, %v2127
    %2129 = vdwg.mxu0
    %2130 = vmatpush.msra.mxu0 0.0
    %2131 = vmatpush.msra.mxu0 0.0
    %2132 = vmatpush.msra.mxu0 0.0
    %2133 = vmatpush.msra.mxu0 0.0
    %2134 = vmatpush.msra.mxu0 0.0
    %2135 = vmatpush.msra.mxu0 0.0
    %2136 = vmatpush.msra.mxu0 0.0
    %2137 = vmatpush.msra.mxu0 0.0
    %2138 = vmatpush.msra.mxu0 0.0
    %2139 = vmatpush.msra.mxu0 0.0
    %2140 = vmatpush.msra.mxu0 0.0
    %2141 = vmatpush.msra.mxu0 0.0
    %v2142 = vand.u32 %v25, 4294901760
    %v2143 = vsub.f32 %v25, %v2142
    %2144 = vmatpush.msra.mxu0 %v2143
    %v2145 = vand.u32 %v24, 4294901760
    %v2146 = vsub.f32 %v24, %v2145
    %2147 = vmatpush.msra.mxu0 %v2146
    %v2148 = vand.u32 %v23, 4294901760
    %v2149 = vsub.f32 %v23, %v2148
    %2150 = vmatpush.msra.mxu0 %v2149
    %v2151 = vand.u32 %v22, 4294901760
    %v2152 = vsub.f32 %v22, %v2151
    %2153 = vmatpush.msra.mxu0 %v2152
    %v2154 = vand.u32 %v2043, 4294901760
    %v2155 = vsub.f32 %v2043, %v2154
    %2156 = vmatmul.f32.gmra.mxu0 %v2155
    %v2157 = vpop.f32.mrf.mxu0
    %v2158 = vadd.f32 %v2124, %v2157
    %v2159 = vand.u32 %v2046, 4294901760
    %v2160 = vsub.f32 %v2046, %v2159
    %2161 = vmatmul.f32.gmra.mxu0 %v2160
    %v2162 = vpop.f32.mrf.mxu0
    %v2163 = vadd.f32 %v2128, %v2162
    %2164 = vdwg.mxu0
    %2165 = vmatpush.msra.mxu0 0.0
    %2166 = vmatpush.msra.mxu0 0.0
    %2167 = vmatpush.msra.mxu0 0.0
    %2168 = vmatpush.msra.mxu0 0.0
    %2169 = vmatpush.msra.mxu0 0.0
    %2170 = vmatpush.msra.mxu0 0.0
    %2171 = vmatpush.msra.mxu0 0.0
    %2172 = vmatpush.msra.mxu0 0.0
    %2173 = vmatpush.msra.mxu0 0.0
    %2174 = vmatpush.msra.mxu0 0.0
    %2175 = vmatpush.msra.mxu0 0.0
    %2176 = vmatpush.msra.mxu0 0.0
    %v2177 = vand.u32 %v25, 4294901760
    %2178 = vmatpush.msra.mxu0 %v2177
    %v2179 = vand.u32 %v24, 4294901760
    %2180 = vmatpush.msra.mxu0 %v2179
    %v2181 = vand.u32 %v23, 4294901760
    %2182 = vmatpush.msra.mxu0 %v2181
    %v2183 = vand.u32 %v22, 4294901760
    %2184 = vmatpush.msra.mxu0 %v2183
    %v2185 = vand.u32 %v2043, 4294901760
    %v2186 = vsub.f32 %v2043, %v2185
    %v2187 = vand.u32 %v2186, 4294901760
    %2188 = vmatmul.f32.gmra.mxu0 %v2187
    %v2189 = vpop.f32.mrf.mxu0
    %v2190 = vadd.f32 %v2158, %v2189
    %v2191 = vand.u32 %v2046, 4294901760
    %v2192 = vsub.f32 %v2046, %v2191
    %v2193 = vand.u32 %v2192, 4294901760
    %2194 = vmatmul.f32.gmra.mxu0 %v2193
    %v2195 = vpop.f32.mrf.mxu0
    %v2196 = vadd.f32 %v2163, %v2195
    %2197 = vdwg.mxu0
    %2198 = vmatpush.msra.mxu0 0.0
    %2199 = vmatpush.msra.mxu0 0.0
    %2200 = vmatpush.msra.mxu0 0.0
    %2201 = vmatpush.msra.mxu0 0.0
    %2202 = vmatpush.msra.mxu0 0.0
    %2203 = vmatpush.msra.mxu0 0.0
    %2204 = vmatpush.msra.mxu0 0.0
    %2205 = vmatpush.msra.mxu0 0.0
    %2206 = vmatpush.msra.mxu0 0.0
    %2207 = vmatpush.msra.mxu0 0.0
    %2208 = vmatpush.msra.mxu0 0.0
    %2209 = vmatpush.msra.mxu0 0.0
    %v2210 = vand.u32 %v25, 4294901760
    %v2211 = vsub.f32 %v25, %v2210
    %v2212 = vand.u32 %v2211, 4294901760
    %2213 = vmatpush.msra.mxu0 %v2212
    %v2214 = vand.u32 %v24, 4294901760
    %v2215 = vsub.f32 %v24, %v2214
    %v2216 = vand.u32 %v2215, 4294901760
    %2217 = vmatpush.msra.mxu0 %v2216
    %v2218 = vand.u32 %v23, 4294901760
    %v2219 = vsub.f32 %v23, %v2218
    %v2220 = vand.u32 %v2219, 4294901760
    %2221 = vmatpush.msra.mxu0 %v2220
    %v2222 = vand.u32 %v22, 4294901760
    %v2223 = vsub.f32 %v22, %v2222
    %v2224 = vand.u32 %v2223, 4294901760
    %2225 = vmatpush.msra.mxu0 %v2224
    %v2226 = vand.u32 %v2043, 4294901760
    %2227 = vmatmul.f32.gmra.mxu0 %v2226
    %v2228 = vpop.f32.mrf.mxu0
    %v2229 = vadd.f32 %v2190, %v2228
    %v2230 = vand.u32 %v2046, 4294901760
    %2231 = vmatmul.f32.gmra.mxu0 %v2230
    %v2232 = vpop.f32.mrf.mxu0
    %v2233 = vadd.f32 %v2196, %v2232
    %2234 = vdwg.mxu0
    %2235 = vmatpush.msra.mxu0 0.0
    %2236 = vmatpush.msra.mxu0 0.0
    %2237 = vmatpush.msra.mxu0 0.0
    %2238 = vmatpush.msra.mxu0 0.0
    %2239 = vmatpush.msra.mxu0 0.0
    %2240 = vmatpush.msra.mxu0 0.0
    %2241 = vmatpush.msra.mxu0 0.0
    %2242 = vmatpush.msra.mxu0 0.0
    %2243 = vmatpush.msra.mxu0 0.0
    %2244 = vmatpush.msra.mxu0 0.0
    %2245 = vmatpush.msra.mxu0 0.0
    %2246 = vmatpush.msra.mxu0 0.0
    %v2247 = vand.u32 %v25, 4294901760
    %2248 = vmatpush.msra.mxu0 %v2247
    %v2249 = vand.u32 %v24, 4294901760
    %2250 = vmatpush.msra.mxu0 %v2249
    %v2251 = vand.u32 %v23, 4294901760
    %2252 = vmatpush.msra.mxu0 %v2251
    %v2253 = vand.u32 %v22, 4294901760
    %2254 = vmatpush.msra.mxu0 %v2253
    %v2255 = vand.u32 %v2043, 4294901760
    %2256 = vmatmul.f32.gmra.mxu0 %v2255
    %v2257 = vpop.f32.mrf.mxu0
    %v2258 = vadd.f32 %v2229, %v2257
    %v2259 = vand.u32 %v2046, 4294901760
    %2260 = vmatmul.f32.gmra.mxu0 %v2259
    %v2261 = vpop.f32.mrf.mxu0
    %v2262 = vadd.f32 %v2233, %v2261
    %2263 = vdwg.mxu0
    %v2264 = vmax.f32 %v2258, 0.0
    %v2265 = vmax.f32 %v2262, 0.0
    %v2266 = vperm.slane %v38, 0
    %2267 = vmatpush.xpose.msra.mxu0 0.0
    %2268 = vmatpush.xpose.msra.mxu0 0.0
    %2269 = vmatpush.xpose.msra.mxu0 0.0
    %2270 = vmatpush.xpose.msra.mxu0 0.0
    %2271 = vmatpush.xpose.msra.mxu0 0.0
    %2272 = vmatpush.xpose.msra.mxu0 0.0
    %2273 = vmatpush.xpose.msra.mxu0 0.0
    %2274 = vmatpush.xpose.msra.mxu0 0.0
    %2275 = vmatpush.xpose.msra.mxu0 0.0
    %2276 = vmatpush.xpose.msra.mxu0 0.0
    %2277 = vmatpush.xpose.msra.mxu0 0.0
    %2278 = vmatpush.xpose.msra.mxu0 0.0
    %v2279 = vand.u32 %v29, 4294901760
    %2280 = vmatpush.xpose.msra.mxu0 %v2279
    %v2281 = vand.u32 %v28, 4294901760
    %2282 = vmatpush.xpose.msra.mxu0 %v2281
    %v2283 = vand.u32 %v27, 4294901760
    %2284 = vmatpush.xpose.msra.mxu0 %v2283
    %v2285 = vand.u32 %v26, 4294901760
    %2286 = vmatpush.xpose.msra.mxu0 %v2285
    %v2287 = vand.u32 %v2264, 4294901760
    %v2288 = vsub.f32 %v2264, %v2287
    %v2289 = vand.u32 %v2288, 4294901760
    %v2290 = vsub.f32 %v2288, %v2289
    %v2291 = vand.u32 %v2290, 4294901760
    %2292 = vmatmul.f32.gmra.mxu0 %v2291
    %v2293 = vpop.f32.mrf.mxu0
    %v2294 = vadd.f32 %v2266, %v2293
    %v2295 = vand.u32 %v2265, 4294901760
    %v2296 = vsub.f32 %v2265, %v2295
    %v2297 = vand.u32 %v2296, 4294901760
    %v2298 = vsub.f32 %v2296, %v2297
    %v2299 = vand.u32 %v2298, 4294901760
    %2300 = vmatmul.f32.gmra.mxu0 %v2299
    %v2301 = vpop.f32.mrf.mxu0
    %v2302 = vadd.f32 %v2266, %v2301
    %2303 = vdwg.mxu0
    %2304 = vmatpush.xpose.msra.mxu0 0.0
    %2305 = vmatpush.xpose.msra.mxu0 0.0
    %2306 = vmatpush.xpose.msra.mxu0 0.0
    %2307 = vmatpush.xpose.msra.mxu0 0.0
    %2308 = vmatpush.xpose.msra.mxu0 0.0
    %2309 = vmatpush.xpose.msra.mxu0 0.0
    %2310 = vmatpush.xpose.msra.mxu0 0.0
    %2311 = vmatpush.xpose.msra.mxu0 0.0
    %2312 = vmatpush.xpose.msra.mxu0 0.0
    %2313 = vmatpush.xpose.msra.mxu0 0.0
    %2314 = vmatpush.xpose.msra.mxu0 0.0
    %2315 = vmatpush.xpose.msra.mxu0 0.0
    %v2316 = vand.u32 %v29, 4294901760
    %v2317 = vsub.f32 %v29, %v2316
    %v2318 = vand.u32 %v2317, 4294901760
    %v2319 = vsub.f32 %v2317, %v2318
    %v2320 = vand.u32 %v2319, 4294901760
    %2321 = vmatpush.xpose.msra.mxu0 %v2320
    %v2322 = vand.u32 %v28, 4294901760
    %v2323 = vsub.f32 %v28, %v2322
    %v2324 = vand.u32 %v2323, 4294901760
    %v2325 = vsub.f32 %v2323, %v2324
    %v2326 = vand.u32 %v2325, 4294901760
    %2327 = vmatpush.xpose.msra.mxu0 %v2326
    %v2328 = vand.u32 %v27, 4294901760
    %v2329 = vsub.f32 %v27, %v2328
    %v2330 = vand.u32 %v2329, 4294901760
    %v2331 = vsub.f32 %v2329, %v2330
    %v2332 = vand.u32 %v2331, 4294901760
    %2333 = vmatpush.xpose.msra.mxu0 %v2332
    %v2334 = vand.u32 %v26, 4294901760
    %v2335 = vsub.f32 %v26, %v2334
    %v2336 = vand.u32 %v2335, 4294901760
    %v2337 = vsub.f32 %v2335, %v2336
    %v2338 = vand.u32 %v2337, 4294901760
    %2339 = vmatpush.xpose.msra.mxu0 %v2338
    %v2340 = vand.u32 %v2264, 4294901760
    %2341 = vmatmul.f32.gmra.mxu0 %v2340
    %v2342 = vpop.f32.mrf.mxu0
    %v2343 = vadd.f32 %v2294, %v2342
    %v2344 = vand.u32 %v2265, 4294901760
    %2345 = vmatmul.f32.gmra.mxu0 %v2344
    %v2346 = vpop.f32.mrf.mxu0
    %v2347 = vadd.f32 %v2302, %v2346
    %2348 = vdwg.mxu0
    %2349 = vmatpush.xpose.msra.mxu0 0.0
    %2350 = vmatpush.xpose.msra.mxu0 0.0
    %2351 = vmatpush.xpose.msra.mxu0 0.0
    %2352 = vmatpush.xpose.msra.mxu0 0.0
    %2353 = vmatpush.xpose.msra.mxu0 0.0
    %2354 = vmatpush.xpose.msra.mxu0 0.0
    %2355 = vmatpush.xpose.msra.mxu0 0.0
    %2356 = vmatpush.xpose.msra.mxu0 0.0
    %2357 = vmatpush.xpose.msra.mxu0 0.0
    %2358 = vmatpush.xpose.msra.mxu0 0.0
    %2359 = vmatpush.xpose.msra.mxu0 0.0
    %2360 = vmatpush.xpose.msra.mxu0 0.0
    %v2361 = vand.u32 %v29, 4294901760
    %v2362 = vsub.f32 %v29, %v2361
    %2363 = vmatpush.xpose.msra.mxu0 %v2362
    %v2364 = vand.u32 %v28, 4294901760
    %v2365 = vsub.f32 %v28, %v2364
    %2366 = vmatpush.xpose.msra.mxu0 %v2365
    %v2367 = vand.u32 %v27, 4294901760
    %v2368 = vsub.f32 %v27, %v2367
    %2369 = vmatpush.xpose.msra.mxu0 %v2368
    %v2370 = vand.u32 %v26, 4294901760
    %v2371 = vsub.f32 %v26, %v2370
    %2372 = vmatpush.xpose.msra.mxu0 %v2371
    %v2373 = vand.u32 %v2264, 4294901760
    %v2374 = vsub.f32 %v2264, %v2373
    %2375 = vmatmul.f32.gmra.mxu0 %v2374
    %v2376 = vpop.f32.mrf.mxu0
    %v2377 = vadd.f32 %v2343, %v2376
    %v2378 = vand.u32 %v2265, 4294901760
    %v2379 = vsub.f32 %v2265, %v2378
    %2380 = vmatmul.f32.gmra.mxu0 %v2379
    %v2381 = vpop.f32.mrf.mxu0
    %v2382 = vadd.f32 %v2347, %v2381
    %2383 = vdwg.mxu0
    %2384 = vmatpush.xpose.msra.mxu0 0.0
    %2385 = vmatpush.xpose.msra.mxu0 0.0
    %2386 = vmatpush.xpose.msra.mxu0 0.0
    %2387 = vmatpush.xpose.msra.mxu0 0.0
    %2388 = vmatpush.xpose.msra.mxu0 0.0
    %2389 = vmatpush.xpose.msra.mxu0 0.0
    %2390 = vmatpush.xpose.msra.mxu0 0.0
    %2391 = vmatpush.xpose.msra.mxu0 0.0
    %2392 = vmatpush.xpose.msra.mxu0 0.0
    %2393 = vmatpush.xpose.msra.mxu0 0.0
    %2394 = vmatpush.xpose.msra.mxu0 0.0
    %2395 = vmatpush.xpose.msra.mxu0 0.0
    %v2396 = vand.u32 %v29, 4294901760
    %2397 = vmatpush.xpose.msra.mxu0 %v2396
    %v2398 = vand.u32 %v28, 4294901760
    %2399 = vmatpush.xpose.msra.mxu0 %v2398
    %v2400 = vand.u32 %v27, 4294901760
    %2401 = vmatpush.xpose.msra.mxu0 %v2400
    %v2402 = vand.u32 %v26, 4294901760
    %2403 = vmatpush.xpose.msra.mxu0 %v2402
    %v2404 = vand.u32 %v2264, 4294901760
    %v2405 = vsub.f32 %v2264, %v2404
    %v2406 = vand.u32 %v2405, 4294901760
    %2407 = vmatmul.f32.gmra.mxu0 %v2406
    %v2408 = vpop.f32.mrf.mxu0
    %v2409 = vadd.f32 %v2377, %v2408
    %v2410 = vand.u32 %v2265, 4294901760
    %v2411 = vsub.f32 %v2265, %v2410
    %v2412 = vand.u32 %v2411, 4294901760
    %2413 = vmatmul.f32.gmra.mxu0 %v2412
    %v2414 = vpop.f32.mrf.mxu0
    %v2415 = vadd.f32 %v2382, %v2414
    %2416 = vdwg.mxu0
    %2417 = vmatpush.xpose.msra.mxu0 0.0
    %2418 = vmatpush.xpose.msra.mxu0 0.0
    %2419 = vmatpush.xpose.msra.mxu0 0.0
    %2420 = vmatpush.xpose.msra.mxu0 0.0
    %2421 = vmatpush.xpose.msra.mxu0 0.0
    %2422 = vmatpush.xpose.msra.mxu0 0.0
    %2423 = vmatpush.xpose.msra.mxu0 0.0
    %2424 = vmatpush.xpose.msra.mxu0 0.0
    %2425 = vmatpush.xpose.msra.mxu0 0.0
    %2426 = vmatpush.xpose.msra.mxu0 0.0
    %2427 = vmatpush.xpose.msra.mxu0 0.0
    %2428 = vmatpush.xpose.msra.mxu0 0.0
    %v2429 = vand.u32 %v29, 4294901760
    %v2430 = vsub.f32 %v29, %v2429
    %v2431 = vand.u32 %v2430, 4294901760
    %2432 = vmatpush.xpose.msra.mxu0 %v2431
    %v2433 = vand.u32 %v28, 4294901760
    %v2434 = vsub.f32 %v28, %v2433
    %v2435 = vand.u32 %v2434, 4294901760
    %2436 = vmatpush.xpose.msra.mxu0 %v2435
    %v2437 = vand.u32 %v27, 4294901760
    %v2438 = vsub.f32 %v27, %v2437
    %v2439 = vand.u32 %v2438, 4294901760
    %2440 = vmatpush.xpose.msra.mxu0 %v2439
    %v2441 = vand.u32 %v26, 4294901760
    %v2442 = vsub.f32 %v26, %v2441
    %v2443 = vand.u32 %v2442, 4294901760
    %2444 = vmatpush.xpose.msra.mxu0 %v2443
    %v2445 = vand.u32 %v2264, 4294901760
    %2446 = vmatmul.f32.gmra.mxu0 %v2445
    %v2447 = vpop.f32.mrf.mxu0
    %v2448 = vadd.f32 %v2409, %v2447
    %v2449 = vand.u32 %v2265, 4294901760
    %2450 = vmatmul.f32.gmra.mxu0 %v2449
    %v2451 = vpop.f32.mrf.mxu0
    %v2452 = vadd.f32 %v2415, %v2451
    %2453 = vdwg.mxu0
    %2454 = vmatpush.xpose.msra.mxu0 0.0
    %2455 = vmatpush.xpose.msra.mxu0 0.0
    %2456 = vmatpush.xpose.msra.mxu0 0.0
    %2457 = vmatpush.xpose.msra.mxu0 0.0
    %2458 = vmatpush.xpose.msra.mxu0 0.0
    %2459 = vmatpush.xpose.msra.mxu0 0.0
    %2460 = vmatpush.xpose.msra.mxu0 0.0
    %2461 = vmatpush.xpose.msra.mxu0 0.0
    %2462 = vmatpush.xpose.msra.mxu0 0.0
    %2463 = vmatpush.xpose.msra.mxu0 0.0
    %2464 = vmatpush.xpose.msra.mxu0 0.0
    %2465 = vmatpush.xpose.msra.mxu0 0.0
    %v2466 = vand.u32 %v29, 4294901760
    %2467 = vmatpush.xpose.msra.mxu0 %v2466
    %v2468 = vand.u32 %v28, 4294901760
    %2469 = vmatpush.xpose.msra.mxu0 %v2468
    %v2470 = vand.u32 %v27, 4294901760
    %2471 = vmatpush.xpose.msra.mxu0 %v2470
    %v2472 = vand.u32 %v26, 4294901760
    %2473 = vmatpush.xpose.msra.mxu0 %v2472
    %v2474 = vand.u32 %v2264, 4294901760
    %2475 = vmatmul.f32.gmra.mxu0 %v2474
    %v2476 = vpop.f32.mrf.mxu0
    %v2477 = vadd.f32 %v2448, %v2476
    %v2478 = vand.u32 %v2265, 4294901760
    %2479 = vmatmul.f32.gmra.mxu0 %v2478
    %v2480 = vpop.f32.mrf.mxu0
    %v2481 = vadd.f32 %v2452, %v2480
    %2482 = vdwg.mxu0
    %v2483 = vadd.f32 %v2477, %v2039
    %v2484 = vadd.f32 %v2481, %v2040
    %v2485 = vsel %vm1759, %v2483, 0.0
    %2486 = vadd.xlane.f32.xlu0 %v2485
    %v2487 = vpop.xlane.xlu0 %2486
    %v2488 = vsel %vm1759, %v2484, 0.0
    %2489 = vadd.xlane.f32.xlu0 %v2488
    %v2490 = vpop.xlane.xlu0 %2489
    %v2491 = vmul.f32 %v2487, %v1996
    %v2492 = vmul.f32 %v2490, %v1996
    %v2493 = vsub.f32 %v2483, %v2491
    %v2494 = vsub.f32 %v2484, %v2492
    %v2495 = vmul.f32 %v2493, %v2493
    %v2496 = vmul.f32 %v2494, %v2494
    %v2497 = vsel %vm1759, %v2495, 0.0
    %2498 = vadd.xlane.f32.xlu0 %v2497
    %v2499 = vpop.xlane.xlu0 %2498
    %v2500 = vsel %vm1759, %v2496, 0.0
    %2501 = vadd.xlane.f32.xlu0 %v2500
    %v2502 = vpop.xlane.xlu0 %2501
    %v2503 = vmul.f32 %v2499, %v1996
    %v2504 = vmul.f32 %v2502, %v1996
    %v2505 = vadd.f32 %v2503, 1e-05
    %v2506 = vadd.f32 %v2504, 1e-05
    %v2507 = vrsqrt.pop %v2505
    %v2508 = vmul.f32 %v2507, %v2505
    %v2509 = vmul.f32 %v2508, %v2507
    %v2510 = vmul.f32 0.5, %v2509
    %v2511 = vsub.f32 1.5, %v2510
    %v2512 = vmul.f32 %v2507, %v2511
    %vm2513 = vweird.f32 %v2505
    %vm2514 = vweird.f32 %v2507
    %vm2515 = vmor %vm2513, %vm2514
    %v2516 = vsel %vm2515, %v2507, %v2512
    %v2517 = vrsqrt.pop %v2506
    %v2518 = vmul.f32 %v2517, %v2506
    %v2519 = vmul.f32 %v2518, %v2517
    %v2520 = vmul.f32 0.5, %v2519
    %v2521 = vsub.f32 1.5, %v2520
    %v2522 = vmul.f32 %v2517, %v2521
    %vm2523 = vweird.f32 %v2506
    %vm2524 = vweird.f32 %v2517
    %vm2525 = vmor %vm2523, %vm2524
    %v2526 = vsel %vm2525, %v2517, %v2522
    %v2527 = vmul.f32 %v2493, %v2516
    %v2528 = vmul.f32 %v2494, %v2526
    %v2529 = vperm.slane %v39, 0
    %v2530 = vmul.f32 %v2527, %v2529
    %v2531 = vmul.f32 %v2528, %v2529
    %v2532 = vperm.slane %v40, 0
    %v2533 = vadd.f32 %v2530, %v2532
    %v2534 = vadd.f32 %v2531, %v2532
    %v2535 = vld [vmem:[%s2 + $0x60] sm:$0xff]
    %v2536 = vld [vmem:[%s2 + $0x68] sm:$0xff]
    %v2537 = vld [vmem:[%s2 + $0x70] sm:$0xff]
    %v2538 = vld [vmem:[%s2 + $0x78] sm:$0xff]
    %v2539 = vld [vmem:[%s2 + $0x80] sm:$0xff]
    %v2540 = vld [vmem:[%s2 + $0x88] sm:$0xff]
    %v2541 = vld [vmem:[%s2 + $0x90] sm:$0xff]
    %v2542 = vld [vmem:[%s2 + $0x98] sm:$0xff]
    %v2543 = vld [vmem:[%s2 + $0xa0] sm:$0xff]
    %v2544 = vld [vmem:[%s2 + $0xa8] sm:$0xff]
    %v2545 = vld [vmem:[%s2 + $0xb0] sm:$0xff]
    %v2546 = vld [vmem:[%s2 + $0xb8] sm:$0xff]
    %v2547 = vld [vmem:[%s3 + $0x8] sm:$0x1]
    %v2548 = vld [vmem:[%s3 + $0x9] sm:$0x1]
    %v2549 = vld [vmem:[%s3 + $0xa] sm:$0x1]
    %v2550 = vld [vmem:[%s3 + $0xb] sm:$0x1]
    %v2551 = vld [vmem:[%s3 + $0xc] sm:$0x1]
    %v2552 = vld [vmem:[%s3 + $0xd] sm:$0x1]
    %v2553 = vld [vmem:[%s3 + $0xe] sm:$0x1]
    %v2555 = vsel %vm41, %v2533, 0
    %v2558 = vsel %vm41, %v2534, 0
    %2560 = vmatpush.xpose.msra.mxu0 0.0
    %2561 = vmatpush.xpose.msra.mxu0 0.0
    %2562 = vmatpush.xpose.msra.mxu0 0.0
    %2563 = vmatpush.xpose.msra.mxu0 0.0
    %2564 = vmatpush.xpose.msra.mxu0 0.0
    %2565 = vmatpush.xpose.msra.mxu0 0.0
    %2566 = vmatpush.xpose.msra.mxu0 0.0
    %2567 = vmatpush.xpose.msra.mxu0 0.0
    %2568 = vmatpush.xpose.msra.mxu0 0.0
    %2569 = vmatpush.xpose.msra.mxu0 0.0
    %2570 = vmatpush.xpose.msra.mxu0 0.0
    %2571 = vmatpush.xpose.msra.mxu0 0.0
    %2572 = vmatpush.xpose.msra.mxu0 0.0
    %2573 = vmatpush.xpose.msra.mxu0 0.0
    %v2574 = vand.u32 %v2558, 4294901760
    %2575 = vmatpush.xpose.msra.mxu0 %v2574
    %v2576 = vand.u32 %v2555, 4294901760
    %2577 = vmatpush.xpose.msra.mxu0 %v2576
    %v2578 = vand.u32 %v2555, 4294901760
    %v2579 = vsub.f32 %v2555, %v2578
    %v2580 = vand.u32 %v2579, 4294901760
    %v2581 = vsub.f32 %v2579, %v2580
    %v2582 = vand.u32 %v2581, 4294901760
    %2583 = vmatmul.f32.gmra.mxu0 %v2582
    %v2584 = vpop.f32.mrf.mxu0
    %v2585 = vadd.f32 0.0, %v2584
    %v2586 = vand.u32 %v2558, 4294901760
    %v2587 = vsub.f32 %v2558, %v2586
    %v2588 = vand.u32 %v2587, 4294901760
    %v2589 = vsub.f32 %v2587, %v2588
    %v2590 = vand.u32 %v2589, 4294901760
    %2591 = vmatmul.f32.gmra.mxu0 %v2590
    %v2592 = vpop.f32.mrf.mxu0
    %v2593 = vadd.f32 0.0, %v2592
    %2594 = vdwg.mxu0
    %2595 = vmatpush.xpose.msra.mxu0 0.0
    %2596 = vmatpush.xpose.msra.mxu0 0.0
    %2597 = vmatpush.xpose.msra.mxu0 0.0
    %2598 = vmatpush.xpose.msra.mxu0 0.0
    %2599 = vmatpush.xpose.msra.mxu0 0.0
    %2600 = vmatpush.xpose.msra.mxu0 0.0
    %2601 = vmatpush.xpose.msra.mxu0 0.0
    %2602 = vmatpush.xpose.msra.mxu0 0.0
    %2603 = vmatpush.xpose.msra.mxu0 0.0
    %2604 = vmatpush.xpose.msra.mxu0 0.0
    %2605 = vmatpush.xpose.msra.mxu0 0.0
    %2606 = vmatpush.xpose.msra.mxu0 0.0
    %2607 = vmatpush.xpose.msra.mxu0 0.0
    %2608 = vmatpush.xpose.msra.mxu0 0.0
    %v2609 = vand.u32 %v2558, 4294901760
    %v2610 = vsub.f32 %v2558, %v2609
    %v2611 = vand.u32 %v2610, 4294901760
    %v2612 = vsub.f32 %v2610, %v2611
    %v2613 = vand.u32 %v2612, 4294901760
    %2614 = vmatpush.xpose.msra.mxu0 %v2613
    %v2615 = vand.u32 %v2555, 4294901760
    %v2616 = vsub.f32 %v2555, %v2615
    %v2617 = vand.u32 %v2616, 4294901760
    %v2618 = vsub.f32 %v2616, %v2617
    %v2619 = vand.u32 %v2618, 4294901760
    %2620 = vmatpush.xpose.msra.mxu0 %v2619
    %v2621 = vand.u32 %v2555, 4294901760
    %2622 = vmatmul.f32.gmra.mxu0 %v2621
    %v2623 = vpop.f32.mrf.mxu0
    %v2624 = vadd.f32 %v2585, %v2623
    %v2625 = vand.u32 %v2558, 4294901760
    %2626 = vmatmul.f32.gmra.mxu0 %v2625
    %v2627 = vpop.f32.mrf.mxu0
    %v2628 = vadd.f32 %v2593, %v2627
    %2629 = vdwg.mxu0
    %2630 = vmatpush.xpose.msra.mxu0 0.0
    %2631 = vmatpush.xpose.msra.mxu0 0.0
    %2632 = vmatpush.xpose.msra.mxu0 0.0
    %2633 = vmatpush.xpose.msra.mxu0 0.0
    %2634 = vmatpush.xpose.msra.mxu0 0.0
    %2635 = vmatpush.xpose.msra.mxu0 0.0
    %2636 = vmatpush.xpose.msra.mxu0 0.0
    %2637 = vmatpush.xpose.msra.mxu0 0.0
    %2638 = vmatpush.xpose.msra.mxu0 0.0
    %2639 = vmatpush.xpose.msra.mxu0 0.0
    %2640 = vmatpush.xpose.msra.mxu0 0.0
    %2641 = vmatpush.xpose.msra.mxu0 0.0
    %2642 = vmatpush.xpose.msra.mxu0 0.0
    %2643 = vmatpush.xpose.msra.mxu0 0.0
    %v2644 = vand.u32 %v2558, 4294901760
    %v2645 = vsub.f32 %v2558, %v2644
    %2646 = vmatpush.xpose.msra.mxu0 %v2645
    %v2647 = vand.u32 %v2555, 4294901760
    %v2648 = vsub.f32 %v2555, %v2647
    %2649 = vmatpush.xpose.msra.mxu0 %v2648
    %v2650 = vand.u32 %v2555, 4294901760
    %v2651 = vsub.f32 %v2555, %v2650
    %2652 = vmatmul.f32.gmra.mxu0 %v2651
    %v2653 = vpop.f32.mrf.mxu0
    %v2654 = vadd.f32 %v2624, %v2653
    %v2655 = vand.u32 %v2558, 4294901760
    %v2656 = vsub.f32 %v2558, %v2655
    %2657 = vmatmul.f32.gmra.mxu0 %v2656
    %v2658 = vpop.f32.mrf.mxu0
    %v2659 = vadd.f32 %v2628, %v2658
    %2660 = vdwg.mxu0
    %2661 = vmatpush.xpose.msra.mxu0 0.0
    %2662 = vmatpush.xpose.msra.mxu0 0.0
    %2663 = vmatpush.xpose.msra.mxu0 0.0
    %2664 = vmatpush.xpose.msra.mxu0 0.0
    %2665 = vmatpush.xpose.msra.mxu0 0.0
    %2666 = vmatpush.xpose.msra.mxu0 0.0
    %2667 = vmatpush.xpose.msra.mxu0 0.0
    %2668 = vmatpush.xpose.msra.mxu0 0.0
    %2669 = vmatpush.xpose.msra.mxu0 0.0
    %2670 = vmatpush.xpose.msra.mxu0 0.0
    %2671 = vmatpush.xpose.msra.mxu0 0.0
    %2672 = vmatpush.xpose.msra.mxu0 0.0
    %2673 = vmatpush.xpose.msra.mxu0 0.0
    %2674 = vmatpush.xpose.msra.mxu0 0.0
    %v2675 = vand.u32 %v2558, 4294901760
    %2676 = vmatpush.xpose.msra.mxu0 %v2675
    %v2677 = vand.u32 %v2555, 4294901760
    %2678 = vmatpush.xpose.msra.mxu0 %v2677
    %v2679 = vand.u32 %v2555, 4294901760
    %v2680 = vsub.f32 %v2555, %v2679
    %v2681 = vand.u32 %v2680, 4294901760
    %2682 = vmatmul.f32.gmra.mxu0 %v2681
    %v2683 = vpop.f32.mrf.mxu0
    %v2684 = vadd.f32 %v2654, %v2683
    %v2685 = vand.u32 %v2558, 4294901760
    %v2686 = vsub.f32 %v2558, %v2685
    %v2687 = vand.u32 %v2686, 4294901760
    %2688 = vmatmul.f32.gmra.mxu0 %v2687
    %v2689 = vpop.f32.mrf.mxu0
    %v2690 = vadd.f32 %v2659, %v2689
    %2691 = vdwg.mxu0
    %2692 = vmatpush.xpose.msra.mxu0 0.0
    %2693 = vmatpush.xpose.msra.mxu0 0.0
    %2694 = vmatpush.xpose.msra.mxu0 0.0
    %2695 = vmatpush.xpose.msra.mxu0 0.0
    %2696 = vmatpush.xpose.msra.mxu0 0.0
    %2697 = vmatpush.xpose.msra.mxu0 0.0
    %2698 = vmatpush.xpose.msra.mxu0 0.0
    %2699 = vmatpush.xpose.msra.mxu0 0.0
    %2700 = vmatpush.xpose.msra.mxu0 0.0
    %2701 = vmatpush.xpose.msra.mxu0 0.0
    %2702 = vmatpush.xpose.msra.mxu0 0.0
    %2703 = vmatpush.xpose.msra.mxu0 0.0
    %2704 = vmatpush.xpose.msra.mxu0 0.0
    %2705 = vmatpush.xpose.msra.mxu0 0.0
    %v2706 = vand.u32 %v2558, 4294901760
    %v2707 = vsub.f32 %v2558, %v2706
    %v2708 = vand.u32 %v2707, 4294901760
    %2709 = vmatpush.xpose.msra.mxu0 %v2708
    %v2710 = vand.u32 %v2555, 4294901760
    %v2711 = vsub.f32 %v2555, %v2710
    %v2712 = vand.u32 %v2711, 4294901760
    %2713 = vmatpush.xpose.msra.mxu0 %v2712
    %v2714 = vand.u32 %v2555, 4294901760
    %2715 = vmatmul.f32.gmra.mxu0 %v2714
    %v2716 = vpop.f32.mrf.mxu0
    %v2717 = vadd.f32 %v2684, %v2716
    %v2718 = vand.u32 %v2558, 4294901760
    %2719 = vmatmul.f32.gmra.mxu0 %v2718
    %v2720 = vpop.f32.mrf.mxu0
    %v2721 = vadd.f32 %v2690, %v2720
    %2722 = vdwg.mxu0
    %2723 = vmatpush.xpose.msra.mxu0 0.0
    %2724 = vmatpush.xpose.msra.mxu0 0.0
    %2725 = vmatpush.xpose.msra.mxu0 0.0
    %2726 = vmatpush.xpose.msra.mxu0 0.0
    %2727 = vmatpush.xpose.msra.mxu0 0.0
    %2728 = vmatpush.xpose.msra.mxu0 0.0
    %2729 = vmatpush.xpose.msra.mxu0 0.0
    %2730 = vmatpush.xpose.msra.mxu0 0.0
    %2731 = vmatpush.xpose.msra.mxu0 0.0
    %2732 = vmatpush.xpose.msra.mxu0 0.0
    %2733 = vmatpush.xpose.msra.mxu0 0.0
    %2734 = vmatpush.xpose.msra.mxu0 0.0
    %2735 = vmatpush.xpose.msra.mxu0 0.0
    %2736 = vmatpush.xpose.msra.mxu0 0.0
    %v2737 = vand.u32 %v2558, 4294901760
    %2738 = vmatpush.xpose.msra.mxu0 %v2737
    %v2739 = vand.u32 %v2555, 4294901760
    %2740 = vmatpush.xpose.msra.mxu0 %v2739
    %v2741 = vand.u32 %v2555, 4294901760
    %2742 = vmatmul.f32.gmra.mxu0 %v2741
    %v2743 = vpop.f32.mrf.mxu0
    %v2744 = vadd.f32 %v2717, %v2743
    %v2745 = vand.u32 %v2558, 4294901760
    %2746 = vmatmul.f32.gmra.mxu0 %v2745
    %v2747 = vpop.f32.mrf.mxu0
    %v2748 = vadd.f32 %v2721, %v2747
    %2749 = vdwg.mxu0
    %v2750 = vmul.f32 %v2744, 0.17677669
    %v2751 = vmul.f32 %v2748, 0.17677669
    %v2752 = vadd.f32 %v2750, %v20
    %v2753 = vadd.f32 %v2751, %v21
    %v2754 = vsel %vm242, %v2752, -inf
    %2755 = vmax.xlane.f32.xlu0 %v2754
    %v2756 = vpop.xlane.xlu0 %2755
    %v2757 = vsel %vm242, %v2753, -inf
    %2758 = vmax.xlane.f32.xlu0 %v2757
    %v2759 = vpop.xlane.xlu0 %2758
    %v2760 = vsub.f32 %v2752, %v2756
    %v2761 = vsub.f32 %v2753, %v2759
    %v2762 = vmul.f32 %v2760, 1.442695
    %v2763 = vpow.pop %v2762
    %v2764 = vmul.f32 %v2761, 1.442695
    %v2765 = vpow.pop %v2764
    %v2766 = vsel %vm242, %v2763, 0.0
    %2767 = vadd.xlane.f32.xlu0 %v2766
    %v2768 = vpop.xlane.xlu0 %2767
    %v2769 = vsel %vm242, %v2765, 0.0
    %2770 = vadd.xlane.f32.xlu0 %v2769
    %v2771 = vpop.xlane.xlu0 %2770
    %v2772 = vrcp.pop %v2768
    %v2773 = vrcp.pop %v2771
    %v2775 = vsel %vm242, %v2763, 0
    %v2778 = vsel %vm242, %v2765, 0
    %2780 = vmatpush.msra.mxu0 0.0
    %2781 = vmatpush.msra.mxu0 0.0
    %2782 = vmatpush.msra.mxu0 0.0
    %2783 = vmatpush.msra.mxu0 0.0
    %2784 = vmatpush.msra.mxu0 0.0
    %2785 = vmatpush.msra.mxu0 0.0
    %2786 = vmatpush.msra.mxu0 0.0
    %2787 = vmatpush.msra.mxu0 0.0
    %2788 = vmatpush.msra.mxu0 0.0
    %2789 = vmatpush.msra.mxu0 0.0
    %2790 = vmatpush.msra.mxu0 0.0
    %2791 = vmatpush.msra.mxu0 0.0
    %2792 = vmatpush.msra.mxu0 0.0
    %2793 = vmatpush.msra.mxu0 0.0
    %v2794 = vand.u32 %v2534, 4294901760
    %2795 = vmatpush.msra.mxu0 %v2794
    %v2796 = vand.u32 %v2533, 4294901760
    %2797 = vmatpush.msra.mxu0 %v2796
    %v2798 = vand.u32 %v2775, 4294901760
    %v2799 = vsub.f32 %v2775, %v2798
    %v2800 = vand.u32 %v2799, 4294901760
    %v2801 = vsub.f32 %v2799, %v2800
    %v2802 = vand.u32 %v2801, 4294901760
    %2803 = vmatmul.f32.gmra.mxu0 %v2802
    %v2804 = vpop.f32.mrf.mxu0
    %v2805 = vadd.f32 0.0, %v2804
    %v2806 = vand.u32 %v2778, 4294901760
    %v2807 = vsub.f32 %v2778, %v2806
    %v2808 = vand.u32 %v2807, 4294901760
    %v2809 = vsub.f32 %v2807, %v2808
    %v2810 = vand.u32 %v2809, 4294901760
    %2811 = vmatmul.f32.gmra.mxu0 %v2810
    %v2812 = vpop.f32.mrf.mxu0
    %v2813 = vadd.f32 0.0, %v2812
    %2814 = vdwg.mxu0
    %2815 = vmatpush.msra.mxu0 0.0
    %2816 = vmatpush.msra.mxu0 0.0
    %2817 = vmatpush.msra.mxu0 0.0
    %2818 = vmatpush.msra.mxu0 0.0
    %2819 = vmatpush.msra.mxu0 0.0
    %2820 = vmatpush.msra.mxu0 0.0
    %2821 = vmatpush.msra.mxu0 0.0
    %2822 = vmatpush.msra.mxu0 0.0
    %2823 = vmatpush.msra.mxu0 0.0
    %2824 = vmatpush.msra.mxu0 0.0
    %2825 = vmatpush.msra.mxu0 0.0
    %2826 = vmatpush.msra.mxu0 0.0
    %2827 = vmatpush.msra.mxu0 0.0
    %2828 = vmatpush.msra.mxu0 0.0
    %v2829 = vand.u32 %v2534, 4294901760
    %v2830 = vsub.f32 %v2534, %v2829
    %v2831 = vand.u32 %v2830, 4294901760
    %v2832 = vsub.f32 %v2830, %v2831
    %v2833 = vand.u32 %v2832, 4294901760
    %2834 = vmatpush.msra.mxu0 %v2833
    %v2835 = vand.u32 %v2533, 4294901760
    %v2836 = vsub.f32 %v2533, %v2835
    %v2837 = vand.u32 %v2836, 4294901760
    %v2838 = vsub.f32 %v2836, %v2837
    %v2839 = vand.u32 %v2838, 4294901760
    %2840 = vmatpush.msra.mxu0 %v2839
    %v2841 = vand.u32 %v2775, 4294901760
    %2842 = vmatmul.f32.gmra.mxu0 %v2841
    %v2843 = vpop.f32.mrf.mxu0
    %v2844 = vadd.f32 %v2805, %v2843
    %v2845 = vand.u32 %v2778, 4294901760
    %2846 = vmatmul.f32.gmra.mxu0 %v2845
    %v2847 = vpop.f32.mrf.mxu0
    %v2848 = vadd.f32 %v2813, %v2847
    %2849 = vdwg.mxu0
    %2850 = vmatpush.msra.mxu0 0.0
    %2851 = vmatpush.msra.mxu0 0.0
    %2852 = vmatpush.msra.mxu0 0.0
    %2853 = vmatpush.msra.mxu0 0.0
    %2854 = vmatpush.msra.mxu0 0.0
    %2855 = vmatpush.msra.mxu0 0.0
    %2856 = vmatpush.msra.mxu0 0.0
    %2857 = vmatpush.msra.mxu0 0.0
    %2858 = vmatpush.msra.mxu0 0.0
    %2859 = vmatpush.msra.mxu0 0.0
    %2860 = vmatpush.msra.mxu0 0.0
    %2861 = vmatpush.msra.mxu0 0.0
    %2862 = vmatpush.msra.mxu0 0.0
    %2863 = vmatpush.msra.mxu0 0.0
    %v2864 = vand.u32 %v2534, 4294901760
    %v2865 = vsub.f32 %v2534, %v2864
    %2866 = vmatpush.msra.mxu0 %v2865
    %v2867 = vand.u32 %v2533, 4294901760
    %v2868 = vsub.f32 %v2533, %v2867
    %2869 = vmatpush.msra.mxu0 %v2868
    %v2870 = vand.u32 %v2775, 4294901760
    %v2871 = vsub.f32 %v2775, %v2870
    %2872 = vmatmul.f32.gmra.mxu0 %v2871
    %v2873 = vpop.f32.mrf.mxu0
    %v2874 = vadd.f32 %v2844, %v2873
    %v2875 = vand.u32 %v2778, 4294901760
    %v2876 = vsub.f32 %v2778, %v2875
    %2877 = vmatmul.f32.gmra.mxu0 %v2876
    %v2878 = vpop.f32.mrf.mxu0
    %v2879 = vadd.f32 %v2848, %v2878
    %2880 = vdwg.mxu0
    %2881 = vmatpush.msra.mxu0 0.0
    %2882 = vmatpush.msra.mxu0 0.0
    %2883 = vmatpush.msra.mxu0 0.0
    %2884 = vmatpush.msra.mxu0 0.0
    %2885 = vmatpush.msra.mxu0 0.0
    %2886 = vmatpush.msra.mxu0 0.0
    %2887 = vmatpush.msra.mxu0 0.0
    %2888 = vmatpush.msra.mxu0 0.0
    %2889 = vmatpush.msra.mxu0 0.0
    %2890 = vmatpush.msra.mxu0 0.0
    %2891 = vmatpush.msra.mxu0 0.0
    %2892 = vmatpush.msra.mxu0 0.0
    %2893 = vmatpush.msra.mxu0 0.0
    %2894 = vmatpush.msra.mxu0 0.0
    %v2895 = vand.u32 %v2534, 4294901760
    %2896 = vmatpush.msra.mxu0 %v2895
    %v2897 = vand.u32 %v2533, 4294901760
    %2898 = vmatpush.msra.mxu0 %v2897
    %v2899 = vand.u32 %v2775, 4294901760
    %v2900 = vsub.f32 %v2775, %v2899
    %v2901 = vand.u32 %v2900, 4294901760
    %2902 = vmatmul.f32.gmra.mxu0 %v2901
    %v2903 = vpop.f32.mrf.mxu0
    %v2904 = vadd.f32 %v2874, %v2903
    %v2905 = vand.u32 %v2778, 4294901760
    %v2906 = vsub.f32 %v2778, %v2905
    %v2907 = vand.u32 %v2906, 4294901760
    %2908 = vmatmul.f32.gmra.mxu0 %v2907
    %v2909 = vpop.f32.mrf.mxu0
    %v2910 = vadd.f32 %v2879, %v2909
    %2911 = vdwg.mxu0
    %2912 = vmatpush.msra.mxu0 0.0
    %2913 = vmatpush.msra.mxu0 0.0
    %2914 = vmatpush.msra.mxu0 0.0
    %2915 = vmatpush.msra.mxu0 0.0
    %2916 = vmatpush.msra.mxu0 0.0
    %2917 = vmatpush.msra.mxu0 0.0
    %2918 = vmatpush.msra.mxu0 0.0
    %2919 = vmatpush.msra.mxu0 0.0
    %2920 = vmatpush.msra.mxu0 0.0
    %2921 = vmatpush.msra.mxu0 0.0
    %2922 = vmatpush.msra.mxu0 0.0
    %2923 = vmatpush.msra.mxu0 0.0
    %2924 = vmatpush.msra.mxu0 0.0
    %2925 = vmatpush.msra.mxu0 0.0
    %v2926 = vand.u32 %v2534, 4294901760
    %v2927 = vsub.f32 %v2534, %v2926
    %v2928 = vand.u32 %v2927, 4294901760
    %2929 = vmatpush.msra.mxu0 %v2928
    %v2930 = vand.u32 %v2533, 4294901760
    %v2931 = vsub.f32 %v2533, %v2930
    %v2932 = vand.u32 %v2931, 4294901760
    %2933 = vmatpush.msra.mxu0 %v2932
    %v2934 = vand.u32 %v2775, 4294901760
    %2935 = vmatmul.f32.gmra.mxu0 %v2934
    %v2936 = vpop.f32.mrf.mxu0
    %v2937 = vadd.f32 %v2904, %v2936
    %v2938 = vand.u32 %v2778, 4294901760
    %2939 = vmatmul.f32.gmra.mxu0 %v2938
    %v2940 = vpop.f32.mrf.mxu0
    %v2941 = vadd.f32 %v2910, %v2940
    %2942 = vdwg.mxu0
    %2943 = vmatpush.msra.mxu0 0.0
    %2944 = vmatpush.msra.mxu0 0.0
    %2945 = vmatpush.msra.mxu0 0.0
    %2946 = vmatpush.msra.mxu0 0.0
    %2947 = vmatpush.msra.mxu0 0.0
    %2948 = vmatpush.msra.mxu0 0.0
    %2949 = vmatpush.msra.mxu0 0.0
    %2950 = vmatpush.msra.mxu0 0.0
    %2951 = vmatpush.msra.mxu0 0.0
    %2952 = vmatpush.msra.mxu0 0.0
    %2953 = vmatpush.msra.mxu0 0.0
    %2954 = vmatpush.msra.mxu0 0.0
    %2955 = vmatpush.msra.mxu0 0.0
    %2956 = vmatpush.msra.mxu0 0.0
    %v2957 = vand.u32 %v2534, 4294901760
    %2958 = vmatpush.msra.mxu0 %v2957
    %v2959 = vand.u32 %v2533, 4294901760
    %2960 = vmatpush.msra.mxu0 %v2959
    %v2961 = vand.u32 %v2775, 4294901760
    %2962 = vmatmul.f32.gmra.mxu0 %v2961
    %v2963 = vpop.f32.mrf.mxu0
    %v2964 = vadd.f32 %v2937, %v2963
    %v2965 = vand.u32 %v2778, 4294901760
    %2966 = vmatmul.f32.gmra.mxu0 %v2965
    %v2967 = vpop.f32.mrf.mxu0
    %v2968 = vadd.f32 %v2941, %v2967
    %2969 = vdwg.mxu0
    %v2970 = vmul.f32 %v2964, %v2772
    %v2971 = vmul.f32 %v2968, %v2773
    %2972 = vrot.lane.b32.xlu0 %v2533, 120
    %v2973 = vpop.permute.xlu0 %2972
    %2974 = vrot.lane.b32.xlu0 %v2534, 120
    %v2975 = vpop.permute.xlu0 %2974
    %v2976 = vsel %vm41, %v2973, 0
    %v2978 = vsel %vm41, %v2975, 0
    %2980 = vmatpush.xpose.msra.mxu0 0.0
    %2981 = vmatpush.xpose.msra.mxu0 0.0
    %2982 = vmatpush.xpose.msra.mxu0 0.0
    %2983 = vmatpush.xpose.msra.mxu0 0.0
    %2984 = vmatpush.xpose.msra.mxu0 0.0
    %2985 = vmatpush.xpose.msra.mxu0 0.0
    %2986 = vmatpush.xpose.msra.mxu0 0.0
    %2987 = vmatpush.xpose.msra.mxu0 0.0
    %2988 = vmatpush.xpose.msra.mxu0 0.0
    %2989 = vmatpush.xpose.msra.mxu0 0.0
    %2990 = vmatpush.xpose.msra.mxu0 0.0
    %2991 = vmatpush.xpose.msra.mxu0 0.0
    %2992 = vmatpush.xpose.msra.mxu0 0.0
    %2993 = vmatpush.xpose.msra.mxu0 0.0
    %v2994 = vand.u32 %v2978, 4294901760
    %2995 = vmatpush.xpose.msra.mxu0 %v2994
    %v2996 = vand.u32 %v2976, 4294901760
    %2997 = vmatpush.xpose.msra.mxu0 %v2996
    %v2998 = vand.u32 %v2976, 4294901760
    %v2999 = vsub.f32 %v2976, %v2998
    %v3000 = vand.u32 %v2999, 4294901760
    %v3001 = vsub.f32 %v2999, %v3000
    %v3002 = vand.u32 %v3001, 4294901760
    %3003 = vmatmul.f32.gmra.mxu0 %v3002
    %v3004 = vpop.f32.mrf.mxu0
    %v3005 = vadd.f32 0.0, %v3004
    %v3006 = vand.u32 %v2978, 4294901760
    %v3007 = vsub.f32 %v2978, %v3006
    %v3008 = vand.u32 %v3007, 4294901760
    %v3009 = vsub.f32 %v3007, %v3008
    %v3010 = vand.u32 %v3009, 4294901760
    %3011 = vmatmul.f32.gmra.mxu0 %v3010
    %v3012 = vpop.f32.mrf.mxu0
    %v3013 = vadd.f32 0.0, %v3012
    %3014 = vdwg.mxu0
    %3015 = vmatpush.xpose.msra.mxu0 0.0
    %3016 = vmatpush.xpose.msra.mxu0 0.0
    %3017 = vmatpush.xpose.msra.mxu0 0.0
    %3018 = vmatpush.xpose.msra.mxu0 0.0
    %3019 = vmatpush.xpose.msra.mxu0 0.0
    %3020 = vmatpush.xpose.msra.mxu0 0.0
    %3021 = vmatpush.xpose.msra.mxu0 0.0
    %3022 = vmatpush.xpose.msra.mxu0 0.0
    %3023 = vmatpush.xpose.msra.mxu0 0.0
    %3024 = vmatpush.xpose.msra.mxu0 0.0
    %3025 = vmatpush.xpose.msra.mxu0 0.0
    %3026 = vmatpush.xpose.msra.mxu0 0.0
    %3027 = vmatpush.xpose.msra.mxu0 0.0
    %3028 = vmatpush.xpose.msra.mxu0 0.0
    %v3029 = vand.u32 %v2978, 4294901760
    %v3030 = vsub.f32 %v2978, %v3029
    %v3031 = vand.u32 %v3030, 4294901760
    %v3032 = vsub.f32 %v3030, %v3031
    %v3033 = vand.u32 %v3032, 4294901760
    %3034 = vmatpush.xpose.msra.mxu0 %v3033
    %v3035 = vand.u32 %v2976, 4294901760
    %v3036 = vsub.f32 %v2976, %v3035
    %v3037 = vand.u32 %v3036, 4294901760
    %v3038 = vsub.f32 %v3036, %v3037
    %v3039 = vand.u32 %v3038, 4294901760
    %3040 = vmatpush.xpose.msra.mxu0 %v3039
    %v3041 = vand.u32 %v2976, 4294901760
    %3042 = vmatmul.f32.gmra.mxu0 %v3041
    %v3043 = vpop.f32.mrf.mxu0
    %v3044 = vadd.f32 %v3005, %v3043
    %v3045 = vand.u32 %v2978, 4294901760
    %3046 = vmatmul.f32.gmra.mxu0 %v3045
    %v3047 = vpop.f32.mrf.mxu0
    %v3048 = vadd.f32 %v3013, %v3047
    %3049 = vdwg.mxu0
    %3050 = vmatpush.xpose.msra.mxu0 0.0
    %3051 = vmatpush.xpose.msra.mxu0 0.0
    %3052 = vmatpush.xpose.msra.mxu0 0.0
    %3053 = vmatpush.xpose.msra.mxu0 0.0
    %3054 = vmatpush.xpose.msra.mxu0 0.0
    %3055 = vmatpush.xpose.msra.mxu0 0.0
    %3056 = vmatpush.xpose.msra.mxu0 0.0
    %3057 = vmatpush.xpose.msra.mxu0 0.0
    %3058 = vmatpush.xpose.msra.mxu0 0.0
    %3059 = vmatpush.xpose.msra.mxu0 0.0
    %3060 = vmatpush.xpose.msra.mxu0 0.0
    %3061 = vmatpush.xpose.msra.mxu0 0.0
    %3062 = vmatpush.xpose.msra.mxu0 0.0
    %3063 = vmatpush.xpose.msra.mxu0 0.0
    %v3064 = vand.u32 %v2978, 4294901760
    %v3065 = vsub.f32 %v2978, %v3064
    %3066 = vmatpush.xpose.msra.mxu0 %v3065
    %v3067 = vand.u32 %v2976, 4294901760
    %v3068 = vsub.f32 %v2976, %v3067
    %3069 = vmatpush.xpose.msra.mxu0 %v3068
    %v3070 = vand.u32 %v2976, 4294901760
    %v3071 = vsub.f32 %v2976, %v3070
    %3072 = vmatmul.f32.gmra.mxu0 %v3071
    %v3073 = vpop.f32.mrf.mxu0
    %v3074 = vadd.f32 %v3044, %v3073
    %v3075 = vand.u32 %v2978, 4294901760
    %v3076 = vsub.f32 %v2978, %v3075
    %3077 = vmatmul.f32.gmra.mxu0 %v3076
    %v3078 = vpop.f32.mrf.mxu0
    %v3079 = vadd.f32 %v3048, %v3078
    %3080 = vdwg.mxu0
    %3081 = vmatpush.xpose.msra.mxu0 0.0
    %3082 = vmatpush.xpose.msra.mxu0 0.0
    %3083 = vmatpush.xpose.msra.mxu0 0.0
    %3084 = vmatpush.xpose.msra.mxu0 0.0
    %3085 = vmatpush.xpose.msra.mxu0 0.0
    %3086 = vmatpush.xpose.msra.mxu0 0.0
    %3087 = vmatpush.xpose.msra.mxu0 0.0
    %3088 = vmatpush.xpose.msra.mxu0 0.0
    %3089 = vmatpush.xpose.msra.mxu0 0.0
    %3090 = vmatpush.xpose.msra.mxu0 0.0
    %3091 = vmatpush.xpose.msra.mxu0 0.0
    %3092 = vmatpush.xpose.msra.mxu0 0.0
    %3093 = vmatpush.xpose.msra.mxu0 0.0
    %3094 = vmatpush.xpose.msra.mxu0 0.0
    %v3095 = vand.u32 %v2978, 4294901760
    %3096 = vmatpush.xpose.msra.mxu0 %v3095
    %v3097 = vand.u32 %v2976, 4294901760
    %3098 = vmatpush.xpose.msra.mxu0 %v3097
    %v3099 = vand.u32 %v2976, 4294901760
    %v3100 = vsub.f32 %v2976, %v3099
    %v3101 = vand.u32 %v3100, 4294901760
    %3102 = vmatmul.f32.gmra.mxu0 %v3101
    %v3103 = vpop.f32.mrf.mxu0
    %v3104 = vadd.f32 %v3074, %v3103
    %v3105 = vand.u32 %v2978, 4294901760
    %v3106 = vsub.f32 %v2978, %v3105
    %v3107 = vand.u32 %v3106, 4294901760
    %3108 = vmatmul.f32.gmra.mxu0 %v3107
    %v3109 = vpop.f32.mrf.mxu0
    %v3110 = vadd.f32 %v3079, %v3109
    %3111 = vdwg.mxu0
    %3112 = vmatpush.xpose.msra.mxu0 0.0
    %3113 = vmatpush.xpose.msra.mxu0 0.0
    %3114 = vmatpush.xpose.msra.mxu0 0.0
    %3115 = vmatpush.xpose.msra.mxu0 0.0
    %3116 = vmatpush.xpose.msra.mxu0 0.0
    %3117 = vmatpush.xpose.msra.mxu0 0.0
    %3118 = vmatpush.xpose.msra.mxu0 0.0
    %3119 = vmatpush.xpose.msra.mxu0 0.0
    %3120 = vmatpush.xpose.msra.mxu0 0.0
    %3121 = vmatpush.xpose.msra.mxu0 0.0
    %3122 = vmatpush.xpose.msra.mxu0 0.0
    %3123 = vmatpush.xpose.msra.mxu0 0.0
    %3124 = vmatpush.xpose.msra.mxu0 0.0
    %3125 = vmatpush.xpose.msra.mxu0 0.0
    %v3126 = vand.u32 %v2978, 4294901760
    %v3127 = vsub.f32 %v2978, %v3126
    %v3128 = vand.u32 %v3127, 4294901760
    %3129 = vmatpush.xpose.msra.mxu0 %v3128
    %v3130 = vand.u32 %v2976, 4294901760
    %v3131 = vsub.f32 %v2976, %v3130
    %v3132 = vand.u32 %v3131, 4294901760
    %3133 = vmatpush.xpose.msra.mxu0 %v3132
    %v3134 = vand.u32 %v2976, 4294901760
    %3135 = vmatmul.f32.gmra.mxu0 %v3134
    %v3136 = vpop.f32.mrf.mxu0
    %v3137 = vadd.f32 %v3104, %v3136
    %v3138 = vand.u32 %v2978, 4294901760
    %3139 = vmatmul.f32.gmra.mxu0 %v3138
    %v3140 = vpop.f32.mrf.mxu0
    %v3141 = vadd.f32 %v3110, %v3140
    %3142 = vdwg.mxu0
    %3143 = vmatpush.xpose.msra.mxu0 0.0
    %3144 = vmatpush.xpose.msra.mxu0 0.0
    %3145 = vmatpush.xpose.msra.mxu0 0.0
    %3146 = vmatpush.xpose.msra.mxu0 0.0
    %3147 = vmatpush.xpose.msra.mxu0 0.0
    %3148 = vmatpush.xpose.msra.mxu0 0.0
    %3149 = vmatpush.xpose.msra.mxu0 0.0
    %3150 = vmatpush.xpose.msra.mxu0 0.0
    %3151 = vmatpush.xpose.msra.mxu0 0.0
    %3152 = vmatpush.xpose.msra.mxu0 0.0
    %3153 = vmatpush.xpose.msra.mxu0 0.0
    %3154 = vmatpush.xpose.msra.mxu0 0.0
    %3155 = vmatpush.xpose.msra.mxu0 0.0
    %3156 = vmatpush.xpose.msra.mxu0 0.0
    %v3157 = vand.u32 %v2978, 4294901760
    %3158 = vmatpush.xpose.msra.mxu0 %v3157
    %v3159 = vand.u32 %v2976, 4294901760
    %3160 = vmatpush.xpose.msra.mxu0 %v3159
    %v3161 = vand.u32 %v2976, 4294901760
    %3162 = vmatmul.f32.gmra.mxu0 %v3161
    %v3163 = vpop.f32.mrf.mxu0
    %v3164 = vadd.f32 %v3137, %v3163
    %v3165 = vand.u32 %v2978, 4294901760
    %3166 = vmatmul.f32.gmra.mxu0 %v3165
    %v3167 = vpop.f32.mrf.mxu0
    %v3168 = vadd.f32 %v3141, %v3167
    %3169 = vdwg.mxu0
    %v3170 = vmul.f32 %v3164, 0.17677669
    %v3171 = vmul.f32 %v3168, 0.17677669
    %v3172 = vadd.f32 %v3170, %v20
    %v3173 = vadd.f32 %v3171, %v21
    %v3174 = vsel %vm242, %v3172, -inf
    %3175 = vmax.xlane.f32.xlu0 %v3174
    %v3176 = vpop.xlane.xlu0 %3175
    %v3177 = vsel %vm242, %v3173, -inf
    %3178 = vmax.xlane.f32.xlu0 %v3177
    %v3179 = vpop.xlane.xlu0 %3178
    %v3180 = vsub.f32 %v3172, %v3176
    %v3181 = vsub.f32 %v3173, %v3179
    %v3182 = vmul.f32 %v3180, 1.442695
    %v3183 = vpow.pop %v3182
    %v3184 = vmul.f32 %v3181, 1.442695
    %v3185 = vpow.pop %v3184
    %v3186 = vsel %vm242, %v3183, 0.0
    %3187 = vadd.xlane.f32.xlu0 %v3186
    %v3188 = vpop.xlane.xlu0 %3187
    %v3189 = vsel %vm242, %v3185, 0.0
    %3190 = vadd.xlane.f32.xlu0 %v3189
    %v3191 = vpop.xlane.xlu0 %3190
    %v3192 = vrcp.pop %v3188
    %v3193 = vrcp.pop %v3191
    %v3197 = vsel %vm242, %v3183, 0
    %v3200 = vsel %vm242, %v3185, 0
    %3202 = vmatpush.msra.mxu0 0.0
    %3203 = vmatpush.msra.mxu0 0.0
    %3204 = vmatpush.msra.mxu0 0.0
    %3205 = vmatpush.msra.mxu0 0.0
    %3206 = vmatpush.msra.mxu0 0.0
    %3207 = vmatpush.msra.mxu0 0.0
    %3208 = vmatpush.msra.mxu0 0.0
    %3209 = vmatpush.msra.mxu0 0.0
    %3210 = vmatpush.msra.mxu0 0.0
    %3211 = vmatpush.msra.mxu0 0.0
    %3212 = vmatpush.msra.mxu0 0.0
    %3213 = vmatpush.msra.mxu0 0.0
    %3214 = vmatpush.msra.mxu0 0.0
    %3215 = vmatpush.msra.mxu0 0.0
    %v3216 = vand.u32 %v2975, 4294901760
    %3217 = vmatpush.msra.mxu0 %v3216
    %v3218 = vand.u32 %v2973, 4294901760
    %3219 = vmatpush.msra.mxu0 %v3218
    %v3220 = vand.u32 %v3197, 4294901760
    %v3221 = vsub.f32 %v3197, %v3220
    %v3222 = vand.u32 %v3221, 4294901760
    %v3223 = vsub.f32 %v3221, %v3222
    %v3224 = vand.u32 %v3223, 4294901760
    %3225 = vmatmul.f32.gmra.mxu0 %v3224
    %v3226 = vpop.f32.mrf.mxu0
    %v3227 = vadd.f32 0.0, %v3226
    %v3228 = vand.u32 %v3200, 4294901760
    %v3229 = vsub.f32 %v3200, %v3228
    %v3230 = vand.u32 %v3229, 4294901760
    %v3231 = vsub.f32 %v3229, %v3230
    %v3232 = vand.u32 %v3231, 4294901760
    %3233 = vmatmul.f32.gmra.mxu0 %v3232
    %v3234 = vpop.f32.mrf.mxu0
    %v3235 = vadd.f32 0.0, %v3234
    %3236 = vdwg.mxu0
    %3237 = vmatpush.msra.mxu0 0.0
    %3238 = vmatpush.msra.mxu0 0.0
    %3239 = vmatpush.msra.mxu0 0.0
    %3240 = vmatpush.msra.mxu0 0.0
    %3241 = vmatpush.msra.mxu0 0.0
    %3242 = vmatpush.msra.mxu0 0.0
    %3243 = vmatpush.msra.mxu0 0.0
    %3244 = vmatpush.msra.mxu0 0.0
    %3245 = vmatpush.msra.mxu0 0.0
    %3246 = vmatpush.msra.mxu0 0.0
    %3247 = vmatpush.msra.mxu0 0.0
    %3248 = vmatpush.msra.mxu0 0.0
    %3249 = vmatpush.msra.mxu0 0.0
    %3250 = vmatpush.msra.mxu0 0.0
    %v3251 = vand.u32 %v2975, 4294901760
    %v3252 = vsub.f32 %v2975, %v3251
    %v3253 = vand.u32 %v3252, 4294901760
    %v3254 = vsub.f32 %v3252, %v3253
    %v3255 = vand.u32 %v3254, 4294901760
    %3256 = vmatpush.msra.mxu0 %v3255
    %v3257 = vand.u32 %v2973, 4294901760
    %v3258 = vsub.f32 %v2973, %v3257
    %v3259 = vand.u32 %v3258, 4294901760
    %v3260 = vsub.f32 %v3258, %v3259
    %v3261 = vand.u32 %v3260, 4294901760
    %3262 = vmatpush.msra.mxu0 %v3261
    %v3263 = vand.u32 %v3197, 4294901760
    %3264 = vmatmul.f32.gmra.mxu0 %v3263
    %v3265 = vpop.f32.mrf.mxu0
    %v3266 = vadd.f32 %v3227, %v3265
    %v3267 = vand.u32 %v3200, 4294901760
    %3268 = vmatmul.f32.gmra.mxu0 %v3267
    %v3269 = vpop.f32.mrf.mxu0
    %v3270 = vadd.f32 %v3235, %v3269
    %3271 = vdwg.mxu0
    %3272 = vmatpush.msra.mxu0 0.0
    %3273 = vmatpush.msra.mxu0 0.0
    %3274 = vmatpush.msra.mxu0 0.0
    %3275 = vmatpush.msra.mxu0 0.0
    %3276 = vmatpush.msra.mxu0 0.0
    %3277 = vmatpush.msra.mxu0 0.0
    %3278 = vmatpush.msra.mxu0 0.0
    %3279 = vmatpush.msra.mxu0 0.0
    %3280 = vmatpush.msra.mxu0 0.0
    %3281 = vmatpush.msra.mxu0 0.0
    %3282 = vmatpush.msra.mxu0 0.0
    %3283 = vmatpush.msra.mxu0 0.0
    %3284 = vmatpush.msra.mxu0 0.0
    %3285 = vmatpush.msra.mxu0 0.0
    %v3286 = vand.u32 %v2975, 4294901760
    %v3287 = vsub.f32 %v2975, %v3286
    %3288 = vmatpush.msra.mxu0 %v3287
    %v3289 = vand.u32 %v2973, 4294901760
    %v3290 = vsub.f32 %v2973, %v3289
    %3291 = vmatpush.msra.mxu0 %v3290
    %v3292 = vand.u32 %v3197, 4294901760
    %v3293 = vsub.f32 %v3197, %v3292
    %3294 = vmatmul.f32.gmra.mxu0 %v3293
    %v3295 = vpop.f32.mrf.mxu0
    %v3296 = vadd.f32 %v3266, %v3295
    %v3297 = vand.u32 %v3200, 4294901760
    %v3298 = vsub.f32 %v3200, %v3297
    %3299 = vmatmul.f32.gmra.mxu0 %v3298
    %v3300 = vpop.f32.mrf.mxu0
    %v3301 = vadd.f32 %v3270, %v3300
    %3302 = vdwg.mxu0
    %3303 = vmatpush.msra.mxu0 0.0
    %3304 = vmatpush.msra.mxu0 0.0
    %3305 = vmatpush.msra.mxu0 0.0
    %3306 = vmatpush.msra.mxu0 0.0
    %3307 = vmatpush.msra.mxu0 0.0
    %3308 = vmatpush.msra.mxu0 0.0
    %3309 = vmatpush.msra.mxu0 0.0
    %3310 = vmatpush.msra.mxu0 0.0
    %3311 = vmatpush.msra.mxu0 0.0
    %3312 = vmatpush.msra.mxu0 0.0
    %3313 = vmatpush.msra.mxu0 0.0
    %3314 = vmatpush.msra.mxu0 0.0
    %3315 = vmatpush.msra.mxu0 0.0
    %3316 = vmatpush.msra.mxu0 0.0
    %v3317 = vand.u32 %v2975, 4294901760
    %3318 = vmatpush.msra.mxu0 %v3317
    %v3319 = vand.u32 %v2973, 4294901760
    %3320 = vmatpush.msra.mxu0 %v3319
    %v3321 = vand.u32 %v3197, 4294901760
    %v3322 = vsub.f32 %v3197, %v3321
    %v3323 = vand.u32 %v3322, 4294901760
    %3324 = vmatmul.f32.gmra.mxu0 %v3323
    %v3325 = vpop.f32.mrf.mxu0
    %v3326 = vadd.f32 %v3296, %v3325
    %v3327 = vand.u32 %v3200, 4294901760
    %v3328 = vsub.f32 %v3200, %v3327
    %v3329 = vand.u32 %v3328, 4294901760
    %3330 = vmatmul.f32.gmra.mxu0 %v3329
    %v3331 = vpop.f32.mrf.mxu0
    %v3332 = vadd.f32 %v3301, %v3331
    %3333 = vdwg.mxu0
    %3334 = vmatpush.msra.mxu0 0.0
    %3335 = vmatpush.msra.mxu0 0.0
    %3336 = vmatpush.msra.mxu0 0.0
    %3337 = vmatpush.msra.mxu0 0.0
    %3338 = vmatpush.msra.mxu0 0.0
    %3339 = vmatpush.msra.mxu0 0.0
    %3340 = vmatpush.msra.mxu0 0.0
    %3341 = vmatpush.msra.mxu0 0.0
    %3342 = vmatpush.msra.mxu0 0.0
    %3343 = vmatpush.msra.mxu0 0.0
    %3344 = vmatpush.msra.mxu0 0.0
    %3345 = vmatpush.msra.mxu0 0.0
    %3346 = vmatpush.msra.mxu0 0.0
    %3347 = vmatpush.msra.mxu0 0.0
    %v3348 = vand.u32 %v2975, 4294901760
    %v3349 = vsub.f32 %v2975, %v3348
    %v3350 = vand.u32 %v3349, 4294901760
    %3351 = vmatpush.msra.mxu0 %v3350
    %v3352 = vand.u32 %v2973, 4294901760
    %v3353 = vsub.f32 %v2973, %v3352
    %v3354 = vand.u32 %v3353, 4294901760
    %3355 = vmatpush.msra.mxu0 %v3354
    %v3356 = vand.u32 %v3197, 4294901760
    %3357 = vmatmul.f32.gmra.mxu0 %v3356
    %v3358 = vpop.f32.mrf.mxu0
    %v3359 = vadd.f32 %v3326, %v3358
    %v3360 = vand.u32 %v3200, 4294901760
    %3361 = vmatmul.f32.gmra.mxu0 %v3360
    %v3362 = vpop.f32.mrf.mxu0
    %v3363 = vadd.f32 %v3332, %v3362
    %3364 = vdwg.mxu0
    %3365 = vmatpush.msra.mxu0 0.0
    %3366 = vmatpush.msra.mxu0 0.0
    %3367 = vmatpush.msra.mxu0 0.0
    %3368 = vmatpush.msra.mxu0 0.0
    %3369 = vmatpush.msra.mxu0 0.0
    %3370 = vmatpush.msra.mxu0 0.0
    %3371 = vmatpush.msra.mxu0 0.0
    %3372 = vmatpush.msra.mxu0 0.0
    %3373 = vmatpush.msra.mxu0 0.0
    %3374 = vmatpush.msra.mxu0 0.0
    %3375 = vmatpush.msra.mxu0 0.0
    %3376 = vmatpush.msra.mxu0 0.0
    %3377 = vmatpush.msra.mxu0 0.0
    %3378 = vmatpush.msra.mxu0 0.0
    %v3379 = vand.u32 %v2975, 4294901760
    %3380 = vmatpush.msra.mxu0 %v3379
    %v3381 = vand.u32 %v2973, 4294901760
    %3382 = vmatpush.msra.mxu0 %v3381
    %v3383 = vand.u32 %v3197, 4294901760
    %3384 = vmatmul.f32.gmra.mxu0 %v3383
    %v3385 = vpop.f32.mrf.mxu0
    %v3386 = vadd.f32 %v3359, %v3385
    %v3387 = vand.u32 %v3200, 4294901760
    %3388 = vmatmul.f32.gmra.mxu0 %v3387
    %v3389 = vpop.f32.mrf.mxu0
    %v3390 = vadd.f32 %v3363, %v3389
    %3391 = vdwg.mxu0
    %v3392 = vmul.f32 %v3386, %v3192
    %v3393 = vmul.f32 %v3390, %v3193
    %3394 = vrot.lane.b32.xlu0 %v2533, 112
    %v3395 = vpop.permute.xlu0 %3394
    %3396 = vrot.lane.b32.xlu0 %v2534, 112
    %v3397 = vpop.permute.xlu0 %3396
    %v3398 = vsel %vm41, %v3395, 0
    %v3400 = vsel %vm41, %v3397, 0
    %3402 = vmatpush.xpose.msra.mxu0 0.0
    %3403 = vmatpush.xpose.msra.mxu0 0.0
    %3404 = vmatpush.xpose.msra.mxu0 0.0
    %3405 = vmatpush.xpose.msra.mxu0 0.0
    %3406 = vmatpush.xpose.msra.mxu0 0.0
    %3407 = vmatpush.xpose.msra.mxu0 0.0
    %3408 = vmatpush.xpose.msra.mxu0 0.0
    %3409 = vmatpush.xpose.msra.mxu0 0.0
    %3410 = vmatpush.xpose.msra.mxu0 0.0
    %3411 = vmatpush.xpose.msra.mxu0 0.0
    %3412 = vmatpush.xpose.msra.mxu0 0.0
    %3413 = vmatpush.xpose.msra.mxu0 0.0
    %3414 = vmatpush.xpose.msra.mxu0 0.0
    %3415 = vmatpush.xpose.msra.mxu0 0.0
    %v3416 = vand.u32 %v3400, 4294901760
    %3417 = vmatpush.xpose.msra.mxu0 %v3416
    %v3418 = vand.u32 %v3398, 4294901760
    %3419 = vmatpush.xpose.msra.mxu0 %v3418
    %v3420 = vand.u32 %v3398, 4294901760
    %v3421 = vsub.f32 %v3398, %v3420
    %v3422 = vand.u32 %v3421, 4294901760
    %v3423 = vsub.f32 %v3421, %v3422
    %v3424 = vand.u32 %v3423, 4294901760
    %3425 = vmatmul.f32.gmra.mxu0 %v3424
    %v3426 = vpop.f32.mrf.mxu0
    %v3427 = vadd.f32 0.0, %v3426
    %v3428 = vand.u32 %v3400, 4294901760
    %v3429 = vsub.f32 %v3400, %v3428
    %v3430 = vand.u32 %v3429, 4294901760
    %v3431 = vsub.f32 %v3429, %v3430
    %v3432 = vand.u32 %v3431, 4294901760
    %3433 = vmatmul.f32.gmra.mxu0 %v3432
    %v3434 = vpop.f32.mrf.mxu0
    %v3435 = vadd.f32 0.0, %v3434
    %3436 = vdwg.mxu0
    %3437 = vmatpush.xpose.msra.mxu0 0.0
    %3438 = vmatpush.xpose.msra.mxu0 0.0
    %3439 = vmatpush.xpose.msra.mxu0 0.0
    %3440 = vmatpush.xpose.msra.mxu0 0.0
    %3441 = vmatpush.xpose.msra.mxu0 0.0
    %3442 = vmatpush.xpose.msra.mxu0 0.0
    %3443 = vmatpush.xpose.msra.mxu0 0.0
    %3444 = vmatpush.xpose.msra.mxu0 0.0
    %3445 = vmatpush.xpose.msra.mxu0 0.0
    %3446 = vmatpush.xpose.msra.mxu0 0.0
    %3447 = vmatpush.xpose.msra.mxu0 0.0
    %3448 = vmatpush.xpose.msra.mxu0 0.0
    %3449 = vmatpush.xpose.msra.mxu0 0.0
    %3450 = vmatpush.xpose.msra.mxu0 0.0
    %v3451 = vand.u32 %v3400, 4294901760
    %v3452 = vsub.f32 %v3400, %v3451
    %v3453 = vand.u32 %v3452, 4294901760
    %v3454 = vsub.f32 %v3452, %v3453
    %v3455 = vand.u32 %v3454, 4294901760
    %3456 = vmatpush.xpose.msra.mxu0 %v3455
    %v3457 = vand.u32 %v3398, 4294901760
    %v3458 = vsub.f32 %v3398, %v3457
    %v3459 = vand.u32 %v3458, 4294901760
    %v3460 = vsub.f32 %v3458, %v3459
    %v3461 = vand.u32 %v3460, 4294901760
    %3462 = vmatpush.xpose.msra.mxu0 %v3461
    %v3463 = vand.u32 %v3398, 4294901760
    %3464 = vmatmul.f32.gmra.mxu0 %v3463
    %v3465 = vpop.f32.mrf.mxu0
    %v3466 = vadd.f32 %v3427, %v3465
    %v3467 = vand.u32 %v3400, 4294901760
    %3468 = vmatmul.f32.gmra.mxu0 %v3467
    %v3469 = vpop.f32.mrf.mxu0
    %v3470 = vadd.f32 %v3435, %v3469
    %3471 = vdwg.mxu0
    %3472 = vmatpush.xpose.msra.mxu0 0.0
    %3473 = vmatpush.xpose.msra.mxu0 0.0
    %3474 = vmatpush.xpose.msra.mxu0 0.0
    %3475 = vmatpush.xpose.msra.mxu0 0.0
    %3476 = vmatpush.xpose.msra.mxu0 0.0
    %3477 = vmatpush.xpose.msra.mxu0 0.0
    %3478 = vmatpush.xpose.msra.mxu0 0.0
    %3479 = vmatpush.xpose.msra.mxu0 0.0
    %3480 = vmatpush.xpose.msra.mxu0 0.0
    %3481 = vmatpush.xpose.msra.mxu0 0.0
    %3482 = vmatpush.xpose.msra.mxu0 0.0
    %3483 = vmatpush.xpose.msra.mxu0 0.0
    %3484 = vmatpush.xpose.msra.mxu0 0.0
    %3485 = vmatpush.xpose.msra.mxu0 0.0
    %v3486 = vand.u32 %v3400, 4294901760
    %v3487 = vsub.f32 %v3400, %v3486
    %3488 = vmatpush.xpose.msra.mxu0 %v3487
    %v3489 = vand.u32 %v3398, 4294901760
    %v3490 = vsub.f32 %v3398, %v3489
    %3491 = vmatpush.xpose.msra.mxu0 %v3490
    %v3492 = vand.u32 %v3398, 4294901760
    %v3493 = vsub.f32 %v3398, %v3492
    %3494 = vmatmul.f32.gmra.mxu0 %v3493
    %v3495 = vpop.f32.mrf.mxu0
    %v3496 = vadd.f32 %v3466, %v3495
    %v3497 = vand.u32 %v3400, 4294901760
    %v3498 = vsub.f32 %v3400, %v3497
    %3499 = vmatmul.f32.gmra.mxu0 %v3498
    %v3500 = vpop.f32.mrf.mxu0
    %v3501 = vadd.f32 %v3470, %v3500
    %3502 = vdwg.mxu0
    %3503 = vmatpush.xpose.msra.mxu0 0.0
    %3504 = vmatpush.xpose.msra.mxu0 0.0
    %3505 = vmatpush.xpose.msra.mxu0 0.0
    %3506 = vmatpush.xpose.msra.mxu0 0.0
    %3507 = vmatpush.xpose.msra.mxu0 0.0
    %3508 = vmatpush.xpose.msra.mxu0 0.0
    %3509 = vmatpush.xpose.msra.mxu0 0.0
    %3510 = vmatpush.xpose.msra.mxu0 0.0
    %3511 = vmatpush.xpose.msra.mxu0 0.0
    %3512 = vmatpush.xpose.msra.mxu0 0.0
    %3513 = vmatpush.xpose.msra.mxu0 0.0
    %3514 = vmatpush.xpose.msra.mxu0 0.0
    %3515 = vmatpush.xpose.msra.mxu0 0.0
    %3516 = vmatpush.xpose.msra.mxu0 0.0
    %v3517 = vand.u32 %v3400, 4294901760
    %3518 = vmatpush.xpose.msra.mxu0 %v3517
    %v3519 = vand.u32 %v3398, 4294901760
    %3520 = vmatpush.xpose.msra.mxu0 %v3519
    %v3521 = vand.u32 %v3398, 4294901760
    %v3522 = vsub.f32 %v3398, %v3521
    %v3523 = vand.u32 %v3522, 4294901760
    %3524 = vmatmul.f32.gmra.mxu0 %v3523
    %v3525 = vpop.f32.mrf.mxu0
    %v3526 = vadd.f32 %v3496, %v3525
    %v3527 = vand.u32 %v3400, 4294901760
    %v3528 = vsub.f32 %v3400, %v3527
    %v3529 = vand.u32 %v3528, 4294901760
    %3530 = vmatmul.f32.gmra.mxu0 %v3529
    %v3531 = vpop.f32.mrf.mxu0
    %v3532 = vadd.f32 %v3501, %v3531
    %3533 = vdwg.mxu0
    %3534 = vmatpush.xpose.msra.mxu0 0.0
    %3535 = vmatpush.xpose.msra.mxu0 0.0
    %3536 = vmatpush.xpose.msra.mxu0 0.0
    %3537 = vmatpush.xpose.msra.mxu0 0.0
    %3538 = vmatpush.xpose.msra.mxu0 0.0
    %3539 = vmatpush.xpose.msra.mxu0 0.0
    %3540 = vmatpush.xpose.msra.mxu0 0.0
    %3541 = vmatpush.xpose.msra.mxu0 0.0
    %3542 = vmatpush.xpose.msra.mxu0 0.0
    %3543 = vmatpush.xpose.msra.mxu0 0.0
    %3544 = vmatpush.xpose.msra.mxu0 0.0
    %3545 = vmatpush.xpose.msra.mxu0 0.0
    %3546 = vmatpush.xpose.msra.mxu0 0.0
    %3547 = vmatpush.xpose.msra.mxu0 0.0
    %v3548 = vand.u32 %v3400, 4294901760
    %v3549 = vsub.f32 %v3400, %v3548
    %v3550 = vand.u32 %v3549, 4294901760
    %3551 = vmatpush.xpose.msra.mxu0 %v3550
    %v3552 = vand.u32 %v3398, 4294901760
    %v3553 = vsub.f32 %v3398, %v3552
    %v3554 = vand.u32 %v3553, 4294901760
    %3555 = vmatpush.xpose.msra.mxu0 %v3554
    %v3556 = vand.u32 %v3398, 4294901760
    %3557 = vmatmul.f32.gmra.mxu0 %v3556
    %v3558 = vpop.f32.mrf.mxu0
    %v3559 = vadd.f32 %v3526, %v3558
    %v3560 = vand.u32 %v3400, 4294901760
    %3561 = vmatmul.f32.gmra.mxu0 %v3560
    %v3562 = vpop.f32.mrf.mxu0
    %v3563 = vadd.f32 %v3532, %v3562
    %3564 = vdwg.mxu0
    %3565 = vmatpush.xpose.msra.mxu0 0.0
    %3566 = vmatpush.xpose.msra.mxu0 0.0
    %3567 = vmatpush.xpose.msra.mxu0 0.0
    %3568 = vmatpush.xpose.msra.mxu0 0.0
    %3569 = vmatpush.xpose.msra.mxu0 0.0
    %3570 = vmatpush.xpose.msra.mxu0 0.0
    %3571 = vmatpush.xpose.msra.mxu0 0.0
    %3572 = vmatpush.xpose.msra.mxu0 0.0
    %3573 = vmatpush.xpose.msra.mxu0 0.0
    %3574 = vmatpush.xpose.msra.mxu0 0.0
    %3575 = vmatpush.xpose.msra.mxu0 0.0
    %3576 = vmatpush.xpose.msra.mxu0 0.0
    %3577 = vmatpush.xpose.msra.mxu0 0.0
    %3578 = vmatpush.xpose.msra.mxu0 0.0
    %v3579 = vand.u32 %v3400, 4294901760
    %3580 = vmatpush.xpose.msra.mxu0 %v3579
    %v3581 = vand.u32 %v3398, 4294901760
    %3582 = vmatpush.xpose.msra.mxu0 %v3581
    %v3583 = vand.u32 %v3398, 4294901760
    %3584 = vmatmul.f32.gmra.mxu0 %v3583
    %v3585 = vpop.f32.mrf.mxu0
    %v3586 = vadd.f32 %v3559, %v3585
    %v3587 = vand.u32 %v3400, 4294901760
    %3588 = vmatmul.f32.gmra.mxu0 %v3587
    %v3589 = vpop.f32.mrf.mxu0
    %v3590 = vadd.f32 %v3563, %v3589
    %3591 = vdwg.mxu0
    %v3592 = vmul.f32 %v3586, 0.17677669
    %v3593 = vmul.f32 %v3590, 0.17677669
    %v3594 = vadd.f32 %v3592, %v20
    %v3595 = vadd.f32 %v3593, %v21
    %v3596 = vsel %vm242, %v3594, -inf
    %3597 = vmax.xlane.f32.xlu0 %v3596
    %v3598 = vpop.xlane.xlu0 %3597
    %v3599 = vsel %vm242, %v3595, -inf
    %3600 = vmax.xlane.f32.xlu0 %v3599
    %v3601 = vpop.xlane.xlu0 %3600
    %v3602 = vsub.f32 %v3594, %v3598
    %v3603 = vsub.f32 %v3595, %v3601
    %v3604 = vmul.f32 %v3602, 1.442695
    %v3605 = vpow.pop %v3604
    %v3606 = vmul.f32 %v3603, 1.442695
    %v3607 = vpow.pop %v3606
    %v3608 = vsel %vm242, %v3605, 0.0
    %3609 = vadd.xlane.f32.xlu0 %v3608
    %v3610 = vpop.xlane.xlu0 %3609
    %v3611 = vsel %vm242, %v3607, 0.0
    %3612 = vadd.xlane.f32.xlu0 %v3611
    %v3613 = vpop.xlane.xlu0 %3612
    %v3614 = vrcp.pop %v3610
    %v3615 = vrcp.pop %v3613
    %v3619 = vsel %vm242, %v3605, 0
    %v3622 = vsel %vm242, %v3607, 0
    %3624 = vmatpush.msra.mxu0 0.0
    %3625 = vmatpush.msra.mxu0 0.0
    %3626 = vmatpush.msra.mxu0 0.0
    %3627 = vmatpush.msra.mxu0 0.0
    %3628 = vmatpush.msra.mxu0 0.0
    %3629 = vmatpush.msra.mxu0 0.0
    %3630 = vmatpush.msra.mxu0 0.0
    %3631 = vmatpush.msra.mxu0 0.0
    %3632 = vmatpush.msra.mxu0 0.0
    %3633 = vmatpush.msra.mxu0 0.0
    %3634 = vmatpush.msra.mxu0 0.0
    %3635 = vmatpush.msra.mxu0 0.0
    %3636 = vmatpush.msra.mxu0 0.0
    %3637 = vmatpush.msra.mxu0 0.0
    %v3638 = vand.u32 %v3397, 4294901760
    %3639 = vmatpush.msra.mxu0 %v3638
    %v3640 = vand.u32 %v3395, 4294901760
    %3641 = vmatpush.msra.mxu0 %v3640
    %v3642 = vand.u32 %v3619, 4294901760
    %v3643 = vsub.f32 %v3619, %v3642
    %v3644 = vand.u32 %v3643, 4294901760
    %v3645 = vsub.f32 %v3643, %v3644
    %v3646 = vand.u32 %v3645, 4294901760
    %3647 = vmatmul.f32.gmra.mxu0 %v3646
    %v3648 = vpop.f32.mrf.mxu0
    %v3649 = vadd.f32 0.0, %v3648
    %v3650 = vand.u32 %v3622, 4294901760
    %v3651 = vsub.f32 %v3622, %v3650
    %v3652 = vand.u32 %v3651, 4294901760
    %v3653 = vsub.f32 %v3651, %v3652
    %v3654 = vand.u32 %v3653, 4294901760
    %3655 = vmatmul.f32.gmra.mxu0 %v3654
    %v3656 = vpop.f32.mrf.mxu0
    %v3657 = vadd.f32 0.0, %v3656
    %3658 = vdwg.mxu0
    %3659 = vmatpush.msra.mxu0 0.0
    %3660 = vmatpush.msra.mxu0 0.0
    %3661 = vmatpush.msra.mxu0 0.0
    %3662 = vmatpush.msra.mxu0 0.0
    %3663 = vmatpush.msra.mxu0 0.0
    %3664 = vmatpush.msra.mxu0 0.0
    %3665 = vmatpush.msra.mxu0 0.0
    %3666 = vmatpush.msra.mxu0 0.0
    %3667 = vmatpush.msra.mxu0 0.0
    %3668 = vmatpush.msra.mxu0 0.0
    %3669 = vmatpush.msra.mxu0 0.0
    %3670 = vmatpush.msra.mxu0 0.0
    %3671 = vmatpush.msra.mxu0 0.0
    %3672 = vmatpush.msra.mxu0 0.0
    %v3673 = vand.u32 %v3397, 4294901760
    %v3674 = vsub.f32 %v3397, %v3673
    %v3675 = vand.u32 %v3674, 4294901760
    %v3676 = vsub.f32 %v3674, %v3675
    %v3677 = vand.u32 %v3676, 4294901760
    %3678 = vmatpush.msra.mxu0 %v3677
    %v3679 = vand.u32 %v3395, 4294901760
    %v3680 = vsub.f32 %v3395, %v3679
    %v3681 = vand.u32 %v3680, 4294901760
    %v3682 = vsub.f32 %v3680, %v3681
    %v3683 = vand.u32 %v3682, 4294901760
    %3684 = vmatpush.msra.mxu0 %v3683
    %v3685 = vand.u32 %v3619, 4294901760
    %3686 = vmatmul.f32.gmra.mxu0 %v3685
    %v3687 = vpop.f32.mrf.mxu0
    %v3688 = vadd.f32 %v3649, %v3687
    %v3689 = vand.u32 %v3622, 4294901760
    %3690 = vmatmul.f32.gmra.mxu0 %v3689
    %v3691 = vpop.f32.mrf.mxu0
    %v3692 = vadd.f32 %v3657, %v3691
    %3693 = vdwg.mxu0
    %3694 = vmatpush.msra.mxu0 0.0
    %3695 = vmatpush.msra.mxu0 0.0
    %3696 = vmatpush.msra.mxu0 0.0
    %3697 = vmatpush.msra.mxu0 0.0
    %3698 = vmatpush.msra.mxu0 0.0
    %3699 = vmatpush.msra.mxu0 0.0
    %3700 = vmatpush.msra.mxu0 0.0
    %3701 = vmatpush.msra.mxu0 0.0
    %3702 = vmatpush.msra.mxu0 0.0
    %3703 = vmatpush.msra.mxu0 0.0
    %3704 = vmatpush.msra.mxu0 0.0
    %3705 = vmatpush.msra.mxu0 0.0
    %3706 = vmatpush.msra.mxu0 0.0
    %3707 = vmatpush.msra.mxu0 0.0
    %v3708 = vand.u32 %v3397, 4294901760
    %v3709 = vsub.f32 %v3397, %v3708
    %3710 = vmatpush.msra.mxu0 %v3709
    %v3711 = vand.u32 %v3395, 4294901760
    %v3712 = vsub.f32 %v3395, %v3711
    %3713 = vmatpush.msra.mxu0 %v3712
    %v3714 = vand.u32 %v3619, 4294901760
    %v3715 = vsub.f32 %v3619, %v3714
    %3716 = vmatmul.f32.gmra.mxu0 %v3715
    %v3717 = vpop.f32.mrf.mxu0
    %v3718 = vadd.f32 %v3688, %v3717
    %v3719 = vand.u32 %v3622, 4294901760
    %v3720 = vsub.f32 %v3622, %v3719
    %3721 = vmatmul.f32.gmra.mxu0 %v3720
    %v3722 = vpop.f32.mrf.mxu0
    %v3723 = vadd.f32 %v3692, %v3722
    %3724 = vdwg.mxu0
    %3725 = vmatpush.msra.mxu0 0.0
    %3726 = vmatpush.msra.mxu0 0.0
    %3727 = vmatpush.msra.mxu0 0.0
    %3728 = vmatpush.msra.mxu0 0.0
    %3729 = vmatpush.msra.mxu0 0.0
    %3730 = vmatpush.msra.mxu0 0.0
    %3731 = vmatpush.msra.mxu0 0.0
    %3732 = vmatpush.msra.mxu0 0.0
    %3733 = vmatpush.msra.mxu0 0.0
    %3734 = vmatpush.msra.mxu0 0.0
    %3735 = vmatpush.msra.mxu0 0.0
    %3736 = vmatpush.msra.mxu0 0.0
    %3737 = vmatpush.msra.mxu0 0.0
    %3738 = vmatpush.msra.mxu0 0.0
    %v3739 = vand.u32 %v3397, 4294901760
    %3740 = vmatpush.msra.mxu0 %v3739
    %v3741 = vand.u32 %v3395, 4294901760
    %3742 = vmatpush.msra.mxu0 %v3741
    %v3743 = vand.u32 %v3619, 4294901760
    %v3744 = vsub.f32 %v3619, %v3743
    %v3745 = vand.u32 %v3744, 4294901760
    %3746 = vmatmul.f32.gmra.mxu0 %v3745
    %v3747 = vpop.f32.mrf.mxu0
    %v3748 = vadd.f32 %v3718, %v3747
    %v3749 = vand.u32 %v3622, 4294901760
    %v3750 = vsub.f32 %v3622, %v3749
    %v3751 = vand.u32 %v3750, 4294901760
    %3752 = vmatmul.f32.gmra.mxu0 %v3751
    %v3753 = vpop.f32.mrf.mxu0
    %v3754 = vadd.f32 %v3723, %v3753
    %3755 = vdwg.mxu0
    %3756 = vmatpush.msra.mxu0 0.0
    %3757 = vmatpush.msra.mxu0 0.0
    %3758 = vmatpush.msra.mxu0 0.0
    %3759 = vmatpush.msra.mxu0 0.0
    %3760 = vmatpush.msra.mxu0 0.0
    %3761 = vmatpush.msra.mxu0 0.0
    %3762 = vmatpush.msra.mxu0 0.0
    %3763 = vmatpush.msra.mxu0 0.0
    %3764 = vmatpush.msra.mxu0 0.0
    %3765 = vmatpush.msra.mxu0 0.0
    %3766 = vmatpush.msra.mxu0 0.0
    %3767 = vmatpush.msra.mxu0 0.0
    %3768 = vmatpush.msra.mxu0 0.0
    %3769 = vmatpush.msra.mxu0 0.0
    %v3770 = vand.u32 %v3397, 4294901760
    %v3771 = vsub.f32 %v3397, %v3770
    %v3772 = vand.u32 %v3771, 4294901760
    %3773 = vmatpush.msra.mxu0 %v3772
    %v3774 = vand.u32 %v3395, 4294901760
    %v3775 = vsub.f32 %v3395, %v3774
    %v3776 = vand.u32 %v3775, 4294901760
    %3777 = vmatpush.msra.mxu0 %v3776
    %v3778 = vand.u32 %v3619, 4294901760
    %3779 = vmatmul.f32.gmra.mxu0 %v3778
    %v3780 = vpop.f32.mrf.mxu0
    %v3781 = vadd.f32 %v3748, %v3780
    %v3782 = vand.u32 %v3622, 4294901760
    %3783 = vmatmul.f32.gmra.mxu0 %v3782
    %v3784 = vpop.f32.mrf.mxu0
    %v3785 = vadd.f32 %v3754, %v3784
    %3786 = vdwg.mxu0
    %3787 = vmatpush.msra.mxu0 0.0
    %3788 = vmatpush.msra.mxu0 0.0
    %3789 = vmatpush.msra.mxu0 0.0
    %3790 = vmatpush.msra.mxu0 0.0
    %3791 = vmatpush.msra.mxu0 0.0
    %3792 = vmatpush.msra.mxu0 0.0
    %3793 = vmatpush.msra.mxu0 0.0
    %3794 = vmatpush.msra.mxu0 0.0
    %3795 = vmatpush.msra.mxu0 0.0
    %3796 = vmatpush.msra.mxu0 0.0
    %3797 = vmatpush.msra.mxu0 0.0
    %3798 = vmatpush.msra.mxu0 0.0
    %3799 = vmatpush.msra.mxu0 0.0
    %3800 = vmatpush.msra.mxu0 0.0
    %v3801 = vand.u32 %v3397, 4294901760
    %3802 = vmatpush.msra.mxu0 %v3801
    %v3803 = vand.u32 %v3395, 4294901760
    %3804 = vmatpush.msra.mxu0 %v3803
    %v3805 = vand.u32 %v3619, 4294901760
    %3806 = vmatmul.f32.gmra.mxu0 %v3805
    %v3807 = vpop.f32.mrf.mxu0
    %v3808 = vadd.f32 %v3781, %v3807
    %v3809 = vand.u32 %v3622, 4294901760
    %3810 = vmatmul.f32.gmra.mxu0 %v3809
    %v3811 = vpop.f32.mrf.mxu0
    %v3812 = vadd.f32 %v3785, %v3811
    %3813 = vdwg.mxu0
    %v3814 = vmul.f32 %v3808, %v3614
    %v3815 = vmul.f32 %v3812, %v3615
    %3816 = vrot.lane.b32.xlu0 %v2533, 104
    %v3817 = vpop.permute.xlu0 %3816
    %3818 = vrot.lane.b32.xlu0 %v2534, 104
    %v3819 = vpop.permute.xlu0 %3818
    %v3820 = vsel %vm41, %v3817, 0
    %v3822 = vsel %vm41, %v3819, 0
    %3824 = vmatpush.xpose.msra.mxu0 0.0
    %3825 = vmatpush.xpose.msra.mxu0 0.0
    %3826 = vmatpush.xpose.msra.mxu0 0.0
    %3827 = vmatpush.xpose.msra.mxu0 0.0
    %3828 = vmatpush.xpose.msra.mxu0 0.0
    %3829 = vmatpush.xpose.msra.mxu0 0.0
    %3830 = vmatpush.xpose.msra.mxu0 0.0
    %3831 = vmatpush.xpose.msra.mxu0 0.0
    %3832 = vmatpush.xpose.msra.mxu0 0.0
    %3833 = vmatpush.xpose.msra.mxu0 0.0
    %3834 = vmatpush.xpose.msra.mxu0 0.0
    %3835 = vmatpush.xpose.msra.mxu0 0.0
    %3836 = vmatpush.xpose.msra.mxu0 0.0
    %3837 = vmatpush.xpose.msra.mxu0 0.0
    %v3838 = vand.u32 %v3822, 4294901760
    %3839 = vmatpush.xpose.msra.mxu0 %v3838
    %v3840 = vand.u32 %v3820, 4294901760
    %3841 = vmatpush.xpose.msra.mxu0 %v3840
    %v3842 = vand.u32 %v3820, 4294901760
    %v3843 = vsub.f32 %v3820, %v3842
    %v3844 = vand.u32 %v3843, 4294901760
    %v3845 = vsub.f32 %v3843, %v3844
    %v3846 = vand.u32 %v3845, 4294901760
    %3847 = vmatmul.f32.gmra.mxu0 %v3846
    %v3848 = vpop.f32.mrf.mxu0
    %v3849 = vadd.f32 0.0, %v3848
    %v3850 = vand.u32 %v3822, 4294901760
    %v3851 = vsub.f32 %v3822, %v3850
    %v3852 = vand.u32 %v3851, 4294901760
    %v3853 = vsub.f32 %v3851, %v3852
    %v3854 = vand.u32 %v3853, 4294901760
    %3855 = vmatmul.f32.gmra.mxu0 %v3854
    %v3856 = vpop.f32.mrf.mxu0
    %v3857 = vadd.f32 0.0, %v3856
    %3858 = vdwg.mxu0
    %3859 = vmatpush.xpose.msra.mxu0 0.0
    %3860 = vmatpush.xpose.msra.mxu0 0.0
    %3861 = vmatpush.xpose.msra.mxu0 0.0
    %3862 = vmatpush.xpose.msra.mxu0 0.0
    %3863 = vmatpush.xpose.msra.mxu0 0.0
    %3864 = vmatpush.xpose.msra.mxu0 0.0
    %3865 = vmatpush.xpose.msra.mxu0 0.0
    %3866 = vmatpush.xpose.msra.mxu0 0.0
    %3867 = vmatpush.xpose.msra.mxu0 0.0
    %3868 = vmatpush.xpose.msra.mxu0 0.0
    %3869 = vmatpush.xpose.msra.mxu0 0.0
    %3870 = vmatpush.xpose.msra.mxu0 0.0
    %3871 = vmatpush.xpose.msra.mxu0 0.0
    %3872 = vmatpush.xpose.msra.mxu0 0.0
    %v3873 = vand.u32 %v3822, 4294901760
    %v3874 = vsub.f32 %v3822, %v3873
    %v3875 = vand.u32 %v3874, 4294901760
    %v3876 = vsub.f32 %v3874, %v3875
    %v3877 = vand.u32 %v3876, 4294901760
    %3878 = vmatpush.xpose.msra.mxu0 %v3877
    %v3879 = vand.u32 %v3820, 4294901760
    %v3880 = vsub.f32 %v3820, %v3879
    %v3881 = vand.u32 %v3880, 4294901760
    %v3882 = vsub.f32 %v3880, %v3881
    %v3883 = vand.u32 %v3882, 4294901760
    %3884 = vmatpush.xpose.msra.mxu0 %v3883
    %v3885 = vand.u32 %v3820, 4294901760
    %3886 = vmatmul.f32.gmra.mxu0 %v3885
    %v3887 = vpop.f32.mrf.mxu0
    %v3888 = vadd.f32 %v3849, %v3887
    %v3889 = vand.u32 %v3822, 4294901760
    %3890 = vmatmul.f32.gmra.mxu0 %v3889
    %v3891 = vpop.f32.mrf.mxu0
    %v3892 = vadd.f32 %v3857, %v3891
    %3893 = vdwg.mxu0
    %3894 = vmatpush.xpose.msra.mxu0 0.0
    %3895 = vmatpush.xpose.msra.mxu0 0.0
    %3896 = vmatpush.xpose.msra.mxu0 0.0
    %3897 = vmatpush.xpose.msra.mxu0 0.0
    %3898 = vmatpush.xpose.msra.mxu0 0.0
    %3899 = vmatpush.xpose.msra.mxu0 0.0
    %3900 = vmatpush.xpose.msra.mxu0 0.0
    %3901 = vmatpush.xpose.msra.mxu0 0.0
    %3902 = vmatpush.xpose.msra.mxu0 0.0
    %3903 = vmatpush.xpose.msra.mxu0 0.0
    %3904 = vmatpush.xpose.msra.mxu0 0.0
    %3905 = vmatpush.xpose.msra.mxu0 0.0
    %3906 = vmatpush.xpose.msra.mxu0 0.0
    %3907 = vmatpush.xpose.msra.mxu0 0.0
    %v3908 = vand.u32 %v3822, 4294901760
    %v3909 = vsub.f32 %v3822, %v3908
    %3910 = vmatpush.xpose.msra.mxu0 %v3909
    %v3911 = vand.u32 %v3820, 4294901760
    %v3912 = vsub.f32 %v3820, %v3911
    %3913 = vmatpush.xpose.msra.mxu0 %v3912
    %v3914 = vand.u32 %v3820, 4294901760
    %v3915 = vsub.f32 %v3820, %v3914
    %3916 = vmatmul.f32.gmra.mxu0 %v3915
    %v3917 = vpop.f32.mrf.mxu0
    %v3918 = vadd.f32 %v3888, %v3917
    %v3919 = vand.u32 %v3822, 4294901760
    %v3920 = vsub.f32 %v3822, %v3919
    %3921 = vmatmul.f32.gmra.mxu0 %v3920
    %v3922 = vpop.f32.mrf.mxu0
    %v3923 = vadd.f32 %v3892, %v3922
    %3924 = vdwg.mxu0
    %3925 = vmatpush.xpose.msra.mxu0 0.0
    %3926 = vmatpush.xpose.msra.mxu0 0.0
    %3927 = vmatpush.xpose.msra.mxu0 0.0
    %3928 = vmatpush.xpose.msra.mxu0 0.0
    %3929 = vmatpush.xpose.msra.mxu0 0.0
    %3930 = vmatpush.xpose.msra.mxu0 0.0
    %3931 = vmatpush.xpose.msra.mxu0 0.0
    %3932 = vmatpush.xpose.msra.mxu0 0.0
    %3933 = vmatpush.xpose.msra.mxu0 0.0
    %3934 = vmatpush.xpose.msra.mxu0 0.0
    %3935 = vmatpush.xpose.msra.mxu0 0.0
    %3936 = vmatpush.xpose.msra.mxu0 0.0
    %3937 = vmatpush.xpose.msra.mxu0 0.0
    %3938 = vmatpush.xpose.msra.mxu0 0.0
    %v3939 = vand.u32 %v3822, 4294901760
    %3940 = vmatpush.xpose.msra.mxu0 %v3939
    %v3941 = vand.u32 %v3820, 4294901760
    %3942 = vmatpush.xpose.msra.mxu0 %v3941
    %v3943 = vand.u32 %v3820, 4294901760
    %v3944 = vsub.f32 %v3820, %v3943
    %v3945 = vand.u32 %v3944, 4294901760
    %3946 = vmatmul.f32.gmra.mxu0 %v3945
    %v3947 = vpop.f32.mrf.mxu0
    %v3948 = vadd.f32 %v3918, %v3947
    %v3949 = vand.u32 %v3822, 4294901760
    %v3950 = vsub.f32 %v3822, %v3949
    %v3951 = vand.u32 %v3950, 4294901760
    %3952 = vmatmul.f32.gmra.mxu0 %v3951
    %v3953 = vpop.f32.mrf.mxu0
    %v3954 = vadd.f32 %v3923, %v3953
    %3955 = vdwg.mxu0
    %3956 = vmatpush.xpose.msra.mxu0 0.0
    %3957 = vmatpush.xpose.msra.mxu0 0.0
    %3958 = vmatpush.xpose.msra.mxu0 0.0
    %3959 = vmatpush.xpose.msra.mxu0 0.0
    %3960 = vmatpush.xpose.msra.mxu0 0.0
    %3961 = vmatpush.xpose.msra.mxu0 0.0
    %3962 = vmatpush.xpose.msra.mxu0 0.0
    %3963 = vmatpush.xpose.msra.mxu0 0.0
    %3964 = vmatpush.xpose.msra.mxu0 0.0
    %3965 = vmatpush.xpose.msra.mxu0 0.0
    %3966 = vmatpush.xpose.msra.mxu0 0.0
    %3967 = vmatpush.xpose.msra.mxu0 0.0
    %3968 = vmatpush.xpose.msra.mxu0 0.0
    %3969 = vmatpush.xpose.msra.mxu0 0.0
    %v3970 = vand.u32 %v3822, 4294901760
    %v3971 = vsub.f32 %v3822, %v3970
    %v3972 = vand.u32 %v3971, 4294901760
    %3973 = vmatpush.xpose.msra.mxu0 %v3972
    %v3974 = vand.u32 %v3820, 4294901760
    %v3975 = vsub.f32 %v3820, %v3974
    %v3976 = vand.u32 %v3975, 4294901760
    %3977 = vmatpush.xpose.msra.mxu0 %v3976
    %v3978 = vand.u32 %v3820, 4294901760
    %3979 = vmatmul.f32.gmra.mxu0 %v3978
    %v3980 = vpop.f32.mrf.mxu0
    %v3981 = vadd.f32 %v3948, %v3980
    %v3982 = vand.u32 %v3822, 4294901760
    %3983 = vmatmul.f32.gmra.mxu0 %v3982
    %v3984 = vpop.f32.mrf.mxu0
    %v3985 = vadd.f32 %v3954, %v3984
    %3986 = vdwg.mxu0
    %3987 = vmatpush.xpose.msra.mxu0 0.0
    %3988 = vmatpush.xpose.msra.mxu0 0.0
    %3989 = vmatpush.xpose.msra.mxu0 0.0
    %3990 = vmatpush.xpose.msra.mxu0 0.0
    %3991 = vmatpush.xpose.msra.mxu0 0.0
    %3992 = vmatpush.xpose.msra.mxu0 0.0
    %3993 = vmatpush.xpose.msra.mxu0 0.0
    %3994 = vmatpush.xpose.msra.mxu0 0.0
    %3995 = vmatpush.xpose.msra.mxu0 0.0
    %3996 = vmatpush.xpose.msra.mxu0 0.0
    %3997 = vmatpush.xpose.msra.mxu0 0.0
    %3998 = vmatpush.xpose.msra.mxu0 0.0
    %3999 = vmatpush.xpose.msra.mxu0 0.0
    %4000 = vmatpush.xpose.msra.mxu0 0.0
    %v4001 = vand.u32 %v3822, 4294901760
    %4002 = vmatpush.xpose.msra.mxu0 %v4001
    %v4003 = vand.u32 %v3820, 4294901760
    %4004 = vmatpush.xpose.msra.mxu0 %v4003
    %v4005 = vand.u32 %v3820, 4294901760
    %4006 = vmatmul.f32.gmra.mxu0 %v4005
    %v4007 = vpop.f32.mrf.mxu0
    %v4008 = vadd.f32 %v3981, %v4007
    %v4009 = vand.u32 %v3822, 4294901760
    %4010 = vmatmul.f32.gmra.mxu0 %v4009
    %v4011 = vpop.f32.mrf.mxu0
    %v4012 = vadd.f32 %v3985, %v4011
    %4013 = vdwg.mxu0
    %v4014 = vmul.f32 %v4008, 0.17677669
    %v4015 = vmul.f32 %v4012, 0.17677669
    %v4016 = vadd.f32 %v4014, %v20
    %v4017 = vadd.f32 %v4015, %v21
    %v4018 = vsel %vm242, %v4016, -inf
    %4019 = vmax.xlane.f32.xlu0 %v4018
    %v4020 = vpop.xlane.xlu0 %4019
    %v4021 = vsel %vm242, %v4017, -inf
    %4022 = vmax.xlane.f32.xlu0 %v4021
    %v4023 = vpop.xlane.xlu0 %4022
    %v4024 = vsub.f32 %v4016, %v4020
    %v4025 = vsub.f32 %v4017, %v4023
    %v4026 = vmul.f32 %v4024, 1.442695
    %v4027 = vpow.pop %v4026
    %v4028 = vmul.f32 %v4025, 1.442695
    %v4029 = vpow.pop %v4028
    %v4030 = vsel %vm242, %v4027, 0.0
    %4031 = vadd.xlane.f32.xlu0 %v4030
    %v4032 = vpop.xlane.xlu0 %4031
    %v4033 = vsel %vm242, %v4029, 0.0
    %4034 = vadd.xlane.f32.xlu0 %v4033
    %v4035 = vpop.xlane.xlu0 %4034
    %v4036 = vrcp.pop %v4032
    %v4037 = vrcp.pop %v4035
    %v4041 = vsel %vm242, %v4027, 0
    %v4044 = vsel %vm242, %v4029, 0
    %4046 = vmatpush.msra.mxu0 0.0
    %4047 = vmatpush.msra.mxu0 0.0
    %4048 = vmatpush.msra.mxu0 0.0
    %4049 = vmatpush.msra.mxu0 0.0
    %4050 = vmatpush.msra.mxu0 0.0
    %4051 = vmatpush.msra.mxu0 0.0
    %4052 = vmatpush.msra.mxu0 0.0
    %4053 = vmatpush.msra.mxu0 0.0
    %4054 = vmatpush.msra.mxu0 0.0
    %4055 = vmatpush.msra.mxu0 0.0
    %4056 = vmatpush.msra.mxu0 0.0
    %4057 = vmatpush.msra.mxu0 0.0
    %4058 = vmatpush.msra.mxu0 0.0
    %4059 = vmatpush.msra.mxu0 0.0
    %v4060 = vand.u32 %v3819, 4294901760
    %4061 = vmatpush.msra.mxu0 %v4060
    %v4062 = vand.u32 %v3817, 4294901760
    %4063 = vmatpush.msra.mxu0 %v4062
    %v4064 = vand.u32 %v4041, 4294901760
    %v4065 = vsub.f32 %v4041, %v4064
    %v4066 = vand.u32 %v4065, 4294901760
    %v4067 = vsub.f32 %v4065, %v4066
    %v4068 = vand.u32 %v4067, 4294901760
    %4069 = vmatmul.f32.gmra.mxu0 %v4068
    %v4070 = vpop.f32.mrf.mxu0
    %v4071 = vadd.f32 0.0, %v4070
    %v4072 = vand.u32 %v4044, 4294901760
    %v4073 = vsub.f32 %v4044, %v4072
    %v4074 = vand.u32 %v4073, 4294901760
    %v4075 = vsub.f32 %v4073, %v4074
    %v4076 = vand.u32 %v4075, 4294901760
    %4077 = vmatmul.f32.gmra.mxu0 %v4076
    %v4078 = vpop.f32.mrf.mxu0
    %v4079 = vadd.f32 0.0, %v4078
    %4080 = vdwg.mxu0
    %4081 = vmatpush.msra.mxu0 0.0
    %4082 = vmatpush.msra.mxu0 0.0
    %4083 = vmatpush.msra.mxu0 0.0
    %4084 = vmatpush.msra.mxu0 0.0
    %4085 = vmatpush.msra.mxu0 0.0
    %4086 = vmatpush.msra.mxu0 0.0
    %4087 = vmatpush.msra.mxu0 0.0
    %4088 = vmatpush.msra.mxu0 0.0
    %4089 = vmatpush.msra.mxu0 0.0
    %4090 = vmatpush.msra.mxu0 0.0
    %4091 = vmatpush.msra.mxu0 0.0
    %4092 = vmatpush.msra.mxu0 0.0
    %4093 = vmatpush.msra.mxu0 0.0
    %4094 = vmatpush.msra.mxu0 0.0
    %v4095 = vand.u32 %v3819, 4294901760
    %v4096 = vsub.f32 %v3819, %v4095
    %v4097 = vand.u32 %v4096, 4294901760
    %v4098 = vsub.f32 %v4096, %v4097
    %v4099 = vand.u32 %v4098, 4294901760
    %4100 = vmatpush.msra.mxu0 %v4099
    %v4101 = vand.u32 %v3817, 4294901760
    %v4102 = vsub.f32 %v3817, %v4101
    %v4103 = vand.u32 %v4102, 4294901760
    %v4104 = vsub.f32 %v4102, %v4103
    %v4105 = vand.u32 %v4104, 4294901760
    %4106 = vmatpush.msra.mxu0 %v4105
    %v4107 = vand.u32 %v4041, 4294901760
    %4108 = vmatmul.f32.gmra.mxu0 %v4107
    %v4109 = vpop.f32.mrf.mxu0
    %v4110 = vadd.f32 %v4071, %v4109
    %v4111 = vand.u32 %v4044, 4294901760
    %4112 = vmatmul.f32.gmra.mxu0 %v4111
    %v4113 = vpop.f32.mrf.mxu0
    %v4114 = vadd.f32 %v4079, %v4113
    %4115 = vdwg.mxu0
    %4116 = vmatpush.msra.mxu0 0.0
    %4117 = vmatpush.msra.mxu0 0.0
    %4118 = vmatpush.msra.mxu0 0.0
    %4119 = vmatpush.msra.mxu0 0.0
    %4120 = vmatpush.msra.mxu0 0.0
    %4121 = vmatpush.msra.mxu0 0.0
    %4122 = vmatpush.msra.mxu0 0.0
    %4123 = vmatpush.msra.mxu0 0.0
    %4124 = vmatpush.msra.mxu0 0.0
    %4125 = vmatpush.msra.mxu0 0.0
    %4126 = vmatpush.msra.mxu0 0.0
    %4127 = vmatpush.msra.mxu0 0.0
    %4128 = vmatpush.msra.mxu0 0.0
    %4129 = vmatpush.msra.mxu0 0.0
    %v4130 = vand.u32 %v3819, 4294901760
    %v4131 = vsub.f32 %v3819, %v4130
    %4132 = vmatpush.msra.mxu0 %v4131
    %v4133 = vand.u32 %v3817, 4294901760
    %v4134 = vsub.f32 %v3817, %v4133
    %4135 = vmatpush.msra.mxu0 %v4134
    %v4136 = vand.u32 %v4041, 4294901760
    %v4137 = vsub.f32 %v4041, %v4136
    %4138 = vmatmul.f32.gmra.mxu0 %v4137
    %v4139 = vpop.f32.mrf.mxu0
    %v4140 = vadd.f32 %v4110, %v4139
    %v4141 = vand.u32 %v4044, 4294901760
    %v4142 = vsub.f32 %v4044, %v4141
    %4143 = vmatmul.f32.gmra.mxu0 %v4142
    %v4144 = vpop.f32.mrf.mxu0
    %v4145 = vadd.f32 %v4114, %v4144
    %4146 = vdwg.mxu0
    %4147 = vmatpush.msra.mxu0 0.0
    %4148 = vmatpush.msra.mxu0 0.0
    %4149 = vmatpush.msra.mxu0 0.0
    %4150 = vmatpush.msra.mxu0 0.0
    %4151 = vmatpush.msra.mxu0 0.0
    %4152 = vmatpush.msra.mxu0 0.0
    %4153 = vmatpush.msra.mxu0 0.0
    %4154 = vmatpush.msra.mxu0 0.0
    %4155 = vmatpush.msra.mxu0 0.0
    %4156 = vmatpush.msra.mxu0 0.0
    %4157 = vmatpush.msra.mxu0 0.0
    %4158 = vmatpush.msra.mxu0 0.0
    %4159 = vmatpush.msra.mxu0 0.0
    %4160 = vmatpush.msra.mxu0 0.0
    %v4161 = vand.u32 %v3819, 4294901760
    %4162 = vmatpush.msra.mxu0 %v4161
    %v4163 = vand.u32 %v3817, 4294901760
    %4164 = vmatpush.msra.mxu0 %v4163
    %v4165 = vand.u32 %v4041, 4294901760
    %v4166 = vsub.f32 %v4041, %v4165
    %v4167 = vand.u32 %v4166, 4294901760
    %4168 = vmatmul.f32.gmra.mxu0 %v4167
    %v4169 = vpop.f32.mrf.mxu0
    %v4170 = vadd.f32 %v4140, %v4169
    %v4171 = vand.u32 %v4044, 4294901760
    %v4172 = vsub.f32 %v4044, %v4171
    %v4173 = vand.u32 %v4172, 4294901760
    %4174 = vmatmul.f32.gmra.mxu0 %v4173
    %v4175 = vpop.f32.mrf.mxu0
    %v4176 = vadd.f32 %v4145, %v4175
    %4177 = vdwg.mxu0
    %4178 = vmatpush.msra.mxu0 0.0
    %4179 = vmatpush.msra.mxu0 0.0
    %4180 = vmatpush.msra.mxu0 0.0
    %4181 = vmatpush.msra.mxu0 0.0
    %4182 = vmatpush.msra.mxu0 0.0
    %4183 = vmatpush.msra.mxu0 0.0
    %4184 = vmatpush.msra.mxu0 0.0
    %4185 = vmatpush.msra.mxu0 0.0
    %4186 = vmatpush.msra.mxu0 0.0
    %4187 = vmatpush.msra.mxu0 0.0
    %4188 = vmatpush.msra.mxu0 0.0
    %4189 = vmatpush.msra.mxu0 0.0
    %4190 = vmatpush.msra.mxu0 0.0
    %4191 = vmatpush.msra.mxu0 0.0
    %v4192 = vand.u32 %v3819, 4294901760
    %v4193 = vsub.f32 %v3819, %v4192
    %v4194 = vand.u32 %v4193, 4294901760
    %4195 = vmatpush.msra.mxu0 %v4194
    %v4196 = vand.u32 %v3817, 4294901760
    %v4197 = vsub.f32 %v3817, %v4196
    %v4198 = vand.u32 %v4197, 4294901760
    %4199 = vmatpush.msra.mxu0 %v4198
    %v4200 = vand.u32 %v4041, 4294901760
    %4201 = vmatmul.f32.gmra.mxu0 %v4200
    %v4202 = vpop.f32.mrf.mxu0
    %v4203 = vadd.f32 %v4170, %v4202
    %v4204 = vand.u32 %v4044, 4294901760
    %4205 = vmatmul.f32.gmra.mxu0 %v4204
    %v4206 = vpop.f32.mrf.mxu0
    %v4207 = vadd.f32 %v4176, %v4206
    %4208 = vdwg.mxu0
    %4209 = vmatpush.msra.mxu0 0.0
    %4210 = vmatpush.msra.mxu0 0.0
    %4211 = vmatpush.msra.mxu0 0.0
    %4212 = vmatpush.msra.mxu0 0.0
    %4213 = vmatpush.msra.mxu0 0.0
    %4214 = vmatpush.msra.mxu0 0.0
    %4215 = vmatpush.msra.mxu0 0.0
    %4216 = vmatpush.msra.mxu0 0.0
    %4217 = vmatpush.msra.mxu0 0.0
    %4218 = vmatpush.msra.mxu0 0.0
    %4219 = vmatpush.msra.mxu0 0.0
    %4220 = vmatpush.msra.mxu0 0.0
    %4221 = vmatpush.msra.mxu0 0.0
    %4222 = vmatpush.msra.mxu0 0.0
    %v4223 = vand.u32 %v3819, 4294901760
    %4224 = vmatpush.msra.mxu0 %v4223
    %v4225 = vand.u32 %v3817, 4294901760
    %4226 = vmatpush.msra.mxu0 %v4225
    %v4227 = vand.u32 %v4041, 4294901760
    %4228 = vmatmul.f32.gmra.mxu0 %v4227
    %v4229 = vpop.f32.mrf.mxu0
    %v4230 = vadd.f32 %v4203, %v4229
    %v4231 = vand.u32 %v4044, 4294901760
    %4232 = vmatmul.f32.gmra.mxu0 %v4231
    %v4233 = vpop.f32.mrf.mxu0
    %v4234 = vadd.f32 %v4207, %v4233
    %4235 = vdwg.mxu0
    %v4236 = vmul.f32 %v4230, %v4036
    %v4237 = vmul.f32 %v4234, %v4037
    %4240 = vrot.lane.b32.xlu0 %v3392, 8
    %v4241 = vpop.permute.xlu0 %4240
    %4242 = vrot.lane.b32.xlu0 %v3393, 8
    %v4243 = vpop.permute.xlu0 %4242
    %4248 = vrot.lane.b32.xlu0 %v3814, 16
    %v4249 = vpop.permute.xlu0 %4248
    %4250 = vrot.lane.b32.xlu0 %v3815, 16
    %v4251 = vpop.permute.xlu0 %4250
    %4256 = vrot.lane.b32.xlu0 %v4236, 24
    %v4257 = vpop.permute.xlu0 %4256
    %4258 = vrot.lane.b32.xlu0 %v4237, 24
    %v4259 = vpop.permute.xlu0 %4258
    %v4262 = vsel %vm41, %v2970, %v4241
    %v4263 = vsel %vm41, %v2971, %v4243
    %v4264 = vsel %vm242, %v4262, %v4249
    %v4265 = vsel %vm242, %v4263, %v4251
    %v4266 = vsel %vm1755, %v4264, %v4257
    %v4267 = vsel %vm1755, %v4265, %v4259
    %v4268 = vperm.slane %v2547, 0
    %v4270 = vsel %vm1759, %v4266, 0
    %v4273 = vsel %vm1759, %v4267, 0
    %4275 = vmatpush.msra.mxu0 0.0
    %4276 = vmatpush.msra.mxu0 0.0
    %4277 = vmatpush.msra.mxu0 0.0
    %4278 = vmatpush.msra.mxu0 0.0
    %4279 = vmatpush.msra.mxu0 0.0
    %4280 = vmatpush.msra.mxu0 0.0
    %4281 = vmatpush.msra.mxu0 0.0
    %4282 = vmatpush.msra.mxu0 0.0
    %4283 = vmatpush.msra.mxu0 0.0
    %4284 = vmatpush.msra.mxu0 0.0
    %4285 = vmatpush.msra.mxu0 0.0
    %4286 = vmatpush.msra.mxu0 0.0
    %v4287 = vand.u32 %v2546, 4294901760
    %4288 = vmatpush.msra.mxu0 %v4287
    %v4289 = vand.u32 %v2545, 4294901760
    %4290 = vmatpush.msra.mxu0 %v4289
    %v4291 = vand.u32 %v2544, 4294901760
    %4292 = vmatpush.msra.mxu0 %v4291
    %v4293 = vand.u32 %v2543, 4294901760
    %4294 = vmatpush.msra.mxu0 %v4293
    %v4295 = vand.u32 %v4270, 4294901760
    %v4296 = vsub.f32 %v4270, %v4295
    %v4297 = vand.u32 %v4296, 4294901760
    %v4298 = vsub.f32 %v4296, %v4297
    %v4299 = vand.u32 %v4298, 4294901760
    %4300 = vmatmul.f32.gmra.mxu0 %v4299
    %v4301 = vpop.f32.mrf.mxu0
    %v4302 = vadd.f32 %v4268, %v4301
    %v4303 = vand.u32 %v4273, 4294901760
    %v4304 = vsub.f32 %v4273, %v4303
    %v4305 = vand.u32 %v4304, 4294901760
    %v4306 = vsub.f32 %v4304, %v4305
    %v4307 = vand.u32 %v4306, 4294901760
    %4308 = vmatmul.f32.gmra.mxu0 %v4307
    %v4309 = vpop.f32.mrf.mxu0
    %v4310 = vadd.f32 %v4268, %v4309
    %4311 = vdwg.mxu0
    %4312 = vmatpush.msra.mxu0 0.0
    %4313 = vmatpush.msra.mxu0 0.0
    %4314 = vmatpush.msra.mxu0 0.0
    %4315 = vmatpush.msra.mxu0 0.0
    %4316 = vmatpush.msra.mxu0 0.0
    %4317 = vmatpush.msra.mxu0 0.0
    %4318 = vmatpush.msra.mxu0 0.0
    %4319 = vmatpush.msra.mxu0 0.0
    %4320 = vmatpush.msra.mxu0 0.0
    %4321 = vmatpush.msra.mxu0 0.0
    %4322 = vmatpush.msra.mxu0 0.0
    %4323 = vmatpush.msra.mxu0 0.0
    %v4324 = vand.u32 %v2546, 4294901760
    %v4325 = vsub.f32 %v2546, %v4324
    %v4326 = vand.u32 %v4325, 4294901760
    %v4327 = vsub.f32 %v4325, %v4326
    %v4328 = vand.u32 %v4327, 4294901760
    %4329 = vmatpush.msra.mxu0 %v4328
    %v4330 = vand.u32 %v2545, 4294901760
    %v4331 = vsub.f32 %v2545, %v4330
    %v4332 = vand.u32 %v4331, 4294901760
    %v4333 = vsub.f32 %v4331, %v4332
    %v4334 = vand.u32 %v4333, 4294901760
    %4335 = vmatpush.msra.mxu0 %v4334
    %v4336 = vand.u32 %v2544, 4294901760
    %v4337 = vsub.f32 %v2544, %v4336
    %v4338 = vand.u32 %v4337, 4294901760
    %v4339 = vsub.f32 %v4337, %v4338
    %v4340 = vand.u32 %v4339, 4294901760
    %4341 = vmatpush.msra.mxu0 %v4340
    %v4342 = vand.u32 %v2543, 4294901760
    %v4343 = vsub.f32 %v2543, %v4342
    %v4344 = vand.u32 %v4343, 4294901760
    %v4345 = vsub.f32 %v4343, %v4344
    %v4346 = vand.u32 %v4345, 4294901760
    %4347 = vmatpush.msra.mxu0 %v4346
    %v4348 = vand.u32 %v4270, 4294901760
    %4349 = vmatmul.f32.gmra.mxu0 %v4348
    %v4350 = vpop.f32.mrf.mxu0
    %v4351 = vadd.f32 %v4302, %v4350
    %v4352 = vand.u32 %v4273, 4294901760
    %4353 = vmatmul.f32.gmra.mxu0 %v4352
    %v4354 = vpop.f32.mrf.mxu0
    %v4355 = vadd.f32 %v4310, %v4354
    %4356 = vdwg.mxu0
    %4357 = vmatpush.msra.mxu0 0.0
    %4358 = vmatpush.msra.mxu0 0.0
    %4359 = vmatpush.msra.mxu0 0.0
    %4360 = vmatpush.msra.mxu0 0.0
    %4361 = vmatpush.msra.mxu0 0.0
    %4362 = vmatpush.msra.mxu0 0.0
    %4363 = vmatpush.msra.mxu0 0.0
    %4364 = vmatpush.msra.mxu0 0.0
    %4365 = vmatpush.msra.mxu0 0.0
    %4366 = vmatpush.msra.mxu0 0.0
    %4367 = vmatpush.msra.mxu0 0.0
    %4368 = vmatpush.msra.mxu0 0.0
    %v4369 = vand.u32 %v2546, 4294901760
    %v4370 = vsub.f32 %v2546, %v4369
    %4371 = vmatpush.msra.mxu0 %v4370
    %v4372 = vand.u32 %v2545, 4294901760
    %v4373 = vsub.f32 %v2545, %v4372
    %4374 = vmatpush.msra.mxu0 %v4373
    %v4375 = vand.u32 %v2544, 4294901760
    %v4376 = vsub.f32 %v2544, %v4375
    %4377 = vmatpush.msra.mxu0 %v4376
    %v4378 = vand.u32 %v2543, 4294901760
    %v4379 = vsub.f32 %v2543, %v4378
    %4380 = vmatpush.msra.mxu0 %v4379
    %v4381 = vand.u32 %v4270, 4294901760
    %v4382 = vsub.f32 %v4270, %v4381
    %4383 = vmatmul.f32.gmra.mxu0 %v4382
    %v4384 = vpop.f32.mrf.mxu0
    %v4385 = vadd.f32 %v4351, %v4384
    %v4386 = vand.u32 %v4273, 4294901760
    %v4387 = vsub.f32 %v4273, %v4386
    %4388 = vmatmul.f32.gmra.mxu0 %v4387
    %v4389 = vpop.f32.mrf.mxu0
    %v4390 = vadd.f32 %v4355, %v4389
    %4391 = vdwg.mxu0
    %4392 = vmatpush.msra.mxu0 0.0
    %4393 = vmatpush.msra.mxu0 0.0
    %4394 = vmatpush.msra.mxu0 0.0
    %4395 = vmatpush.msra.mxu0 0.0
    %4396 = vmatpush.msra.mxu0 0.0
    %4397 = vmatpush.msra.mxu0 0.0
    %4398 = vmatpush.msra.mxu0 0.0
    %4399 = vmatpush.msra.mxu0 0.0
    %4400 = vmatpush.msra.mxu0 0.0
    %4401 = vmatpush.msra.mxu0 0.0
    %4402 = vmatpush.msra.mxu0 0.0
    %4403 = vmatpush.msra.mxu0 0.0
    %v4404 = vand.u32 %v2546, 4294901760
    %4405 = vmatpush.msra.mxu0 %v4404
    %v4406 = vand.u32 %v2545, 4294901760
    %4407 = vmatpush.msra.mxu0 %v4406
    %v4408 = vand.u32 %v2544, 4294901760
    %4409 = vmatpush.msra.mxu0 %v4408
    %v4410 = vand.u32 %v2543, 4294901760
    %4411 = vmatpush.msra.mxu0 %v4410
    %v4412 = vand.u32 %v4270, 4294901760
    %v4413 = vsub.f32 %v4270, %v4412
    %v4414 = vand.u32 %v4413, 4294901760
    %4415 = vmatmul.f32.gmra.mxu0 %v4414
    %v4416 = vpop.f32.mrf.mxu0
    %v4417 = vadd.f32 %v4385, %v4416
    %v4418 = vand.u32 %v4273, 4294901760
    %v4419 = vsub.f32 %v4273, %v4418
    %v4420 = vand.u32 %v4419, 4294901760
    %4421 = vmatmul.f32.gmra.mxu0 %v4420
    %v4422 = vpop.f32.mrf.mxu0
    %v4423 = vadd.f32 %v4390, %v4422
    %4424 = vdwg.mxu0
    %4425 = vmatpush.msra.mxu0 0.0
    %4426 = vmatpush.msra.mxu0 0.0
    %4427 = vmatpush.msra.mxu0 0.0
    %4428 = vmatpush.msra.mxu0 0.0
    %4429 = vmatpush.msra.mxu0 0.0
    %4430 = vmatpush.msra.mxu0 0.0
    %4431 = vmatpush.msra.mxu0 0.0
    %4432 = vmatpush.msra.mxu0 0.0
    %4433 = vmatpush.msra.mxu0 0.0
    %4434 = vmatpush.msra.mxu0 0.0
    %4435 = vmatpush.msra.mxu0 0.0
    %4436 = vmatpush.msra.mxu0 0.0
    %v4437 = vand.u32 %v2546, 4294901760
    %v4438 = vsub.f32 %v2546, %v4437
    %v4439 = vand.u32 %v4438, 4294901760
    %4440 = vmatpush.msra.mxu0 %v4439
    %v4441 = vand.u32 %v2545, 4294901760
    %v4442 = vsub.f32 %v2545, %v4441
    %v4443 = vand.u32 %v4442, 4294901760
    %4444 = vmatpush.msra.mxu0 %v4443
    %v4445 = vand.u32 %v2544, 4294901760
    %v4446 = vsub.f32 %v2544, %v4445
    %v4447 = vand.u32 %v4446, 4294901760
    %4448 = vmatpush.msra.mxu0 %v4447
    %v4449 = vand.u32 %v2543, 4294901760
    %v4450 = vsub.f32 %v2543, %v4449
    %v4451 = vand.u32 %v4450, 4294901760
    %4452 = vmatpush.msra.mxu0 %v4451
    %v4453 = vand.u32 %v4270, 4294901760
    %4454 = vmatmul.f32.gmra.mxu0 %v4453
    %v4455 = vpop.f32.mrf.mxu0
    %v4456 = vadd.f32 %v4417, %v4455
    %v4457 = vand.u32 %v4273, 4294901760
    %4458 = vmatmul.f32.gmra.mxu0 %v4457
    %v4459 = vpop.f32.mrf.mxu0
    %v4460 = vadd.f32 %v4423, %v4459
    %4461 = vdwg.mxu0
    %4462 = vmatpush.msra.mxu0 0.0
    %4463 = vmatpush.msra.mxu0 0.0
    %4464 = vmatpush.msra.mxu0 0.0
    %4465 = vmatpush.msra.mxu0 0.0
    %4466 = vmatpush.msra.mxu0 0.0
    %4467 = vmatpush.msra.mxu0 0.0
    %4468 = vmatpush.msra.mxu0 0.0
    %4469 = vmatpush.msra.mxu0 0.0
    %4470 = vmatpush.msra.mxu0 0.0
    %4471 = vmatpush.msra.mxu0 0.0
    %4472 = vmatpush.msra.mxu0 0.0
    %4473 = vmatpush.msra.mxu0 0.0
    %v4474 = vand.u32 %v2546, 4294901760
    %4475 = vmatpush.msra.mxu0 %v4474
    %v4476 = vand.u32 %v2545, 4294901760
    %4477 = vmatpush.msra.mxu0 %v4476
    %v4478 = vand.u32 %v2544, 4294901760
    %4479 = vmatpush.msra.mxu0 %v4478
    %v4480 = vand.u32 %v2543, 4294901760
    %4481 = vmatpush.msra.mxu0 %v4480
    %v4482 = vand.u32 %v4270, 4294901760
    %4483 = vmatmul.f32.gmra.mxu0 %v4482
    %v4484 = vpop.f32.mrf.mxu0
    %v4485 = vadd.f32 %v4456, %v4484
    %v4486 = vand.u32 %v4273, 4294901760
    %4487 = vmatmul.f32.gmra.mxu0 %v4486
    %v4488 = vpop.f32.mrf.mxu0
    %v4489 = vadd.f32 %v4460, %v4488
    %4490 = vdwg.mxu0
    %v4491 = vadd.f32 %v4485, %v2533
    %v4492 = vadd.f32 %v4489, %v2534
    %v4493 = vsel %vm1759, %v4491, 0.0
    %4494 = vadd.xlane.f32.xlu0 %v4493
    %v4495 = vpop.xlane.xlu0 %4494
    %v4496 = vsel %vm1759, %v4492, 0.0
    %4497 = vadd.xlane.f32.xlu0 %v4496
    %v4498 = vpop.xlane.xlu0 %4497
    %v4499 = vmul.f32 %v4495, %v1996
    %v4500 = vmul.f32 %v4498, %v1996
    %v4501 = vsub.f32 %v4491, %v4499
    %v4502 = vsub.f32 %v4492, %v4500
    %v4503 = vmul.f32 %v4501, %v4501
    %v4504 = vmul.f32 %v4502, %v4502
    %v4505 = vsel %vm1759, %v4503, 0.0
    %4506 = vadd.xlane.f32.xlu0 %v4505
    %v4507 = vpop.xlane.xlu0 %4506
    %v4508 = vsel %vm1759, %v4504, 0.0
    %4509 = vadd.xlane.f32.xlu0 %v4508
    %v4510 = vpop.xlane.xlu0 %4509
    %v4511 = vmul.f32 %v4507, %v1996
    %v4512 = vmul.f32 %v4510, %v1996
    %v4513 = vadd.f32 %v4511, 1e-05
    %v4514 = vadd.f32 %v4512, 1e-05
    %v4515 = vrsqrt.pop %v4513
    %v4516 = vmul.f32 %v4515, %v4513
    %v4517 = vmul.f32 %v4516, %v4515
    %v4518 = vmul.f32 0.5, %v4517
    %v4519 = vsub.f32 1.5, %v4518
    %v4520 = vmul.f32 %v4515, %v4519
    %vm4521 = vweird.f32 %v4513
    %vm4522 = vweird.f32 %v4515
    %vm4523 = vmor %vm4521, %vm4522
    %v4524 = vsel %vm4523, %v4515, %v4520
    %v4525 = vrsqrt.pop %v4514
    %v4526 = vmul.f32 %v4525, %v4514
    %v4527 = vmul.f32 %v4526, %v4525
    %v4528 = vmul.f32 0.5, %v4527
    %v4529 = vsub.f32 1.5, %v4528
    %v4530 = vmul.f32 %v4525, %v4529
    %vm4531 = vweird.f32 %v4514
    %vm4532 = vweird.f32 %v4525
    %vm4533 = vmor %vm4531, %vm4532
    %v4534 = vsel %vm4533, %v4525, %v4530
    %v4535 = vmul.f32 %v4501, %v4524
    %v4536 = vmul.f32 %v4502, %v4534
    %v4537 = vperm.slane %v2548, 0
    %v4538 = vmul.f32 %v4535, %v4537
    %v4539 = vmul.f32 %v4536, %v4537
    %v4540 = vperm.slane %v2549, 0
    %v4541 = vadd.f32 %v4538, %v4540
    %v4542 = vadd.f32 %v4539, %v4540
    %v4543 = vperm.slane %v2550, 0
    %v4545 = vsel %vm1759, %v4541, 0
    %v4548 = vsel %vm1759, %v4542, 0
    %4550 = vmatpush.msra.mxu0 0.0
    %4551 = vmatpush.msra.mxu0 0.0
    %4552 = vmatpush.msra.mxu0 0.0
    %4553 = vmatpush.msra.mxu0 0.0
    %4554 = vmatpush.msra.mxu0 0.0
    %4555 = vmatpush.msra.mxu0 0.0
    %4556 = vmatpush.msra.mxu0 0.0
    %4557 = vmatpush.msra.mxu0 0.0
    %4558 = vmatpush.msra.mxu0 0.0
    %4559 = vmatpush.msra.mxu0 0.0
    %4560 = vmatpush.msra.mxu0 0.0
    %4561 = vmatpush.msra.mxu0 0.0
    %v4562 = vand.u32 %v2538, 4294901760
    %4563 = vmatpush.msra.mxu0 %v4562
    %v4564 = vand.u32 %v2537, 4294901760
    %4565 = vmatpush.msra.mxu0 %v4564
    %v4566 = vand.u32 %v2536, 4294901760
    %4567 = vmatpush.msra.mxu0 %v4566
    %v4568 = vand.u32 %v2535, 4294901760
    %4569 = vmatpush.msra.mxu0 %v4568
    %v4570 = vand.u32 %v4545, 4294901760
    %v4571 = vsub.f32 %v4545, %v4570
    %v4572 = vand.u32 %v4571, 4294901760
    %v4573 = vsub.f32 %v4571, %v4572
    %v4574 = vand.u32 %v4573, 4294901760
    %4575 = vmatmul.f32.gmra.mxu0 %v4574
    %v4576 = vpop.f32.mrf.mxu0
    %v4577 = vadd.f32 %v4543, %v4576
    %v4578 = vand.u32 %v4548, 4294901760
    %v4579 = vsub.f32 %v4548, %v4578
    %v4580 = vand.u32 %v4579, 4294901760
    %v4581 = vsub.f32 %v4579, %v4580
    %v4582 = vand.u32 %v4581, 4294901760
    %4583 = vmatmul.f32.gmra.mxu0 %v4582
    %v4584 = vpop.f32.mrf.mxu0
    %v4585 = vadd.f32 %v4543, %v4584
    %4586 = vdwg.mxu0
    %4587 = vmatpush.msra.mxu0 0.0
    %4588 = vmatpush.msra.mxu0 0.0
    %4589 = vmatpush.msra.mxu0 0.0
    %4590 = vmatpush.msra.mxu0 0.0
    %4591 = vmatpush.msra.mxu0 0.0
    %4592 = vmatpush.msra.mxu0 0.0
    %4593 = vmatpush.msra.mxu0 0.0
    %4594 = vmatpush.msra.mxu0 0.0
    %4595 = vmatpush.msra.mxu0 0.0
    %4596 = vmatpush.msra.mxu0 0.0
    %4597 = vmatpush.msra.mxu0 0.0
    %4598 = vmatpush.msra.mxu0 0.0
    %v4599 = vand.u32 %v2538, 4294901760
    %v4600 = vsub.f32 %v2538, %v4599
    %v4601 = vand.u32 %v4600, 4294901760
    %v4602 = vsub.f32 %v4600, %v4601
    %v4603 = vand.u32 %v4602, 4294901760
    %4604 = vmatpush.msra.mxu0 %v4603
    %v4605 = vand.u32 %v2537, 4294901760
    %v4606 = vsub.f32 %v2537, %v4605
    %v4607 = vand.u32 %v4606, 4294901760
    %v4608 = vsub.f32 %v4606, %v4607
    %v4609 = vand.u32 %v4608, 4294901760
    %4610 = vmatpush.msra.mxu0 %v4609
    %v4611 = vand.u32 %v2536, 4294901760
    %v4612 = vsub.f32 %v2536, %v4611
    %v4613 = vand.u32 %v4612, 4294901760
    %v4614 = vsub.f32 %v4612, %v4613
    %v4615 = vand.u32 %v4614, 4294901760
    %4616 = vmatpush.msra.mxu0 %v4615
    %v4617 = vand.u32 %v2535, 4294901760
    %v4618 = vsub.f32 %v2535, %v4617
    %v4619 = vand.u32 %v4618, 4294901760
    %v4620 = vsub.f32 %v4618, %v4619
    %v4621 = vand.u32 %v4620, 4294901760
    %4622 = vmatpush.msra.mxu0 %v4621
    %v4623 = vand.u32 %v4545, 4294901760
    %4624 = vmatmul.f32.gmra.mxu0 %v4623
    %v4625 = vpop.f32.mrf.mxu0
    %v4626 = vadd.f32 %v4577, %v4625
    %v4627 = vand.u32 %v4548, 4294901760
    %4628 = vmatmul.f32.gmra.mxu0 %v4627
    %v4629 = vpop.f32.mrf.mxu0
    %v4630 = vadd.f32 %v4585, %v4629
    %4631 = vdwg.mxu0
    %4632 = vmatpush.msra.mxu0 0.0
    %4633 = vmatpush.msra.mxu0 0.0
    %4634 = vmatpush.msra.mxu0 0.0
    %4635 = vmatpush.msra.mxu0 0.0
    %4636 = vmatpush.msra.mxu0 0.0
    %4637 = vmatpush.msra.mxu0 0.0
    %4638 = vmatpush.msra.mxu0 0.0
    %4639 = vmatpush.msra.mxu0 0.0
    %4640 = vmatpush.msra.mxu0 0.0
    %4641 = vmatpush.msra.mxu0 0.0
    %4642 = vmatpush.msra.mxu0 0.0
    %4643 = vmatpush.msra.mxu0 0.0
    %v4644 = vand.u32 %v2538, 4294901760
    %v4645 = vsub.f32 %v2538, %v4644
    %4646 = vmatpush.msra.mxu0 %v4645
    %v4647 = vand.u32 %v2537, 4294901760
    %v4648 = vsub.f32 %v2537, %v4647
    %4649 = vmatpush.msra.mxu0 %v4648
    %v4650 = vand.u32 %v2536, 4294901760
    %v4651 = vsub.f32 %v2536, %v4650
    %4652 = vmatpush.msra.mxu0 %v4651
    %v4653 = vand.u32 %v2535, 4294901760
    %v4654 = vsub.f32 %v2535, %v4653
    %4655 = vmatpush.msra.mxu0 %v4654
    %v4656 = vand.u32 %v4545, 4294901760
    %v4657 = vsub.f32 %v4545, %v4656
    %4658 = vmatmul.f32.gmra.mxu0 %v4657
    %v4659 = vpop.f32.mrf.mxu0
    %v4660 = vadd.f32 %v4626, %v4659
    %v4661 = vand.u32 %v4548, 4294901760
    %v4662 = vsub.f32 %v4548, %v4661
    %4663 = vmatmul.f32.gmra.mxu0 %v4662
    %v4664 = vpop.f32.mrf.mxu0
    %v4665 = vadd.f32 %v4630, %v4664
    %4666 = vdwg.mxu0
    %4667 = vmatpush.msra.mxu0 0.0
    %4668 = vmatpush.msra.mxu0 0.0
    %4669 = vmatpush.msra.mxu0 0.0
    %4670 = vmatpush.msra.mxu0 0.0
    %4671 = vmatpush.msra.mxu0 0.0
    %4672 = vmatpush.msra.mxu0 0.0
    %4673 = vmatpush.msra.mxu0 0.0
    %4674 = vmatpush.msra.mxu0 0.0
    %4675 = vmatpush.msra.mxu0 0.0
    %4676 = vmatpush.msra.mxu0 0.0
    %4677 = vmatpush.msra.mxu0 0.0
    %4678 = vmatpush.msra.mxu0 0.0
    %v4679 = vand.u32 %v2538, 4294901760
    %4680 = vmatpush.msra.mxu0 %v4679
    %v4681 = vand.u32 %v2537, 4294901760
    %4682 = vmatpush.msra.mxu0 %v4681
    %v4683 = vand.u32 %v2536, 4294901760
    %4684 = vmatpush.msra.mxu0 %v4683
    %v4685 = vand.u32 %v2535, 4294901760
    %4686 = vmatpush.msra.mxu0 %v4685
    %v4687 = vand.u32 %v4545, 4294901760
    %v4688 = vsub.f32 %v4545, %v4687
    %v4689 = vand.u32 %v4688, 4294901760
    %4690 = vmatmul.f32.gmra.mxu0 %v4689
    %v4691 = vpop.f32.mrf.mxu0
    %v4692 = vadd.f32 %v4660, %v4691
    %v4693 = vand.u32 %v4548, 4294901760
    %v4694 = vsub.f32 %v4548, %v4693
    %v4695 = vand.u32 %v4694, 4294901760
    %4696 = vmatmul.f32.gmra.mxu0 %v4695
    %v4697 = vpop.f32.mrf.mxu0
    %v4698 = vadd.f32 %v4665, %v4697
    %4699 = vdwg.mxu0
    %4700 = vmatpush.msra.mxu0 0.0
    %4701 = vmatpush.msra.mxu0 0.0
    %4702 = vmatpush.msra.mxu0 0.0
    %4703 = vmatpush.msra.mxu0 0.0
    %4704 = vmatpush.msra.mxu0 0.0
    %4705 = vmatpush.msra.mxu0 0.0
    %4706 = vmatpush.msra.mxu0 0.0
    %4707 = vmatpush.msra.mxu0 0.0
    %4708 = vmatpush.msra.mxu0 0.0
    %4709 = vmatpush.msra.mxu0 0.0
    %4710 = vmatpush.msra.mxu0 0.0
    %4711 = vmatpush.msra.mxu0 0.0
    %v4712 = vand.u32 %v2538, 4294901760
    %v4713 = vsub.f32 %v2538, %v4712
    %v4714 = vand.u32 %v4713, 4294901760
    %4715 = vmatpush.msra.mxu0 %v4714
    %v4716 = vand.u32 %v2537, 4294901760
    %v4717 = vsub.f32 %v2537, %v4716
    %v4718 = vand.u32 %v4717, 4294901760
    %4719 = vmatpush.msra.mxu0 %v4718
    %v4720 = vand.u32 %v2536, 4294901760
    %v4721 = vsub.f32 %v2536, %v4720
    %v4722 = vand.u32 %v4721, 4294901760
    %4723 = vmatpush.msra.mxu0 %v4722
    %v4724 = vand.u32 %v2535, 4294901760
    %v4725 = vsub.f32 %v2535, %v4724
    %v4726 = vand.u32 %v4725, 4294901760
    %4727 = vmatpush.msra.mxu0 %v4726
    %v4728 = vand.u32 %v4545, 4294901760
    %4729 = vmatmul.f32.gmra.mxu0 %v4728
    %v4730 = vpop.f32.mrf.mxu0
    %v4731 = vadd.f32 %v4692, %v4730
    %v4732 = vand.u32 %v4548, 4294901760
    %4733 = vmatmul.f32.gmra.mxu0 %v4732
    %v4734 = vpop.f32.mrf.mxu0
    %v4735 = vadd.f32 %v4698, %v4734
    %4736 = vdwg.mxu0
    %4737 = vmatpush.msra.mxu0 0.0
    %4738 = vmatpush.msra.mxu0 0.0
    %4739 = vmatpush.msra.mxu0 0.0
    %4740 = vmatpush.msra.mxu0 0.0
    %4741 = vmatpush.msra.mxu0 0.0
    %4742 = vmatpush.msra.mxu0 0.0
    %4743 = vmatpush.msra.mxu0 0.0
    %4744 = vmatpush.msra.mxu0 0.0
    %4745 = vmatpush.msra.mxu0 0.0
    %4746 = vmatpush.msra.mxu0 0.0
    %4747 = vmatpush.msra.mxu0 0.0
    %4748 = vmatpush.msra.mxu0 0.0
    %v4749 = vand.u32 %v2538, 4294901760
    %4750 = vmatpush.msra.mxu0 %v4749
    %v4751 = vand.u32 %v2537, 4294901760
    %4752 = vmatpush.msra.mxu0 %v4751
    %v4753 = vand.u32 %v2536, 4294901760
    %4754 = vmatpush.msra.mxu0 %v4753
    %v4755 = vand.u32 %v2535, 4294901760
    %4756 = vmatpush.msra.mxu0 %v4755
    %v4757 = vand.u32 %v4545, 4294901760
    %4758 = vmatmul.f32.gmra.mxu0 %v4757
    %v4759 = vpop.f32.mrf.mxu0
    %v4760 = vadd.f32 %v4731, %v4759
    %v4761 = vand.u32 %v4548, 4294901760
    %4762 = vmatmul.f32.gmra.mxu0 %v4761
    %v4763 = vpop.f32.mrf.mxu0
    %v4764 = vadd.f32 %v4735, %v4763
    %4765 = vdwg.mxu0
    %v4766 = vmax.f32 %v4760, 0.0
    %v4767 = vmax.f32 %v4764, 0.0
    %v4768 = vperm.slane %v2551, 0
    %4769 = vmatpush.xpose.msra.mxu0 0.0
    %4770 = vmatpush.xpose.msra.mxu0 0.0
    %4771 = vmatpush.xpose.msra.mxu0 0.0
    %4772 = vmatpush.xpose.msra.mxu0 0.0
    %4773 = vmatpush.xpose.msra.mxu0 0.0
    %4774 = vmatpush.xpose.msra.mxu0 0.0
    %4775 = vmatpush.xpose.msra.mxu0 0.0
    %4776 = vmatpush.xpose.msra.mxu0 0.0
    %4777 = vmatpush.xpose.msra.mxu0 0.0
    %4778 = vmatpush.xpose.msra.mxu0 0.0
    %4779 = vmatpush.xpose.msra.mxu0 0.0
    %4780 = vmatpush.xpose.msra.mxu0 0.0
    %v4781 = vand.u32 %v2542, 4294901760
    %4782 = vmatpush.xpose.msra.mxu0 %v4781
    %v4783 = vand.u32 %v2541, 4294901760
    %4784 = vmatpush.xpose.msra.mxu0 %v4783
    %v4785 = vand.u32 %v2540, 4294901760
    %4786 = vmatpush.xpose.msra.mxu0 %v4785
    %v4787 = vand.u32 %v2539, 4294901760
    %4788 = vmatpush.xpose.msra.mxu0 %v4787
    %v4789 = vand.u32 %v4766, 4294901760
    %v4790 = vsub.f32 %v4766, %v4789
    %v4791 = vand.u32 %v4790, 4294901760
    %v4792 = vsub.f32 %v4790, %v4791
    %v4793 = vand.u32 %v4792, 4294901760
    %4794 = vmatmul.f32.gmra.mxu0 %v4793
    %v4795 = vpop.f32.mrf.mxu0
    %v4796 = vadd.f32 %v4768, %v4795
    %v4797 = vand.u32 %v4767, 4294901760
    %v4798 = vsub.f32 %v4767, %v4797
    %v4799 = vand.u32 %v4798, 4294901760
    %v4800 = vsub.f32 %v4798, %v4799
    %v4801 = vand.u32 %v4800, 4294901760
    %4802 = vmatmul.f32.gmra.mxu0 %v4801
    %v4803 = vpop.f32.mrf.mxu0
    %v4804 = vadd.f32 %v4768, %v4803
    %4805 = vdwg.mxu0
    %4806 = vmatpush.xpose.msra.mxu0 0.0
    %4807 = vmatpush.xpose.msra.mxu0 0.0
    %4808 = vmatpush.xpose.msra.mxu0 0.0
    %4809 = vmatpush.xpose.msra.mxu0 0.0
    %4810 = vmatpush.xpose.msra.mxu0 0.0
    %4811 = vmatpush.xpose.msra.mxu0 0.0
    %4812 = vmatpush.xpose.msra.mxu0 0.0
    %4813 = vmatpush.xpose.msra.mxu0 0.0
    %4814 = vmatpush.xpose.msra.mxu0 0.0
    %4815 = vmatpush.xpose.msra.mxu0 0.0
    %4816 = vmatpush.xpose.msra.mxu0 0.0
    %4817 = vmatpush.xpose.msra.mxu0 0.0
    %v4818 = vand.u32 %v2542, 4294901760
    %v4819 = vsub.f32 %v2542, %v4818
    %v4820 = vand.u32 %v4819, 4294901760
    %v4821 = vsub.f32 %v4819, %v4820
    %v4822 = vand.u32 %v4821, 4294901760
    %4823 = vmatpush.xpose.msra.mxu0 %v4822
    %v4824 = vand.u32 %v2541, 4294901760
    %v4825 = vsub.f32 %v2541, %v4824
    %v4826 = vand.u32 %v4825, 4294901760
    %v4827 = vsub.f32 %v4825, %v4826
    %v4828 = vand.u32 %v4827, 4294901760
    %4829 = vmatpush.xpose.msra.mxu0 %v4828
    %v4830 = vand.u32 %v2540, 4294901760
    %v4831 = vsub.f32 %v2540, %v4830
    %v4832 = vand.u32 %v4831, 4294901760
    %v4833 = vsub.f32 %v4831, %v4832
    %v4834 = vand.u32 %v4833, 4294901760
    %4835 = vmatpush.xpose.msra.mxu0 %v4834
    %v4836 = vand.u32 %v2539, 4294901760
    %v4837 = vsub.f32 %v2539, %v4836
    %v4838 = vand.u32 %v4837, 4294901760
    %v4839 = vsub.f32 %v4837, %v4838
    %v4840 = vand.u32 %v4839, 4294901760
    %4841 = vmatpush.xpose.msra.mxu0 %v4840
    %v4842 = vand.u32 %v4766, 4294901760
    %4843 = vmatmul.f32.gmra.mxu0 %v4842
    %v4844 = vpop.f32.mrf.mxu0
    %v4845 = vadd.f32 %v4796, %v4844
    %v4846 = vand.u32 %v4767, 4294901760
    %4847 = vmatmul.f32.gmra.mxu0 %v4846
    %v4848 = vpop.f32.mrf.mxu0
    %v4849 = vadd.f32 %v4804, %v4848
    %4850 = vdwg.mxu0
    %4851 = vmatpush.xpose.msra.mxu0 0.0
    %4852 = vmatpush.xpose.msra.mxu0 0.0
    %4853 = vmatpush.xpose.msra.mxu0 0.0
    %4854 = vmatpush.xpose.msra.mxu0 0.0
    %4855 = vmatpush.xpose.msra.mxu0 0.0
    %4856 = vmatpush.xpose.msra.mxu0 0.0
    %4857 = vmatpush.xpose.msra.mxu0 0.0
    %4858 = vmatpush.xpose.msra.mxu0 0.0
    %4859 = vmatpush.xpose.msra.mxu0 0.0
    %4860 = vmatpush.xpose.msra.mxu0 0.0
    %4861 = vmatpush.xpose.msra.mxu0 0.0
    %4862 = vmatpush.xpose.msra.mxu0 0.0
    %v4863 = vand.u32 %v2542, 4294901760
    %v4864 = vsub.f32 %v2542, %v4863
    %4865 = vmatpush.xpose.msra.mxu0 %v4864
    %v4866 = vand.u32 %v2541, 4294901760
    %v4867 = vsub.f32 %v2541, %v4866
    %4868 = vmatpush.xpose.msra.mxu0 %v4867
    %v4869 = vand.u32 %v2540, 4294901760
    %v4870 = vsub.f32 %v2540, %v4869
    %4871 = vmatpush.xpose.msra.mxu0 %v4870
    %v4872 = vand.u32 %v2539, 4294901760
    %v4873 = vsub.f32 %v2539, %v4872
    %4874 = vmatpush.xpose.msra.mxu0 %v4873
    %v4875 = vand.u32 %v4766, 4294901760
    %v4876 = vsub.f32 %v4766, %v4875
    %4877 = vmatmul.f32.gmra.mxu0 %v4876
    %v4878 = vpop.f32.mrf.mxu0
    %v4879 = vadd.f32 %v4845, %v4878
    %v4880 = vand.u32 %v4767, 4294901760
    %v4881 = vsub.f32 %v4767, %v4880
    %4882 = vmatmul.f32.gmra.mxu0 %v4881
    %v4883 = vpop.f32.mrf.mxu0
    %v4884 = vadd.f32 %v4849, %v4883
    %4885 = vdwg.mxu0
    %4886 = vmatpush.xpose.msra.mxu0 0.0
    %4887 = vmatpush.xpose.msra.mxu0 0.0
    %4888 = vmatpush.xpose.msra.mxu0 0.0
    %4889 = vmatpush.xpose.msra.mxu0 0.0
    %4890 = vmatpush.xpose.msra.mxu0 0.0
    %4891 = vmatpush.xpose.msra.mxu0 0.0
    %4892 = vmatpush.xpose.msra.mxu0 0.0
    %4893 = vmatpush.xpose.msra.mxu0 0.0
    %4894 = vmatpush.xpose.msra.mxu0 0.0
    %4895 = vmatpush.xpose.msra.mxu0 0.0
    %4896 = vmatpush.xpose.msra.mxu0 0.0
    %4897 = vmatpush.xpose.msra.mxu0 0.0
    %v4898 = vand.u32 %v2542, 4294901760
    %4899 = vmatpush.xpose.msra.mxu0 %v4898
    %v4900 = vand.u32 %v2541, 4294901760
    %4901 = vmatpush.xpose.msra.mxu0 %v4900
    %v4902 = vand.u32 %v2540, 4294901760
    %4903 = vmatpush.xpose.msra.mxu0 %v4902
    %v4904 = vand.u32 %v2539, 4294901760
    %4905 = vmatpush.xpose.msra.mxu0 %v4904
    %v4906 = vand.u32 %v4766, 4294901760
    %v4907 = vsub.f32 %v4766, %v4906
    %v4908 = vand.u32 %v4907, 4294901760
    %4909 = vmatmul.f32.gmra.mxu0 %v4908
    %v4910 = vpop.f32.mrf.mxu0
    %v4911 = vadd.f32 %v4879, %v4910
    %v4912 = vand.u32 %v4767, 4294901760
    %v4913 = vsub.f32 %v4767, %v4912
    %v4914 = vand.u32 %v4913, 4294901760
    %4915 = vmatmul.f32.gmra.mxu0 %v4914
    %v4916 = vpop.f32.mrf.mxu0
    %v4917 = vadd.f32 %v4884, %v4916
    %4918 = vdwg.mxu0
    %4919 = vmatpush.xpose.msra.mxu0 0.0
    %4920 = vmatpush.xpose.msra.mxu0 0.0
    %4921 = vmatpush.xpose.msra.mxu0 0.0
    %4922 = vmatpush.xpose.msra.mxu0 0.0
    %4923 = vmatpush.xpose.msra.mxu0 0.0
    %4924 = vmatpush.xpose.msra.mxu0 0.0
    %4925 = vmatpush.xpose.msra.mxu0 0.0
    %4926 = vmatpush.xpose.msra.mxu0 0.0
    %4927 = vmatpush.xpose.msra.mxu0 0.0
    %4928 = vmatpush.xpose.msra.mxu0 0.0
    %4929 = vmatpush.xpose.msra.mxu0 0.0
    %4930 = vmatpush.xpose.msra.mxu0 0.0
    %v4931 = vand.u32 %v2542, 4294901760
    %v4932 = vsub.f32 %v2542, %v4931
    %v4933 = vand.u32 %v4932, 4294901760
    %4934 = vmatpush.xpose.msra.mxu0 %v4933
    %v4935 = vand.u32 %v2541, 4294901760
    %v4936 = vsub.f32 %v2541, %v4935
    %v4937 = vand.u32 %v4936, 4294901760
    %4938 = vmatpush.xpose.msra.mxu0 %v4937
    %v4939 = vand.u32 %v2540, 4294901760
    %v4940 = vsub.f32 %v2540, %v4939
    %v4941 = vand.u32 %v4940, 4294901760
    %4942 = vmatpush.xpose.msra.mxu0 %v4941
    %v4943 = vand.u32 %v2539, 4294901760
    %v4944 = vsub.f32 %v2539, %v4943
    %v4945 = vand.u32 %v4944, 4294901760
    %4946 = vmatpush.xpose.msra.mxu0 %v4945
    %v4947 = vand.u32 %v4766, 4294901760
    %4948 = vmatmul.f32.gmra.mxu0 %v4947
    %v4949 = vpop.f32.mrf.mxu0
    %v4950 = vadd.f32 %v4911, %v4949
    %v4951 = vand.u32 %v4767, 4294901760
    %4952 = vmatmul.f32.gmra.mxu0 %v4951
    %v4953 = vpop.f32.mrf.mxu0
    %v4954 = vadd.f32 %v4917, %v4953
    %4955 = vdwg.mxu0
    %4956 = vmatpush.xpose.msra.mxu0 0.0
    %4957 = vmatpush.xpose.msra.mxu0 0.0
    %4958 = vmatpush.xpose.msra.mxu0 0.0
    %4959 = vmatpush.xpose.msra.mxu0 0.0
    %4960 = vmatpush.xpose.msra.mxu0 0.0
    %4961 = vmatpush.xpose.msra.mxu0 0.0
    %4962 = vmatpush.xpose.msra.mxu0 0.0
    %4963 = vmatpush.xpose.msra.mxu0 0.0
    %4964 = vmatpush.xpose.msra.mxu0 0.0
    %4965 = vmatpush.xpose.msra.mxu0 0.0
    %4966 = vmatpush.xpose.msra.mxu0 0.0
    %4967 = vmatpush.xpose.msra.mxu0 0.0
    %v4968 = vand.u32 %v2542, 4294901760
    %4969 = vmatpush.xpose.msra.mxu0 %v4968
    %v4970 = vand.u32 %v2541, 4294901760
    %4971 = vmatpush.xpose.msra.mxu0 %v4970
    %v4972 = vand.u32 %v2540, 4294901760
    %4973 = vmatpush.xpose.msra.mxu0 %v4972
    %v4974 = vand.u32 %v2539, 4294901760
    %4975 = vmatpush.xpose.msra.mxu0 %v4974
    %v4976 = vand.u32 %v4766, 4294901760
    %4977 = vmatmul.f32.gmra.mxu0 %v4976
    %v4978 = vpop.f32.mrf.mxu0
    %v4979 = vadd.f32 %v4950, %v4978
    %v4980 = vand.u32 %v4767, 4294901760
    %4981 = vmatmul.f32.gmra.mxu0 %v4980
    %v4982 = vpop.f32.mrf.mxu0
    %v4983 = vadd.f32 %v4954, %v4982
    %4984 = vdwg.mxu0
    %v4985 = vadd.f32 %v4979, %v4541
    %v4986 = vadd.f32 %v4983, %v4542
    %v4987 = vsel %vm1759, %v4985, 0.0
    %4988 = vadd.xlane.f32.xlu0 %v4987
    %v4989 = vpop.xlane.xlu0 %4988
    %v4990 = vsel %vm1759, %v4986, 0.0
    %4991 = vadd.xlane.f32.xlu0 %v4990
    %v4992 = vpop.xlane.xlu0 %4991
    %v4993 = vmul.f32 %v4989, %v1996
    %v4994 = vmul.f32 %v4992, %v1996
    %v4995 = vsub.f32 %v4985, %v4993
    %v4996 = vsub.f32 %v4986, %v4994
    %v4997 = vmul.f32 %v4995, %v4995
    %v4998 = vmul.f32 %v4996, %v4996
    %v4999 = vsel %vm1759, %v4997, 0.0
    %5000 = vadd.xlane.f32.xlu0 %v4999
    %v5001 = vpop.xlane.xlu0 %5000
    %v5002 = vsel %vm1759, %v4998, 0.0
    %5003 = vadd.xlane.f32.xlu0 %v5002
    %v5004 = vpop.xlane.xlu0 %5003
    %v5005 = vmul.f32 %v5001, %v1996
    %v5006 = vmul.f32 %v5004, %v1996
    %v5007 = vadd.f32 %v5005, 1e-05
    %v5008 = vadd.f32 %v5006, 1e-05
    %v5009 = vrsqrt.pop %v5007
    %v5010 = vmul.f32 %v5009, %v5007
    %v5011 = vmul.f32 %v5010, %v5009
    %v5012 = vmul.f32 0.5, %v5011
    %v5013 = vsub.f32 1.5, %v5012
    %v5014 = vmul.f32 %v5009, %v5013
    %vm5015 = vweird.f32 %v5007
    %vm5016 = vweird.f32 %v5009
    %vm5017 = vmor %vm5015, %vm5016
    %v5018 = vsel %vm5017, %v5009, %v5014
    %v5019 = vrsqrt.pop %v5008
    %v5020 = vmul.f32 %v5019, %v5008
    %v5021 = vmul.f32 %v5020, %v5019
    %v5022 = vmul.f32 0.5, %v5021
    %v5023 = vsub.f32 1.5, %v5022
    %v5024 = vmul.f32 %v5019, %v5023
    %vm5025 = vweird.f32 %v5008
    %vm5026 = vweird.f32 %v5019
    %vm5027 = vmor %vm5025, %vm5026
    %v5028 = vsel %vm5027, %v5019, %v5024
    %v5029 = vmul.f32 %v4995, %v5018
    %v5030 = vmul.f32 %v4996, %v5028
    %v5031 = vperm.slane %v2552, 0
    %v5032 = vmul.f32 %v5029, %v5031
    %v5033 = vmul.f32 %v5030, %v5031
    %v5034 = vperm.slane %v2553, 0
    %v5035 = vadd.f32 %v5032, %v5034
    %v5036 = vadd.f32 %v5033, %v5034
    %5037 = vst.msk [vmem:[#allocation2] sm:$0xff] %vm1759, %v5035
    %5038 = vst.msk [vmem:[#allocation2 + $0x8] sm:$0xff] %vm1759, %v5036
    // Predicated region
    $region18: #{transformer_forward.1} parent=1 // pred_check
      _
    $region19: #{transformer_forward.1} parent=1 // pred_check_branch
      %5040 = sbr.rel (0) target = $region21
    $region20: #{transformer_forward.1} parent=1 // pred_region
      %5042 = vsyncadd [#allocation3], 0
      %s5043 = sshll.u32 [#allocation2], 4
      %s5044 = int_to_ptr.vmem [resolvable:$true] %s5043
      %s5045 = sshll.u32 %s4, 4
      %s5046 = int_to_ptr.hbm [resolvable:$true] %s5045
      %5051 = dma.vmem_to_hbm [thread:$0]  %s5044, 256, %s5046, [#allocation3], 128, 128, 8
    $region21: #{transformer_forward.1} parent=1 // pred_fallthru
      _
    // Predicated region
    $region22: #{transformer_forward.1} parent=1 // pred_check
      _
    $region23: #{transformer_forward.1} parent=1 // pred_check_branch
      %5053 = sbr.rel (0) target = $region25
    $region24: #{transformer_forward.1} parent=1 // pred_region
      %5055 = dma.done [#allocation3], 256
    $region25: #{transformer_forward.1} parent=1 // pred_fallthru
      _
    %5056 = vsyncpa [#allocation3], 1

</llo_original>
